<compile_context>
chip_gen: v7x
topology: tpu7x:2x2x1
jax: 0.10.0
libtpu: 0.0.40
codegen_flags: <defaults>
</compile_context>

<pallas_src>
import functools

import jax
import jax.numpy as jnp
from jax.experimental import pallas as pl
from jax.experimental.pallas import tpu as pltpu


def _round_up(v, m):
    return ((v + m - 1) // m) * m


def _classifier_kernel(x_ref, wk_ref, bk_ref, wc_ref, bc_ref,
                       aspp_ref, logits_ref, *, n_halves, half):
    """One (batch, pixel-band) tile per grid step.

    x_ref:      (M, Kpad)    bf16  im2col'd input band, K = n_branch*9*Cin (0-padded)
    wk_ref:     (Kpad, 256)  bf16  packed ASPP weights (branch sum folded into K)
    bk_ref:     (1, 256)     f32   summed ASPP biases
    wc_ref:     (256, Cpad)  bf16  concatenated + lane-padded 1x1 classifier weights
    bc_ref:     (1, Cpad)    f32   concatenated + lane-padded 1x1 biases
    aspp_ref:   (M, 256)     f32   shared ASPP output (pre-logits)
    logits_ref: (M, Cpad)    f32   lane-padded class logits
    """
    x = x_ref[...]                       # whole band, used by every half
    # Split the 256 ASPP output channels into lane-aligned halves so the live f32
    # accumulator never exceeds ~32 vregs at M=256; the logits partial sum lives in
    # VMEM (logits_ref) between halves, so peak register pressure stays low.
    for h in range(n_halves):            # static unroll (1 or 2)
        lo = h * half
        a = jnp.dot(x, wk_ref[:, lo:lo + half],
                    preferred_element_type=jnp.float32)          # big-K MXU matmul
        a = a + bk_ref[:, lo:lo + half]
        aspp_ref[:, lo:lo + half] = a                            # lane-aligned store
        contrib = jnp.dot(a.astype(wc_ref.dtype), wc_ref[lo:lo + half, :],
                          preferred_element_type=jnp.float32)    # fused 1x1 classifiers
        if h == 0:
            logits_ref[...] = contrib + bc_ref[...]
        else:
            logits_ref[...] = logits_ref[...] + contrib


def classifier_module_forward(x_nchw, params, dilation_series, padding_series,
                              classes, *, m_tile=256):
    """Returns (out_logits, pre_logits) in NCHW, matching the PyTorch module.

    m_tile: pixel-band size (matmul M). 256 fills the v6e/v7x MXU M tile; on v5e
    (128-deep MXU) 128 is already optimal and halves the per-band store pressure.
    """
    N, Cin, H, W = x_nchw.shape
    Caspp = 256
    Ctot = sum(classes)
    # Lane-dense classifier output (biggest single store lever); wrapper slices
    # the real channels back out.
    # TODO(synk): for tiny Ctot, A/B this padded f32 store against bf16 / masked
    # Ctot-wide stores at production H,W.
    Cpad = _round_up(max(Ctot, 128), 128)
    n_aspp = len(dilation_series)
    # The im2col offsets (and H,W preservation) assume padding == dilation, which is
    # how the module is used in deeplab_multi.py.
    assert list(padding_series) == list(dilation_series), \
        "kernel assumes padding_series == dilation_series"
    pad = max(dilation_series)

    # ---- glue (plain JAX): layout, halo pad, tap im2col, parameter packing -------
    # Cast to bf16 BEFORE padding / replication so the im2col tensor is half the
    # HBM bytes (review item).
    x_nhwc = jnp.transpose(x_nchw, (0, 2, 3, 1)).astype(jnp.bfloat16)
    xp = jnp.pad(x_nhwc, ((0, 0), (pad, pad), (pad, pad), (0, 0)))

    # Full tap im2col: channel axis becomes (branch j, kh, kw, Cin).  The entire
    # ASPP sum collapses to ONE K=27*Cin matmul per pixel band.
    # TODO(synk): production DeepLab shapes (Cin~2048, 65x65, dilation<=24) cannot
    # afford the 9*n_branch replication; switch to memory_space=pl.ANY halo
    # row-band streaming with a Cin ("arbitrary") grid axis, pl.Buffered(1) on the
    # resident weight blocks, and an explicit vmem_limit_bytes.
    taps = []
    for d in dilation_series:
        for kh in range(3):
            r0 = pad - d + kh * d
            for kw in range(3):
                c0 = pad - d + kw * d
                taps.append(xp[:, r0:r0 + H, c0:c0 + W, :])
    xim = jnp.concatenate(taps, axis=-1)                      # (N, H, W, 27*Cin) bf16
    K = n_aspp * 9 * Cin
    Kpad = _round_up(K, 128)

    P = H * W
    M = min(m_tile, _round_up(P, 8))                          # 8-aligned pixel band
    M = _round_up(M, 8)
    Ppad = _round_up(P, M)
    R = Ppad // M

    xim = xim.reshape(N, P, K)
    xim = jnp.pad(xim, ((0, 0), (0, Ppad - P), (0, Kpad - K)))

    # ASPP weights (n_aspp, 3, 3, Cin, 256) -> (27*Cin, 256), matching the
    # (j, kh, kw, Cin) im2col channel order; biases summed over branches.
    wk = params["w_aspp"].reshape(K, Caspp)
    wk = jnp.pad(wk, ((0, Kpad - K), (0, 0))).astype(jnp.bfloat16)
    bk = params["b_aspp"].sum(axis=0).reshape(1, Caspp).astype(jnp.float32)

    wc = jnp.concatenate(params["w_cls"], axis=1)             # (256, Ctot)
    wc = jnp.pad(wc, ((0, 0), (0, Cpad - Ctot))).astype(jnp.bfloat16)
    bc = jnp.pad(jnp.concatenate(params["b_cls"], axis=0),
                 (0, Cpad - Ctot)).reshape(1, Cpad).astype(jnp.float32)

    # Accumulator split: M>128 -> two 128-channel halves (each (M,128) f32 = 32
    # vregs); M<=128 -> a single 256-wide accumulator already fits.
    n_halves = 2 if M > 128 else 1
    half = Caspp // n_halves

    kernel = functools.partial(_classifier_kernel, n_halves=n_halves, half=half)

    aspp_flat, logits_flat = pl.pallas_call(
        kernel,
        out_shape=(
            jax.ShapeDtypeStruct((N, Ppad, Caspp), jnp.float32),
            jax.ShapeDtypeStruct((N, Ppad, Cpad), jnp.float32),
        ),
        grid_spec=pltpu.PrefetchScalarGridSpec(
            num_scalar_prefetch=0,
            grid=(N, R),
            in_specs=[
                pl.BlockSpec((None, M, Kpad), lambda n, r: (n, r, 0)),
                pl.BlockSpec((Kpad, Caspp), lambda n, r: (0, 0)),
                pl.BlockSpec((1, Caspp), lambda n, r: (0, 0)),
                pl.BlockSpec((Caspp, Cpad), lambda n, r: (0, 0)),
                pl.BlockSpec((1, Cpad), lambda n, r: (0, 0)),
            ],
            out_specs=[
                pl.BlockSpec((None, M, Caspp), lambda n, r: (n, r, 0)),
                pl.BlockSpec((None, M, Cpad), lambda n, r: (n, r, 0)),
            ],
        ),
        compiler_params=pltpu.CompilerParams(
            dimension_semantics=("parallel", "parallel")),
    )(xim, wk, bk, wc, bc)

    # Back to NCHW to match the PyTorch interface.
    aspp_nhwc = aspp_flat[:, :P, :].reshape(N, H, W, Caspp)
    logits_nhwc = logits_flat[:, :P, :Ctot].reshape(N, H, W, Ctot)
    out_logits = jnp.transpose(logits_nhwc, (0, 3, 1, 2))
    aspp_nchw = jnp.transpose(aspp_nhwc, (0, 3, 1, 2))
    # pre_logits is the SAME ASPP tensor repeated once per task — kept only for
    # interface fidelity; consumers should reuse `aspp_nchw` directly to avoid the
    # extra HBM copy (review item).
    pre_logits = jnp.concatenate([aspp_nchw] * len(classes), axis=1)
    return out_logits, pre_logits


def _reference_forward(x_nchw, params, dilation_series, classes, cast_dtype=None):
    """Pure-JAX reference (lax.conv). If cast_dtype is set, operands (and the ASPP
    output feeding the 1x1) are quantized through that dtype to mirror the kernel's
    bf16 matmul inputs while keeping f32 accumulation."""
    def q(t):
        return t.astype(cast_dtype).astype(jnp.float32) if cast_dtype is not None else t

    x = q(jnp.transpose(x_nchw, (0, 2, 3, 1)).astype(jnp.float32))
    dn = ("NHWC", "HWIO", "NHWC")
    out = None
    for j, d in enumerate(dilation_series):
        y = jax.lax.conv_general_dilated(
            x, q(params["w_aspp"][j]), (1, 1), [(d, d), (d, d)],
            rhs_dilation=(d, d), dimension_numbers=dn,
            preferred_element_type=jnp.float32) + params["b_aspp"][j]
        out = y if out is None else out + y
    pre = out
    out_q = q(out)
    outcls = []
    for i in range(len(classes)):
        w = q(params["w_cls"][i]).reshape(1, 1, 256, classes[i])
        y = jax.lax.conv_general_dilated(
            out_q, w, (1, 1), "VALID", dimension_numbers=dn,
            preferred_element_type=jnp.float32) + params["b_cls"][i]
        outcls.append(y)
    out_logits = jnp.transpose(jnp.concatenate(outcls, axis=-1), (0, 3, 1, 2))
    pre_nchw = jnp.transpose(pre, (0, 3, 1, 2))
    pre_logits = jnp.concatenate([pre_nchw] * len(classes), axis=1)
    return out_logits, pre_logits


if __name__ == "__main__":
    # Small, deterministic config consistent with the module.
    N, Cin, H, W = 2, 32, 16, 16
    dilation_series = [1, 2, 3]          # padding_series == dilation_series
    padding_series = [1, 2, 3]
    classes = [3, 5]
    Caspp = 256

    key = jax.random.PRNGKey(0)
    k_x, k_wa, k_ba, k_wc, k_bc = jax.random.split(key, 5)
    x = jax.random.normal(k_x, (N, Cin, H, W), jnp.float32)

    # Weights ~ N(0, 0.01) as in the module's init.
    params = {
        "w_aspp": 0.01 * jax.random.normal(
            k_wa, (len(dilation_series), 3, 3, Cin, Caspp), jnp.float32),  # HWIO / branch
        "b_aspp": 0.01 * jax.random.normal(
            k_ba, (len(dilation_series), Caspp), jnp.float32),
        "w_cls": [0.01 * jax.random.normal(jax.random.fold_in(k_wc, i), (Caspp, c), jnp.float32)
                  for i, c in enumerate(classes)],
        "b_cls": [0.01 * jax.random.normal(jax.random.fold_in(k_bc, i), (c,), jnp.float32)
                  for i, c in enumerate(classes)],
    }

    out_logits, pre_logits = classifier_module_forward(
        x, params, dilation_series, padding_series, classes)
    jax.block_until_ready((out_logits, pre_logits))

    assert out_logits.shape == (N, sum(classes), H, W)
    assert pre_logits.shape == (N, Caspp * len(classes), H, W)

    # Structural check: same bf16-quantized operands, f32 accumulation -> tight match.
    refq_logits, refq_pre = _reference_forward(
        x, params, dilation_series, classes, cast_dtype=jnp.bfloat16)
    assert jnp.allclose(out_logits, refq_logits, rtol=1e-3, atol=1e-3)
    assert jnp.allclose(pre_logits, refq_pre, rtol=1e-3, atol=1e-3)

    # Accuracy check vs. full-f32 reference (tolerance covers bf16 operand rounding).
    ref_logits, ref_pre = _reference_forward(x, params, dilation_series, classes)
    assert jnp.allclose(out_logits, ref_logits, rtol=2e-2, atol=2e-2)
    assert jnp.allclose(pre_logits, ref_pre, rtol=2e-2, atol=2e-2)

    print("KERNEL_OK")
</pallas_src>

<mosaic_0001>
module attributes {stable_mosaic.version = 11 : i64} {
  func.func @_classifier_kernel(%arg0: i32, %arg1: i32, %arg2: memref<1x256x896xbf16, #tpu.memory_space<vmem>>, %arg3: memref<896x256xbf16, #tpu.memory_space<vmem>>, %arg4: memref<1x256xf32, #tpu.memory_space<vmem>>, %arg5: memref<256x128xbf16, #tpu.memory_space<vmem>>, %arg6: memref<1x128xf32, #tpu.memory_space<vmem>>, %arg7: memref<1x256x256xf32, #tpu.memory_space<vmem>>, %arg8: memref<1x256x128xf32, #tpu.memory_space<vmem>>) attributes {dimension_semantics = [#tpu.dimension_semantics<parallel>, #tpu.dimension_semantics<parallel>], iteration_bounds = array<i64: 2, 1>, scalar_prefetch = 0 : i64, scratch_operands = 0 : i64, tpu.core_type = #tpu.core_type<tc>, window_params = [{transform_indices = @transform_0, window_bounds = array<i64: 1, 256, 896>}, {pipeline_mode = #tpu.pipeline_mode<synchronous>, transform_indices = @transform_1, window_bounds = array<i64: 896, 256>}, {pipeline_mode = #tpu.pipeline_mode<synchronous>, transform_indices = @transform_2, window_bounds = array<i64: 1, 256>}, {pipeline_mode = #tpu.pipeline_mode<synchronous>, transform_indices = @transform_3, window_bounds = array<i64: 256, 128>}, {pipeline_mode = #tpu.pipeline_mode<synchronous>, transform_indices = @transform_4, window_bounds = array<i64: 1, 128>}, {transform_indices = @transform_5, window_bounds = array<i64: 1, 256, 256>}, {transform_indices = @transform_6, window_bounds = array<i64: 1, 256, 128>}]} {
    %c0 = arith.constant 0 : index
    %c0_0 = arith.constant 0 : index
    %c0_1 = arith.constant 0 : index
    %0 = vector.load %arg2[%c0, %c0_0, %c0_1] : memref<1x256x896xbf16, #tpu.memory_space<vmem>>, vector<1x256x896xbf16>
    %1 = vector.shape_cast %0 : vector<1x256x896xbf16> to vector<256x896xbf16>
    %c0_2 = arith.constant 0 : index
    %c0_3 = arith.constant 0 : index
    %2 = vector.load %arg3[%c0_2, %c0_3] : memref<896x256xbf16, #tpu.memory_space<vmem>>, vector<896x128xbf16>
    %cst = arith.constant dense<0.000000e+00> : vector<256x128xf32>
    %3 = tpu.matmul %1, %2, %cst {dimension_numbers = #tpu.dot_dimension_numbers<[1], [0], [0], [1], [0, 0, 1, 1], [], []>} : vector<256x896xbf16>, vector<896x128xbf16>, vector<256x128xf32> -> vector<256x128xf32>
    %c0_4 = arith.constant 0 : index
    %c0_5 = arith.constant 0 : index
    %4 = vector.load %arg4[%c0_4, %c0_5] : memref<1x256xf32, #tpu.memory_space<vmem>>, vector<1x128xf32>
    %5 = vector.broadcast %4 : vector<1x128xf32> to vector<256x128xf32>
    %6 = arith.addf %3, %5 : vector<256x128xf32>
    %c0_6 = arith.constant 0 : index
    %c0_7 = arith.constant 0 : index
    %c0_8 = arith.constant 0 : index
    %7 = vector.load %arg7[%c0_6, %c0_7, %c0_8] : memref<1x256x256xf32, #tpu.memory_space<vmem>>, vector<1x256x128xf32>
    %8 = vector.shape_cast %7 : vector<1x256x128xf32> to vector<256x128xf32>
    %9 = vector.shape_cast %6 : vector<256x128xf32> to vector<1x256x128xf32>
    tpu.vector_store %arg7[%c0_6, %c0_7, %c0_8], %9 {strides = array<i32>} : memref<1x256x256xf32, #tpu.memory_space<vmem>>, vector<1x256x128xf32>,
    %10 = arith.truncf %6 : vector<256x128xf32> to vector<256x128xbf16>
    %c0_9 = arith.constant 0 : index
    %c0_10 = arith.constant 0 : index
    %11 = vector.load %arg5[%c0_9, %c0_10] : memref<256x128xbf16, #tpu.memory_space<vmem>>, vector<128x128xbf16>
    %cst_11 = arith.constant dense<0.000000e+00> : vector<256x128xf32>
    %12 = tpu.matmul %10, %11, %cst_11 {dimension_numbers = #tpu.dot_dimension_numbers<[1], [0], [0], [1], [0, 0, 1, 1], [], []>} : vector<256x128xbf16>, vector<128x128xbf16>, vector<256x128xf32> -> vector<256x128xf32>
    %c0_12 = arith.constant 0 : index
    %c0_13 = arith.constant 0 : index
    %13 = vector.load %arg6[%c0_12, %c0_13] : memref<1x128xf32, #tpu.memory_space<vmem>>, vector<1x128xf32>
    %14 = vector.broadcast %13 : vector<1x128xf32> to vector<256x128xf32>
    %15 = arith.addf %12, %14 : vector<256x128xf32>
    %c0_14 = arith.constant 0 : index
    %c0_15 = arith.constant 0 : index
    %c0_16 = arith.constant 0 : index
    %16 = vector.load %arg8[%c0_14, %c0_15, %c0_16] : memref<1x256x128xf32, #tpu.memory_space<vmem>>, vector<1x256x128xf32>
    %17 = vector.shape_cast %16 : vector<1x256x128xf32> to vector<256x128xf32>
    %18 = vector.shape_cast %15 : vector<256x128xf32> to vector<1x256x128xf32>
    tpu.vector_store %arg8[%c0_14, %c0_15, %c0_16], %18 {strides = array<i32>} : memref<1x256x128xf32, #tpu.memory_space<vmem>>, vector<1x256x128xf32>,
    %c0_17 = arith.constant 0 : index
    %c128 = arith.constant 128 : index
    %19 = vector.load %arg3[%c0_17, %c128] : memref<896x256xbf16, #tpu.memory_space<vmem>>, vector<896x128xbf16>
    %cst_18 = arith.constant dense<0.000000e+00> : vector<256x128xf32>
    %20 = tpu.matmul %1, %19, %cst_18 {dimension_numbers = #tpu.dot_dimension_numbers<[1], [0], [0], [1], [0, 0, 1, 1], [], []>} : vector<256x896xbf16>, vector<896x128xbf16>, vector<256x128xf32> -> vector<256x128xf32>
    %c0_19 = arith.constant 0 : index
    %c128_20 = arith.constant 128 : index
    %21 = vector.load %arg4[%c0_19, %c128_20] : memref<1x256xf32, #tpu.memory_space<vmem>>, vector<1x128xf32>
    %22 = vector.broadcast %21 : vector<1x128xf32> to vector<256x128xf32>
    %23 = arith.addf %20, %22 : vector<256x128xf32>
    %c0_21 = arith.constant 0 : index
    %c0_22 = arith.constant 0 : index
    %c128_23 = arith.constant 128 : index
    %24 = vector.load %arg7[%c0_21, %c0_22, %c128_23] : memref<1x256x256xf32, #tpu.memory_space<vmem>>, vector<1x256x128xf32>
    %25 = vector.shape_cast %24 : vector<1x256x128xf32> to vector<256x128xf32>
    %26 = vector.shape_cast %23 : vector<256x128xf32> to vector<1x256x128xf32>
    tpu.vector_store %arg7[%c0_21, %c0_22, %c128_23], %26 {strides = array<i32>} : memref<1x256x256xf32, #tpu.memory_space<vmem>>, vector<1x256x128xf32>,
    %27 = arith.truncf %23 : vector<256x128xf32> to vector<256x128xbf16>
    %c128_24 = arith.constant 128 : index
    %c0_25 = arith.constant 0 : index
    %28 = vector.load %arg5[%c128_24, %c0_25] : memref<256x128xbf16, #tpu.memory_space<vmem>>, vector<128x128xbf16>
    %cst_26 = arith.constant dense<0.000000e+00> : vector<256x128xf32>
    %29 = tpu.matmul %27, %28, %cst_26 {dimension_numbers = #tpu.dot_dimension_numbers<[1], [0], [0], [1], [0, 0, 1, 1], [], []>} : vector<256x128xbf16>, vector<128x128xbf16>, vector<256x128xf32> -> vector<256x128xf32>
    %c0_27 = arith.constant 0 : index
    %c0_28 = arith.constant 0 : index
    %c0_29 = arith.constant 0 : index
    %30 = vector.load %arg8[%c0_27, %c0_28, %c0_29] : memref<1x256x128xf32, #tpu.memory_space<vmem>>, vector<1x256x128xf32>
    %31 = vector.shape_cast %30 : vector<1x256x128xf32> to vector<256x128xf32>
    %32 = arith.addf %31, %29 : vector<256x128xf32>
    %c0_30 = arith.constant 0 : index
    %c0_31 = arith.constant 0 : index
    %c0_32 = arith.constant 0 : index
    %33 = vector.load %arg8[%c0_30, %c0_31, %c0_32] : memref<1x256x128xf32, #tpu.memory_space<vmem>>, vector<1x256x128xf32>
    %34 = vector.shape_cast %33 : vector<1x256x128xf32> to vector<256x128xf32>
    %35 = vector.shape_cast %32 : vector<256x128xf32> to vector<1x256x128xf32>
    tpu.vector_store %arg8[%c0_30, %c0_31, %c0_32], %35 {strides = array<i32>} : memref<1x256x128xf32, #tpu.memory_space<vmem>>, vector<1x256x128xf32>,
    return
  }
  func.func @transform_0(%arg0: i32, %arg1: i32) -> (i32, i32, i32) {
    %c0_i32 = arith.constant 0 : i32
    %c0_i32_0 = arith.constant 0 : i32
    return %arg0, %arg1, %c0_i32 : i32, i32, i32
  }
  func.func @transform_1(%arg0: i32, %arg1: i32) -> (i32, i32) {
    %c0_i32 = arith.constant 0 : i32
    %c0_i32_0 = arith.constant 0 : i32
    %c0_i32_1 = arith.constant 0 : i32
    return %c0_i32, %c0_i32_0 : i32, i32
  }
  func.func @transform_2(%arg0: i32, %arg1: i32) -> (i32, i32) {
    %c0_i32 = arith.constant 0 : i32
    %c0_i32_0 = arith.constant 0 : i32
    %c0_i32_1 = arith.constant 0 : i32
    return %c0_i32, %c0_i32_0 : i32, i32
  }
  func.func @transform_3(%arg0: i32, %arg1: i32) -> (i32, i32) {
    %c0_i32 = arith.constant 0 : i32
    %c0_i32_0 = arith.constant 0 : i32
    %c0_i32_1 = arith.constant 0 : i32
    return %c0_i32, %c0_i32_0 : i32, i32
  }
  func.func @transform_4(%arg0: i32, %arg1: i32) -> (i32, i32) {
    %c0_i32 = arith.constant 0 : i32
    %c0_i32_0 = arith.constant 0 : i32
    %c0_i32_1 = arith.constant 0 : i32
    return %c0_i32, %c0_i32_0 : i32, i32
  }
  func.func @transform_5(%arg0: i32, %arg1: i32) -> (i32, i32, i32) {
    %c0_i32 = arith.constant 0 : i32
    %c0_i32_0 = arith.constant 0 : i32
    return %arg0, %arg1, %c0_i32 : i32, i32, i32
  }
  func.func @transform_6(%arg0: i32, %arg1: i32) -> (i32, i32, i32) {
    %c0_i32 = arith.constant 0 : i32
    %c0_i32_0 = arith.constant 0 : i32
    return %arg0, %arg1, %c0_i32 : i32, i32, i32
  }
}

</mosaic_0001>

<llo_original>
// kernel: tpu_custom_call.1
$region0: #{tpu_custom_call.1}
  #allocation0 [shape = 'u32[]', space=smem, size = 0x4, offset = 0x4, fixed_abs, tag = 'smem constant byte address 0x4 - core index']
  #allocation1 [shape = 'u32[144,128]{1,0:T(1,128)}', space=vmem, size = 0x12000, scoped, tag = 'internal scratch']
  %s0 = inlined_call_operand.hbm [shape: bf16[2,256,896], index: 0, kind: input, shape index: {}]
  %s1 = inlined_call_operand.hbm [shape: bf16[896,256], index: 1, kind: input, shape index: {}]
  %s2 = inlined_call_operand.vmem [shape: f32[1,256], index: 2, kind: input, shape index: {}]
  %s3 = inlined_call_operand.hbm [shape: bf16[256,128], index: 3, kind: input, shape index: {}]
  %s4 = inlined_call_operand.vmem [shape: f32[1,128], index: 4, kind: input, shape index: {}]
  %s5 = inlined_call_operand.hbm [shape: f32[2,256,256], index: 5, kind: output, shape index: {0}]
  %s6 = inlined_call_operand.hbm [shape: f32[2,256,128], index: 6, kind: output, shape index: {1}]
  %7 = xla_tuple %s5, %s6
  %s8 = sld [smem:[#allocation0]]
  $region73: #{tpu_custom_call.1} parent=0
    _
  %s10 = ssub.s32 1, %s8
  %s11 = scalar_select 0, %s10, %s8
  $region1: #{tpu_custom_call.1} parent=0
    #allocation2 [shape = 'u8[917504]{0}', space=vmem, size = 0xe0000, scoped, tag = 'input window, operand 0']
    #allocation3 [shape = 's32[2]{0}', space=sflag, size = 0x8, scoped, tag = 'scoped memory for tpu_custom_call.1']
    #allocation4 [shape = 's32[2]{0}', space=sflag, size = 0x8, scoped, tag = 'scoped memory for tpu_custom_call.1']
    #allocation5 [shape = 'u8[458752]{0}', space=vmem, size = 0x70000, scoped, tag = 'input window, operand 1, single buffered']
    #allocation6 [shape = 's32[1]{0}', space=sflag, size = 0x4, scoped, tag = 'scoped memory for tpu_custom_call.1']
    #allocation7 [shape = 'u8[65536]{0}', space=vmem, size = 0x10000, scoped, tag = 'input window, operand 3, single buffered']
    #allocation8 [shape = 'u8[524288]{0}', space=vmem, size = 0x80000, scoped, tag = 'output window, operand 0']
    #allocation9 [shape = 'u8[262144]{0}', space=vmem, size = 0x40000, scoped, tag = 'output window, operand 1']
    #allocation10 [shape = 's32[2]{0}', space=sflag, size = 0x8, scoped, tag = 'scoped memory for tpu_custom_call.1']
    %12 = vsyncpa [#allocation3], 0
    %s13 = scalar_lea.sflag [#allocation3], 1
    %14 = vsyncpa %s13, 0
    %15 = vsyncpa [#allocation6], 0
    %16 = vsyncpa [#allocation4], 0
    %s17 = scalar_lea.sflag [#allocation4], 1
    %18 = vsyncpa %s17, 0
    %19 = vsyncpa [#allocation10], 0
    %s20 = scalar_lea.sflag [#allocation10], 1
    %21 = vsyncpa %s20, 0
    loop: start=0, step=1, limit=4
    $region2: #{tpu_custom_call.1} parent=1 // loop_pre_header
      _
    $region3: #{tpu_custom_call.1} parent=1 // loop_header
      %s23 = sphi 0, %s27
      %p24 = scmp.ge.s32.totalorder %s23, 4
      %s30 = sphi 0, %s42
      %s31 = sphi 0, %s38
      %s32 = sphi 0, %s30
      %s33 = sphi 0, %s31
      %s34 = sphi 0, %s32
      %s35 = sphi 0, %s33
      %s47 = sphi 0, %s49
      %s50 = sphi 0, %s47
      %s51 = sphi 0, %s50
      %s67 = sphi 0, %s51
      %s71 = sphi 0, %s71
      %s73 = sphi 0, %s71
      %s74 = sphi 0, %s73
      %s88 = sphi 0, %s74
      %s92 = sphi 0, %s92
      %s94 = sphi 0, %s92
      %s95 = sphi 0, %s94
      %s109 = sphi 0, %s95
      %s113 = sphi 0, %s113
      %s115 = sphi 0, %s113
      %s116 = sphi 0, %s115
      %s130 = sphi 0, %s116
      %s134 = sphi 0, %s134
      %s136 = sphi 0, %s134
      %s137 = sphi 0, %s136
      %s151 = sphi 0, %s137
      %s159 = sphi 0, %s161
      %s162 = sphi 0, %s159
      %s163 = sphi 0, %s162
      %s179 = sphi 0, %s163
      %s187 = sphi 0, %s189
      %s190 = sphi 0, %s187
      %s191 = sphi 0, %s190
      %s207 = sphi 0, %s191
    $region4: #{tpu_custom_call.1} parent=1 // loop_header_branch
      %26 = sbr.rel (%p24) target = $region8
    $region5: #{tpu_custom_call.1} parent=1 // loop_body
      %s28 = ssub.s32 %s23, 1
      %s29 = ssub.s32 %s23, 2
      %s36 = sadd.s32 1, %s31
      %p37 = scmp.ge.s32.totalorder %s36, 1
      %s38 = scalar_select %p37, 0, %s36
      %s39 = sadd.s32 1, %s30
      %s40 = scalar_select %p37, %s39, %s30
      %p41 = scmp.ge.s32.totalorder %s40, 2
      %s42 = scalar_select %p41, 0, %s40
      %s43 = ssub.s32 %s30, %s42
      %s44 = ssub.s32 %s31, %s38
      %s45 = sor.u32 %s43, %s44
      %p46 = scmp.eq.s32.totalorder %s45, 0
      %s48 = sadd.s32 %s47, 1
      %s49 = scalar_select %p46, %s47, %s48
      %p52 = pneg %p46
      %p53 = scmp.eq.s32.totalorder %s23, 1
      %p54 = por %p52, %p53
      %p55 = scmp.ne.s32.totalorder %s47, %s50
      %p56 = scmp.eq.s32.totalorder %s23, 0
      %p57 = por %p55, %p56
      %p58 = scmp.ne.s32.totalorder %s47, %s50
      %p59 = scmp.eq.s32.totalorder %s28, 1
      %p60 = por %p58, %p59
      %p61 = scmp.ne.s32.totalorder %s50, %s51
      %p62 = scmp.eq.s32.totalorder %s28, 0
      %p63 = por %p61, %p62
      %p64 = scmp.ne.s32.totalorder %s50, %s51
      %p65 = scmp.eq.s32.totalorder %s29, 1
      %p66 = por %p64, %p65
      %p68 = scmp.ne.s32.totalorder %s51, %s67
      %p69 = scmp.eq.s32.totalorder %s29, 0
      %p70 = por %p68, %p69
      %s72 = sadd.s32 %s71, 1
      %p75 = scmp.eq.s32.totalorder %s23, 1
      %p76 = scmp.ne.s32.totalorder %s71, %s73
      %p77 = scmp.eq.s32.totalorder %s23, 0
      %p78 = por %p76, %p77
      %p79 = scmp.ne.s32.totalorder %s71, %s73
      %p80 = scmp.eq.s32.totalorder %s28, 1
      %p81 = por %p79, %p80
      %p82 = scmp.ne.s32.totalorder %s73, %s74
      %p83 = scmp.eq.s32.totalorder %s28, 0
      %p84 = por %p82, %p83
      %p85 = scmp.ne.s32.totalorder %s73, %s74
      %p86 = scmp.eq.s32.totalorder %s29, 1
      %p87 = por %p85, %p86
      %p89 = scmp.ne.s32.totalorder %s74, %s88
      %p90 = scmp.eq.s32.totalorder %s29, 0
      %p91 = por %p89, %p90
      %s93 = sadd.s32 %s92, 1
      %p96 = scmp.eq.s32.totalorder %s23, 1
      %p97 = scmp.ne.s32.totalorder %s92, %s94
      %p98 = scmp.eq.s32.totalorder %s23, 0
      %p99 = por %p97, %p98
      %p100 = scmp.ne.s32.totalorder %s92, %s94
      %p101 = scmp.eq.s32.totalorder %s28, 1
      %p102 = por %p100, %p101
      %p103 = scmp.ne.s32.totalorder %s94, %s95
      %p104 = scmp.eq.s32.totalorder %s28, 0
      %p105 = por %p103, %p104
      %p106 = scmp.ne.s32.totalorder %s94, %s95
      %p107 = scmp.eq.s32.totalorder %s29, 1
      %p108 = por %p106, %p107
      %p110 = scmp.ne.s32.totalorder %s95, %s109
      %p111 = scmp.eq.s32.totalorder %s29, 0
      %p112 = por %p110, %p111
      %s114 = sadd.s32 %s113, 1
      %p117 = scmp.eq.s32.totalorder %s23, 1
      %p118 = scmp.ne.s32.totalorder %s113, %s115
      %p119 = scmp.eq.s32.totalorder %s23, 0
      %p120 = por %p118, %p119
      %p121 = scmp.ne.s32.totalorder %s113, %s115
      %p122 = scmp.eq.s32.totalorder %s28, 1
      %p123 = por %p121, %p122
      %p124 = scmp.ne.s32.totalorder %s115, %s116
      %p125 = scmp.eq.s32.totalorder %s28, 0
      %p126 = por %p124, %p125
      %p127 = scmp.ne.s32.totalorder %s115, %s116
      %p128 = scmp.eq.s32.totalorder %s29, 1
      %p129 = por %p127, %p128
      %p131 = scmp.ne.s32.totalorder %s116, %s130
      %p132 = scmp.eq.s32.totalorder %s29, 0
      %p133 = por %p131, %p132
      %s135 = sadd.s32 %s134, 1
      %p138 = scmp.eq.s32.totalorder %s23, 1
      %p139 = scmp.ne.s32.totalorder %s134, %s136
      %p140 = scmp.eq.s32.totalorder %s23, 0
      %p141 = por %p139, %p140
      %p142 = scmp.ne.s32.totalorder %s134, %s136
      %p143 = scmp.eq.s32.totalorder %s28, 1
      %p144 = por %p142, %p143
      %p145 = scmp.ne.s32.totalorder %s136, %s137
      %p146 = scmp.eq.s32.totalorder %s28, 0
      %p147 = por %p145, %p146
      %p148 = scmp.ne.s32.totalorder %s136, %s137
      %p149 = scmp.eq.s32.totalorder %s29, 1
      %p150 = por %p148, %p149
      %p152 = scmp.ne.s32.totalorder %s137, %s151
      %p153 = scmp.eq.s32.totalorder %s29, 0
      %p154 = por %p152, %p153
      %s155 = ssub.s32 %s30, %s42
      %s156 = ssub.s32 %s31, %s38
      %s157 = sor.u32 %s155, %s156
      %p158 = scmp.eq.s32.totalorder %s157, 0
      %s160 = sadd.s32 %s159, 1
      %s161 = scalar_select %p158, %s159, %s160
      %p164 = pneg %p158
      %p165 = scmp.eq.s32.totalorder %s23, 1
      %p166 = por %p164, %p165
      %p167 = scmp.ne.s32.totalorder %s159, %s162
      %p168 = scmp.eq.s32.totalorder %s23, 0
      %p169 = por %p167, %p168
      %p170 = scmp.ne.s32.totalorder %s159, %s162
      %p171 = scmp.eq.s32.totalorder %s28, 1
      %p172 = por %p170, %p171
      %p173 = scmp.ne.s32.totalorder %s162, %s163
      %p174 = scmp.eq.s32.totalorder %s28, 0
      %p175 = por %p173, %p174
      %p176 = scmp.ne.s32.totalorder %s162, %s163
      %p177 = scmp.eq.s32.totalorder %s29, 1
      %p178 = por %p176, %p177
      %p180 = scmp.ne.s32.totalorder %s163, %s179
      %p181 = scmp.eq.s32.totalorder %s29, 0
      %p182 = por %p180, %p181
      %s183 = ssub.s32 %s30, %s42
      %s184 = ssub.s32 %s31, %s38
      %s185 = sor.u32 %s183, %s184
      %p186 = scmp.eq.s32.totalorder %s185, 0
      %s188 = sadd.s32 %s187, 1
      %s189 = scalar_select %p186, %s187, %s188
      %p192 = pneg %p186
      %p193 = scmp.eq.s32.totalorder %s23, 1
      %p194 = por %p192, %p193
      %p195 = scmp.ne.s32.totalorder %s187, %s190
      %p196 = scmp.eq.s32.totalorder %s23, 0
      %p197 = por %p195, %p196
      %p198 = scmp.ne.s32.totalorder %s187, %s190
      %p199 = scmp.eq.s32.totalorder %s28, 1
      %p200 = por %p198, %p199
      %p201 = scmp.ne.s32.totalorder %s190, %s191
      %p202 = scmp.eq.s32.totalorder %s28, 0
      %p203 = por %p201, %p202
      %p204 = scmp.ne.s32.totalorder %s190, %s191
      %p205 = scmp.eq.s32.totalorder %s29, 1
      %p206 = por %p204, %p205
      %p208 = scmp.ne.s32.totalorder %s191, %s207
      %p209 = scmp.eq.s32.totalorder %s29, 0
      %p210 = por %p208, %p209
      %p211 = scmp.le.s32.totalorder 1, %s23
      %p212 = scmp.lt.s32.totalorder %s23, 3
      %p213 = pnand %p211, %p212
      %p214 = pneg %p213
      // Predicated region
      $region9: #{tpu_custom_call.1} parent=5 // pred_check
        _
      $region10: #{tpu_custom_call.1} parent=5 // pred_check_branch
        %216 = sbr.rel (%p213) target = $region12
      $region11: #{tpu_custom_call.1} parent=5 // pred_region
        %s217 = ssub.s32 %s23, 1
        // Predicated region
        $region13: #{tpu_custom_call.1} parent=11 // pred_check
          %p218 = pneg %p84
        $region14: #{tpu_custom_call.1} parent=11 // pred_check_branch
          %220 = sbr.rel (%p218) target = $region16
        $region15: #{tpu_custom_call.1} parent=11 // pred_region
          %s222 = ssub.s32 14336, 14336
          %223 = vsyncadd [#allocation6], %s222
          %s224 = sshll.u32 [#allocation5], 4
          %s225 = int_to_ptr.vmem [resolvable:$true] %s224
          %230 = dma.hbm_to_vmem [thread:$0]  %s1, 14336, %s225, [#allocation6], 128, 128, 8
        $region16: #{tpu_custom_call.1} parent=11 // pred_fallthru
          _
        // Predicated region
        $region17: #{tpu_custom_call.1} parent=11 // pred_check
          %p231 = pneg %p105
        $region18: #{tpu_custom_call.1} parent=11 // pred_check_branch
          %233 = sbr.rel (%p231) target = $region20
        $region19: #{tpu_custom_call.1} parent=11 // pred_region
          _
        $region20: #{tpu_custom_call.1} parent=11 // pred_fallthru
          _
        // Predicated region
        $region21: #{tpu_custom_call.1} parent=11 // pred_check
          %p234 = pneg %p126
        $region22: #{tpu_custom_call.1} parent=11 // pred_check_branch
          %236 = sbr.rel (%p234) target = $region24
        $region23: #{tpu_custom_call.1} parent=11 // pred_region
          %s238 = ssub.s32 2048, 2048
          %239 = vsyncadd [#allocation6], %s238
          %s240 = sshll.u32 [#allocation7], 4
          %s241 = int_to_ptr.vmem [resolvable:$true] %s240
          %246 = dma.hbm_to_vmem [thread:$0]  %s3, 2048, %s241, [#allocation6], 64, 64, 4
        $region24: #{tpu_custom_call.1} parent=11 // pred_fallthru
          _
        // Predicated region
        $region25: #{tpu_custom_call.1} parent=11 // pred_check
          %p247 = pneg %p147
        $region26: #{tpu_custom_call.1} parent=11 // pred_check_branch
          %249 = sbr.rel (%p247) target = $region28
        $region27: #{tpu_custom_call.1} parent=11 // pred_region
          _
        $region28: #{tpu_custom_call.1} parent=11 // pred_fallthru
          _
      $region12: #{tpu_custom_call.1} parent=5 // pred_fallthru
        _
      %p250 = scmp.lt.s32.totalorder %s23, 2
      // Predicated region
      $region29: #{tpu_custom_call.1} parent=5 // pred_check
        %p251 = pneg %p250
      $region30: #{tpu_custom_call.1} parent=5 // pred_check_branch
        %253 = sbr.rel (%p251) target = $region32
      $region31: #{tpu_custom_call.1} parent=5 // pred_region
        // Predicated region
        $region33: #{tpu_custom_call.1} parent=31 // pred_check
          %p254 = pneg %p57
        $region34: #{tpu_custom_call.1} parent=31 // pred_check_branch
          %256 = sbr.rel (%p254) target = $region36
        $region35: #{tpu_custom_call.1} parent=31 // pred_region
          %s257 = sand.u32 %s47, 1
          %s258 = scalar_lea.sflag [#allocation3], %s257
          %s259 = sand.u32 %s47, 1
          %s260 = smul.addr %s259, 896
          %s261 = scalar_lea.vmem [#allocation2], %s260
          %s262 = smul.u32 32, %s31
          %s264 = ssub.s32 14336, 14336
          %265 = vsyncadd %s258, %s264
          %s266 = smul.addr %s262, 7
          %s267 = smul.addr %s30, 224
          %s268 = sadd.s32 %s266, %s267
          %s269 = smul.addr %s268, 64
          %s270 = scalar_lea.hbm %s0, %s269
          %s271 = sshll.u32 %s261, 4
          %s272 = int_to_ptr.vmem [resolvable:$true] %s271
          %277 = dma.hbm_to_vmem [thread:$0]  %s270, 14336, %s272, %s258, 448, 448, 28
        $region36: #{tpu_custom_call.1} parent=31 // pred_fallthru
          _
      $region32: #{tpu_custom_call.1} parent=5 // pred_fallthru
        _
      %p278 = scmp.le.s32.totalorder 1, %s23
      %p279 = scmp.lt.s32.totalorder %s23, 3
      %p280 = pnand %p278, %p279
      %p281 = pneg %p280
      // Predicated region
      $region37: #{tpu_custom_call.1} parent=5 // pred_check
        _
      $region38: #{tpu_custom_call.1} parent=5 // pred_check_branch
        %283 = sbr.rel (%p280) target = $region40
      $region39: #{tpu_custom_call.1} parent=5 // pred_region
        %s284 = ssub.s32 %s23, 1
        %s285 = sand.u32 %s50, 1
        %s286 = scalar_lea.sflag [#allocation3], %s285
        %s287 = sand.u32 %s50, 1
        %s288 = smul.addr %s287, 896
        %s289 = scalar_lea.vmem [#allocation2], %s288
        // Predicated region
        $region41: #{tpu_custom_call.1} parent=39 // pred_check
          %p290 = pneg %p63
        $region42: #{tpu_custom_call.1} parent=39 // pred_check_branch
          %292 = sbr.rel (%p290) target = $region44
        $region43: #{tpu_custom_call.1} parent=39 // pred_region
          %293 = dma.done %s286, 14336
        $region44: #{tpu_custom_call.1} parent=39 // pred_fallthru
          _
        // Predicated region
        $region45: #{tpu_custom_call.1} parent=39 // pred_check
          %p294 = pneg %p84
        $region46: #{tpu_custom_call.1} parent=39 // pred_check_branch
          %296 = sbr.rel (%p294) target = $region48
        $region47: #{tpu_custom_call.1} parent=39 // pred_region
          %297 = dma.done [#allocation6], 14336
        $region48: #{tpu_custom_call.1} parent=39 // pred_fallthru
          _
        // Predicated region
        $region49: #{tpu_custom_call.1} parent=39 // pred_check
          %p298 = pneg %p126
        $region50: #{tpu_custom_call.1} parent=39 // pred_check_branch
          %300 = sbr.rel (%p298) target = $region52
        $region51: #{tpu_custom_call.1} parent=39 // pred_region
          %301 = dma.done [#allocation6], 2048
        $region52: #{tpu_custom_call.1} parent=39 // pred_fallthru
          _
        %s302 = sand.u32 %s50, 1
        %s303 = scalar_lea.sflag [#allocation3], %s302
        %s304 = sand.u32 %s50, 1
        %s305 = smul.addr %s304, 896
        %s306 = scalar_lea.vmem [#allocation2], %s305
        %p307 = pneg %p63
        %p308 = pneg %p60
        %p309 = pneg %p84
        %p310 = pneg %p81
        %p311 = pneg %p105
        %p312 = pneg %p102
        %p313 = pneg %p126
        %p314 = pneg %p123
        %p315 = pneg %p147
        %p316 = pneg %p144
        %p317 = pneg %p175
        %p318 = pneg %p172
        %s319 = sand.u32 %s162, 1
        %s320 = scalar_lea.sflag [#allocation4], %s319
        %s321 = sand.u32 %s162, 1
        %s322 = smul.addr %s321, 512
        %s323 = scalar_lea.vmem [#allocation8], %s322
        %p324 = pneg %p203
        %p325 = pneg %p200
        %s326 = sand.u32 %s190, 1
        %s327 = scalar_lea.sflag [#allocation10], %s326
        %s328 = sand.u32 %s190, 1
        %s329 = smul.addr %s328, 256
        %s330 = scalar_lea.vmem [#allocation9], %s329
        %s331 = smul.u32 32, %s33
        %s332 = smul.u32 32, %s33
        %s333 = smul.u32 32, %s33
        %v335 = vld [vmem:[%s289] sm:$0xff]
        %v336 = vld [vmem:[%s289 + $0x8] sm:$0xff]
        %v337 = vld [vmem:[%s289 + $0x10] sm:$0xff]
        %v338 = vld [vmem:[%s289 + $0x18] sm:$0xf]
        %v339 = vld [vmem:[%s289 + $0x1c] sm:$0xff]
        %v340 = vld [vmem:[%s289 + $0x24] sm:$0xff]
        %v341 = vld [vmem:[%s289 + $0x2c] sm:$0xff]
        %v342 = vld [vmem:[%s289 + $0x34] sm:$0xf]
        %v343 = vld [vmem:[%s289 + $0x38] sm:$0xff]
        %v344 = vld [vmem:[%s289 + $0x40] sm:$0xff]
        %v345 = vld [vmem:[%s289 + $0x48] sm:$0xff]
        %v346 = vld [vmem:[%s289 + $0x50] sm:$0xf]
        %v347 = vld [vmem:[%s289 + $0x54] sm:$0xff]
        %v348 = vld [vmem:[%s289 + $0x5c] sm:$0xff]
        %v349 = vld [vmem:[%s289 + $0x64] sm:$0xff]
        %v350 = vld [vmem:[%s289 + $0x6c] sm:$0xf]
        %v351 = vld [vmem:[%s289 + $0x70] sm:$0xff]
        %v352 = vld [vmem:[%s289 + $0x78] sm:$0xff]
        %v353 = vld [vmem:[%s289 + $0x80] sm:$0xff]
        %v354 = vld [vmem:[%s289 + $0x88] sm:$0xf]
        %v355 = vld [vmem:[%s289 + $0x8c] sm:$0xff]
        %v356 = vld [vmem:[%s289 + $0x94] sm:$0xff]
        %v357 = vld [vmem:[%s289 + $0x9c] sm:$0xff]
        %v358 = vld [vmem:[%s289 + $0xa4] sm:$0xf]
        %v359 = vld [vmem:[%s289 + $0xa8] sm:$0xff]
        %v360 = vld [vmem:[%s289 + $0xb0] sm:$0xff]
        %v361 = vld [vmem:[%s289 + $0xb8] sm:$0xff]
        %v362 = vld [vmem:[%s289 + $0xc0] sm:$0xf]
        %v363 = vld [vmem:[%s289 + $0xc4] sm:$0xff]
        %v364 = vld [vmem:[%s289 + $0xcc] sm:$0xff]
        %v365 = vld [vmem:[%s289 + $0xd4] sm:$0xff]
        %v366 = vld [vmem:[%s289 + $0xdc] sm:$0xf]
        %v367 = vld [vmem:[%s289 + $0xe0] sm:$0xff]
        %v368 = vld [vmem:[%s289 + $0xe8] sm:$0xff]
        %v369 = vld [vmem:[%s289 + $0xf0] sm:$0xff]
        %v370 = vld [vmem:[%s289 + $0xf8] sm:$0xf]
        %v371 = vld [vmem:[%s289 + $0xfc] sm:$0xff]
        %v372 = vld [vmem:[%s289 + $0x104] sm:$0xff]
        %v373 = vld [vmem:[%s289 + $0x10c] sm:$0xff]
        %v374 = vld [vmem:[%s289 + $0x114] sm:$0xf]
        %v375 = vld [vmem:[%s289 + $0x118] sm:$0xff]
        %v376 = vld [vmem:[%s289 + $0x120] sm:$0xff]
        %v377 = vld [vmem:[%s289 + $0x128] sm:$0xff]
        %v378 = vld [vmem:[%s289 + $0x130] sm:$0xf]
        %v379 = vld [vmem:[%s289 + $0x134] sm:$0xff]
        %v380 = vld [vmem:[%s289 + $0x13c] sm:$0xff]
        %v381 = vld [vmem:[%s289 + $0x144] sm:$0xff]
        %v382 = vld [vmem:[%s289 + $0x14c] sm:$0xf]
        %v383 = vld [vmem:[%s289 + $0x150] sm:$0xff]
        %v384 = vld [vmem:[%s289 + $0x158] sm:$0xff]
        %v385 = vld [vmem:[%s289 + $0x160] sm:$0xff]
        %v386 = vld [vmem:[%s289 + $0x168] sm:$0xf]
        %v387 = vld [vmem:[%s289 + $0x16c] sm:$0xff]
        %v388 = vld [vmem:[%s289 + $0x174] sm:$0xff]
        %v389 = vld [vmem:[%s289 + $0x17c] sm:$0xff]
        %v390 = vld [vmem:[%s289 + $0x184] sm:$0xf]
        %v391 = vld [vmem:[%s289 + $0x188] sm:$0xff]
        %v392 = vld [vmem:[%s289 + $0x190] sm:$0xff]
        %v393 = vld [vmem:[%s289 + $0x198] sm:$0xff]
        %v394 = vld [vmem:[%s289 + $0x1a0] sm:$0xf]
        %v395 = vld [vmem:[%s289 + $0x1a4] sm:$0xff]
        %v396 = vld [vmem:[%s289 + $0x1ac] sm:$0xff]
        %v397 = vld [vmem:[%s289 + $0x1b4] sm:$0xff]
        %v398 = vld [vmem:[%s289 + $0x1bc] sm:$0xf]
        %v399 = vld [vmem:[%s289 + $0x1c0] sm:$0xff]
        %v400 = vld [vmem:[%s289 + $0x1c8] sm:$0xff]
        %v401 = vld [vmem:[%s289 + $0x1d0] sm:$0xff]
        %v402 = vld [vmem:[%s289 + $0x1d8] sm:$0xf]
        %v403 = vld [vmem:[%s289 + $0x1dc] sm:$0xff]
        %v404 = vld [vmem:[%s289 + $0x1e4] sm:$0xff]
        %v405 = vld [vmem:[%s289 + $0x1ec] sm:$0xff]
        %v406 = vld [vmem:[%s289 + $0x1f4] sm:$0xf]
        %v407 = vld [vmem:[%s289 + $0x1f8] sm:$0xff]
        %v408 = vld [vmem:[%s289 + $0x200] sm:$0xff]
        %v409 = vld [vmem:[%s289 + $0x208] sm:$0xff]
        %v410 = vld [vmem:[%s289 + $0x210] sm:$0xf]
        %v411 = vld [vmem:[%s289 + $0x214] sm:$0xff]
        %v412 = vld [vmem:[%s289 + $0x21c] sm:$0xff]
        %v413 = vld [vmem:[%s289 + $0x224] sm:$0xff]
        %v414 = vld [vmem:[%s289 + $0x22c] sm:$0xf]
        %v415 = vld [vmem:[%s289 + $0x230] sm:$0xff]
        %v416 = vld [vmem:[%s289 + $0x238] sm:$0xff]
        %v417 = vld [vmem:[%s289 + $0x240] sm:$0xff]
        %v418 = vld [vmem:[%s289 + $0x248] sm:$0xf]
        %v419 = vld [vmem:[%s289 + $0x24c] sm:$0xff]
        %v420 = vld [vmem:[%s289 + $0x254] sm:$0xff]
        %v421 = vld [vmem:[%s289 + $0x25c] sm:$0xff]
        %v422 = vld [vmem:[%s289 + $0x264] sm:$0xf]
        %v423 = vld [vmem:[%s289 + $0x268] sm:$0xff]
        %v424 = vld [vmem:[%s289 + $0x270] sm:$0xff]
        %v425 = vld [vmem:[%s289 + $0x278] sm:$0xff]
        %v426 = vld [vmem:[%s289 + $0x280] sm:$0xf]
        %v427 = vld [vmem:[%s289 + $0x284] sm:$0xff]
        %v428 = vld [vmem:[%s289 + $0x28c] sm:$0xff]
        %v429 = vld [vmem:[%s289 + $0x294] sm:$0xff]
        %v430 = vld [vmem:[%s289 + $0x29c] sm:$0xf]
        %v431 = vld [vmem:[%s289 + $0x2a0] sm:$0xff]
        %v432 = vld [vmem:[%s289 + $0x2a8] sm:$0xff]
        %v433 = vld [vmem:[%s289 + $0x2b0] sm:$0xff]
        %v434 = vld [vmem:[%s289 + $0x2b8] sm:$0xf]
        %v435 = vld [vmem:[%s289 + $0x2bc] sm:$0xff]
        %v436 = vld [vmem:[%s289 + $0x2c4] sm:$0xff]
        %v437 = vld [vmem:[%s289 + $0x2cc] sm:$0xff]
        %v438 = vld [vmem:[%s289 + $0x2d4] sm:$0xf]
        %v439 = vld [vmem:[%s289 + $0x2d8] sm:$0xff]
        %v440 = vld [vmem:[%s289 + $0x2e0] sm:$0xff]
        %v441 = vld [vmem:[%s289 + $0x2e8] sm:$0xff]
        %v442 = vld [vmem:[%s289 + $0x2f0] sm:$0xf]
        %v443 = vld [vmem:[%s289 + $0x2f4] sm:$0xff]
        %v444 = vld [vmem:[%s289 + $0x2fc] sm:$0xff]
        %v445 = vld [vmem:[%s289 + $0x304] sm:$0xff]
        %v446 = vld [vmem:[%s289 + $0x30c] sm:$0xf]
        %v447 = vld [vmem:[%s289 + $0x310] sm:$0xff]
        %v448 = vld [vmem:[%s289 + $0x318] sm:$0xff]
        %v449 = vld [vmem:[%s289 + $0x320] sm:$0xff]
        %v450 = vld [vmem:[%s289 + $0x328] sm:$0xf]
        %v451 = vld [vmem:[%s289 + $0x32c] sm:$0xff]
        %v452 = vld [vmem:[%s289 + $0x334] sm:$0xff]
        %v453 = vld [vmem:[%s289 + $0x33c] sm:$0xff]
        %v454 = vld [vmem:[%s289 + $0x344] sm:$0xf]
        %v455 = vld [vmem:[%s289 + $0x348] sm:$0xff]
        %v456 = vld [vmem:[%s289 + $0x350] sm:$0xff]
        %v457 = vld [vmem:[%s289 + $0x358] sm:$0xff]
        %v458 = vld [vmem:[%s289 + $0x360] sm:$0xf]
        %v459 = vld [vmem:[%s289 + $0x364] sm:$0xff]
        %v460 = vld [vmem:[%s289 + $0x36c] sm:$0xff]
        %v461 = vld [vmem:[%s289 + $0x374] sm:$0xff]
        %v462 = vld [vmem:[%s289 + $0x37c] sm:$0xf]
        %v463 = vld [vmem:[#allocation5] sm:$0xf]
        %v464 = vld [vmem:[#allocation5 + $0x8] sm:$0xf]
        %v465 = vld [vmem:[#allocation5 + $0x10] sm:$0xf]
        %v466 = vld [vmem:[#allocation5 + $0x18] sm:$0xf]
        %v467 = vld [vmem:[#allocation5 + $0x20] sm:$0xf]
        %v468 = vld [vmem:[#allocation5 + $0x28] sm:$0xf]
        %v469 = vld [vmem:[#allocation5 + $0x30] sm:$0xf]
        %v470 = vld [vmem:[#allocation5 + $0x38] sm:$0xf]
        %v471 = vld [vmem:[#allocation5 + $0x40] sm:$0xf]
        %v472 = vld [vmem:[#allocation5 + $0x48] sm:$0xf]
        %v473 = vld [vmem:[#allocation5 + $0x50] sm:$0xf]
        %v474 = vld [vmem:[#allocation5 + $0x58] sm:$0xf]
        %v475 = vld [vmem:[#allocation5 + $0x60] sm:$0xf]
        %v476 = vld [vmem:[#allocation5 + $0x68] sm:$0xf]
        %v477 = vld [vmem:[#allocation5 + $0x70] sm:$0xf]
        %v478 = vld [vmem:[#allocation5 + $0x78] sm:$0xf]
        %v479 = vld [vmem:[#allocation5 + $0x80] sm:$0xf]
        %v480 = vld [vmem:[#allocation5 + $0x88] sm:$0xf]
        %v481 = vld [vmem:[#allocation5 + $0x90] sm:$0xf]
        %v482 = vld [vmem:[#allocation5 + $0x98] sm:$0xf]
        %v483 = vld [vmem:[#allocation5 + $0xa0] sm:$0xf]
        %v484 = vld [vmem:[#allocation5 + $0xa8] sm:$0xf]
        %v485 = vld [vmem:[#allocation5 + $0xb0] sm:$0xf]
        %v486 = vld [vmem:[#allocation5 + $0xb8] sm:$0xf]
        %v487 = vld [vmem:[#allocation5 + $0xc0] sm:$0xf]
        %v488 = vld [vmem:[#allocation5 + $0xc8] sm:$0xf]
        %v489 = vld [vmem:[#allocation5 + $0xd0] sm:$0xf]
        %v490 = vld [vmem:[#allocation5 + $0xd8] sm:$0xf]
        %v491 = vld [vmem:[#allocation5 + $0xe0] sm:$0xf]
        %v492 = vld [vmem:[#allocation5 + $0xe8] sm:$0xf]
        %v493 = vld [vmem:[#allocation5 + $0xf0] sm:$0xf]
        %v494 = vld [vmem:[#allocation5 + $0xf8] sm:$0xf]
        %v495 = vld [vmem:[#allocation5 + $0x100] sm:$0xf]
        %v496 = vld [vmem:[#allocation5 + $0x108] sm:$0xf]
        %v497 = vld [vmem:[#allocation5 + $0x110] sm:$0xf]
        %v498 = vld [vmem:[#allocation5 + $0x118] sm:$0xf]
        %v499 = vld [vmem:[#allocation5 + $0x120] sm:$0xf]
        %v500 = vld [vmem:[#allocation5 + $0x128] sm:$0xf]
        %v501 = vld [vmem:[#allocation5 + $0x130] sm:$0xf]
        %v502 = vld [vmem:[#allocation5 + $0x138] sm:$0xf]
        %v503 = vld [vmem:[#allocation5 + $0x140] sm:$0xf]
        %v504 = vld [vmem:[#allocation5 + $0x148] sm:$0xf]
        %v505 = vld [vmem:[#allocation5 + $0x150] sm:$0xf]
        %v506 = vld [vmem:[#allocation5 + $0x158] sm:$0xf]
        %v507 = vld [vmem:[#allocation5 + $0x160] sm:$0xf]
        %v508 = vld [vmem:[#allocation5 + $0x168] sm:$0xf]
        %v509 = vld [vmem:[#allocation5 + $0x170] sm:$0xf]
        %v510 = vld [vmem:[#allocation5 + $0x178] sm:$0xf]
        %v511 = vld [vmem:[#allocation5 + $0x180] sm:$0xf]
        %v512 = vld [vmem:[#allocation5 + $0x188] sm:$0xf]
        %v513 = vld [vmem:[#allocation5 + $0x190] sm:$0xf]
        %v514 = vld [vmem:[#allocation5 + $0x198] sm:$0xf]
        %v515 = vld [vmem:[#allocation5 + $0x1a0] sm:$0xf]
        %v516 = vld [vmem:[#allocation5 + $0x1a8] sm:$0xf]
        %v517 = vld [vmem:[#allocation5 + $0x1b0] sm:$0xf]
        %v518 = vld [vmem:[#allocation5 + $0x1b8] sm:$0xf]
        %v519 = vld [vmem:[#allocation5 + $0x1c0] sm:$0xf]
        %v520 = vld [vmem:[#allocation5 + $0x1c8] sm:$0xf]
        %v521 = vld [vmem:[#allocation5 + $0x1d0] sm:$0xf]
        %v522 = vld [vmem:[#allocation5 + $0x1d8] sm:$0xf]
        %v523 = vld [vmem:[#allocation5 + $0x1e0] sm:$0xf]
        %v524 = vld [vmem:[#allocation5 + $0x1e8] sm:$0xf]
        %v525 = vld [vmem:[#allocation5 + $0x1f0] sm:$0xf]
        %v526 = vld [vmem:[#allocation5 + $0x1f8] sm:$0xf]
        %v527 = vld [vmem:[#allocation5 + $0x200] sm:$0xf]
        %v528 = vld [vmem:[#allocation5 + $0x208] sm:$0xf]
        %v529 = vld [vmem:[#allocation5 + $0x210] sm:$0xf]
        %v530 = vld [vmem:[#allocation5 + $0x218] sm:$0xf]
        %v531 = vld [vmem:[#allocation5 + $0x220] sm:$0xf]
        %v532 = vld [vmem:[#allocation5 + $0x228] sm:$0xf]
        %v533 = vld [vmem:[#allocation5 + $0x230] sm:$0xf]
        %v534 = vld [vmem:[#allocation5 + $0x238] sm:$0xf]
        %v535 = vld [vmem:[#allocation5 + $0x240] sm:$0xf]
        %v536 = vld [vmem:[#allocation5 + $0x248] sm:$0xf]
        %v537 = vld [vmem:[#allocation5 + $0x250] sm:$0xf]
        %v538 = vld [vmem:[#allocation5 + $0x258] sm:$0xf]
        %v539 = vld [vmem:[#allocation5 + $0x260] sm:$0xf]
        %v540 = vld [vmem:[#allocation5 + $0x268] sm:$0xf]
        %v541 = vld [vmem:[#allocation5 + $0x270] sm:$0xf]
        %v542 = vld [vmem:[#allocation5 + $0x278] sm:$0xf]
        %v543 = vld [vmem:[#allocation5 + $0x280] sm:$0xf]
        %v544 = vld [vmem:[#allocation5 + $0x288] sm:$0xf]
        %v545 = vld [vmem:[#allocation5 + $0x290] sm:$0xf]
        %v546 = vld [vmem:[#allocation5 + $0x298] sm:$0xf]
        %v547 = vld [vmem:[#allocation5 + $0x2a0] sm:$0xf]
        %v548 = vld [vmem:[#allocation5 + $0x2a8] sm:$0xf]
        %v549 = vld [vmem:[#allocation5 + $0x2b0] sm:$0xf]
        %v550 = vld [vmem:[#allocation5 + $0x2b8] sm:$0xf]
        %v551 = vld [vmem:[#allocation5 + $0x2c0] sm:$0xf]
        %v552 = vld [vmem:[#allocation5 + $0x2c8] sm:$0xf]
        %v553 = vld [vmem:[#allocation5 + $0x2d0] sm:$0xf]
        %v554 = vld [vmem:[#allocation5 + $0x2d8] sm:$0xf]
        %v555 = vld [vmem:[#allocation5 + $0x2e0] sm:$0xf]
        %v556 = vld [vmem:[#allocation5 + $0x2e8] sm:$0xf]
        %v557 = vld [vmem:[#allocation5 + $0x2f0] sm:$0xf]
        %v558 = vld [vmem:[#allocation5 + $0x2f8] sm:$0xf]
        %v559 = vld [vmem:[#allocation5 + $0x300] sm:$0xf]
        %v560 = vld [vmem:[#allocation5 + $0x308] sm:$0xf]
        %v561 = vld [vmem:[#allocation5 + $0x310] sm:$0xf]
        %v562 = vld [vmem:[#allocation5 + $0x318] sm:$0xf]
        %v563 = vld [vmem:[#allocation5 + $0x320] sm:$0xf]
        %v564 = vld [vmem:[#allocation5 + $0x328] sm:$0xf]
        %v565 = vld [vmem:[#allocation5 + $0x330] sm:$0xf]
        %v566 = vld [vmem:[#allocation5 + $0x338] sm:$0xf]
        %v567 = vld [vmem:[#allocation5 + $0x340] sm:$0xf]
        %v568 = vld [vmem:[#allocation5 + $0x348] sm:$0xf]
        %v569 = vld [vmem:[#allocation5 + $0x350] sm:$0xf]
        %v570 = vld [vmem:[#allocation5 + $0x358] sm:$0xf]
        %v571 = vld [vmem:[#allocation5 + $0x360] sm:$0xf]
        %v572 = vld [vmem:[#allocation5 + $0x368] sm:$0xf]
        %v573 = vld [vmem:[#allocation5 + $0x370] sm:$0xf]
        %v574 = vld [vmem:[#allocation5 + $0x378] sm:$0xf]
        %v575 = vld [vmem:[%s2] sm:$0x1]
        %v577 = vlaneseq
        %v578 = vshrl.u32 %v577, 7
        %v579 = vsub.s32 0, %v578
        %v580 = vrot.slane %v575, %v579
        %v710 = vunpack.c.l.b16 %v335
        %v711 = vunpack.c.h.b16 %v335
        %v712 = vunpack.c.l.b16 %v336
        %v713 = vunpack.c.h.b16 %v336
        %v714 = vunpack.c.l.b16 %v337
        %v715 = vunpack.c.h.b16 %v337
        %v716 = vunpack.c.l.b16 %v338
        %v717 = vunpack.c.l.b16 %v339
        %v718 = vunpack.c.h.b16 %v339
        %v719 = vunpack.c.l.b16 %v340
        %v720 = vunpack.c.h.b16 %v340
        %v721 = vunpack.c.l.b16 %v341
        %v722 = vunpack.c.h.b16 %v341
        %v723 = vunpack.c.l.b16 %v342
        %v724 = vunpack.c.l.b16 %v343
        %v725 = vunpack.c.h.b16 %v343
        %v726 = vunpack.c.l.b16 %v344
        %v727 = vunpack.c.h.b16 %v344
        %v728 = vunpack.c.l.b16 %v345
        %v729 = vunpack.c.h.b16 %v345
        %v730 = vunpack.c.l.b16 %v346
        %v731 = vunpack.c.l.b16 %v347
        %v732 = vunpack.c.h.b16 %v347
        %v733 = vunpack.c.l.b16 %v348
        %v734 = vunpack.c.h.b16 %v348
        %v735 = vunpack.c.l.b16 %v349
        %v736 = vunpack.c.h.b16 %v349
        %v737 = vunpack.c.l.b16 %v350
        %v738 = vunpack.c.l.b16 %v351
        %v739 = vunpack.c.h.b16 %v351
        %v740 = vunpack.c.l.b16 %v352
        %v741 = vunpack.c.h.b16 %v352
        %v742 = vunpack.c.l.b16 %v353
        %v743 = vunpack.c.h.b16 %v353
        %v744 = vunpack.c.l.b16 %v354
        %v745 = vunpack.c.l.b16 %v355
        %v746 = vunpack.c.h.b16 %v355
        %v747 = vunpack.c.l.b16 %v356
        %v748 = vunpack.c.h.b16 %v356
        %v749 = vunpack.c.l.b16 %v357
        %v750 = vunpack.c.h.b16 %v357
        %v751 = vunpack.c.l.b16 %v358
        %v752 = vunpack.c.l.b16 %v359
        %v753 = vunpack.c.h.b16 %v359
        %v754 = vunpack.c.l.b16 %v360
        %v755 = vunpack.c.h.b16 %v360
        %v756 = vunpack.c.l.b16 %v361
        %v757 = vunpack.c.h.b16 %v361
        %v758 = vunpack.c.l.b16 %v362
        %v759 = vunpack.c.l.b16 %v363
        %v760 = vunpack.c.h.b16 %v363
        %v761 = vunpack.c.l.b16 %v364
        %v762 = vunpack.c.h.b16 %v364
        %v763 = vunpack.c.l.b16 %v365
        %v764 = vunpack.c.h.b16 %v365
        %v765 = vunpack.c.l.b16 %v366
        %v766 = vunpack.c.l.b16 %v367
        %v767 = vunpack.c.h.b16 %v367
        %v768 = vunpack.c.l.b16 %v368
        %v769 = vunpack.c.h.b16 %v368
        %v770 = vunpack.c.l.b16 %v369
        %v771 = vunpack.c.h.b16 %v369
        %v772 = vunpack.c.l.b16 %v370
        %v773 = vunpack.c.l.b16 %v371
        %v774 = vunpack.c.h.b16 %v371
        %v775 = vunpack.c.l.b16 %v372
        %v776 = vunpack.c.h.b16 %v372
        %v777 = vunpack.c.l.b16 %v373
        %v778 = vunpack.c.h.b16 %v373
        %v779 = vunpack.c.l.b16 %v374
        %v780 = vunpack.c.l.b16 %v375
        %v781 = vunpack.c.h.b16 %v375
        %v782 = vunpack.c.l.b16 %v376
        %v783 = vunpack.c.h.b16 %v376
        %v784 = vunpack.c.l.b16 %v377
        %v785 = vunpack.c.h.b16 %v377
        %v786 = vunpack.c.l.b16 %v378
        %v787 = vunpack.c.l.b16 %v379
        %v788 = vunpack.c.h.b16 %v379
        %v789 = vunpack.c.l.b16 %v380
        %v790 = vunpack.c.h.b16 %v380
        %v791 = vunpack.c.l.b16 %v381
        %v792 = vunpack.c.h.b16 %v381
        %v793 = vunpack.c.l.b16 %v382
        %v794 = vunpack.c.l.b16 %v383
        %v795 = vunpack.c.h.b16 %v383
        %v796 = vunpack.c.l.b16 %v384
        %v797 = vunpack.c.h.b16 %v384
        %v798 = vunpack.c.l.b16 %v385
        %v799 = vunpack.c.h.b16 %v385
        %v800 = vunpack.c.l.b16 %v386
        %v801 = vunpack.c.l.b16 %v387
        %v802 = vunpack.c.h.b16 %v387
        %v803 = vunpack.c.l.b16 %v388
        %v804 = vunpack.c.h.b16 %v388
        %v805 = vunpack.c.l.b16 %v389
        %v806 = vunpack.c.h.b16 %v389
        %v807 = vunpack.c.l.b16 %v390
        %v808 = vunpack.c.l.b16 %v391
        %v809 = vunpack.c.h.b16 %v391
        %v810 = vunpack.c.l.b16 %v392
        %v811 = vunpack.c.h.b16 %v392
        %v812 = vunpack.c.l.b16 %v393
        %v813 = vunpack.c.h.b16 %v393
        %v814 = vunpack.c.l.b16 %v394
        %v815 = vunpack.c.l.b16 %v395
        %v816 = vunpack.c.h.b16 %v395
        %v817 = vunpack.c.l.b16 %v396
        %v818 = vunpack.c.h.b16 %v396
        %v819 = vunpack.c.l.b16 %v397
        %v820 = vunpack.c.h.b16 %v397
        %v821 = vunpack.c.l.b16 %v398
        %v822 = vunpack.c.l.b16 %v399
        %v823 = vunpack.c.h.b16 %v399
        %v824 = vunpack.c.l.b16 %v400
        %v825 = vunpack.c.h.b16 %v400
        %v826 = vunpack.c.l.b16 %v401
        %v827 = vunpack.c.h.b16 %v401
        %v828 = vunpack.c.l.b16 %v402
        %v829 = vunpack.c.l.b16 %v403
        %v830 = vunpack.c.h.b16 %v403
        %v831 = vunpack.c.l.b16 %v404
        %v832 = vunpack.c.h.b16 %v404
        %v833 = vunpack.c.l.b16 %v405
        %v834 = vunpack.c.h.b16 %v405
        %v835 = vunpack.c.l.b16 %v406
        %v836 = vunpack.c.l.b16 %v407
        %v837 = vunpack.c.h.b16 %v407
        %v838 = vunpack.c.l.b16 %v408
        %v839 = vunpack.c.h.b16 %v408
        %v840 = vunpack.c.l.b16 %v409
        %v841 = vunpack.c.h.b16 %v409
        %v842 = vunpack.c.l.b16 %v410
        %v843 = vunpack.c.l.b16 %v411
        %v844 = vunpack.c.h.b16 %v411
        %v845 = vunpack.c.l.b16 %v412
        %v846 = vunpack.c.h.b16 %v412
        %v847 = vunpack.c.l.b16 %v413
        %v848 = vunpack.c.h.b16 %v413
        %v849 = vunpack.c.l.b16 %v414
        %v850 = vunpack.c.l.b16 %v415
        %v851 = vunpack.c.h.b16 %v415
        %v852 = vunpack.c.l.b16 %v416
        %v853 = vunpack.c.h.b16 %v416
        %v854 = vunpack.c.l.b16 %v417
        %v855 = vunpack.c.h.b16 %v417
        %v856 = vunpack.c.l.b16 %v418
        %v857 = vunpack.c.l.b16 %v419
        %v858 = vunpack.c.h.b16 %v419
        %v859 = vunpack.c.l.b16 %v420
        %v860 = vunpack.c.h.b16 %v420
        %v861 = vunpack.c.l.b16 %v421
        %v862 = vunpack.c.h.b16 %v421
        %v863 = vunpack.c.l.b16 %v422
        %v864 = vunpack.c.l.b16 %v423
        %v865 = vunpack.c.h.b16 %v423
        %v866 = vunpack.c.l.b16 %v424
        %v867 = vunpack.c.h.b16 %v424
        %v868 = vunpack.c.l.b16 %v425
        %v869 = vunpack.c.h.b16 %v425
        %v870 = vunpack.c.l.b16 %v426
        %v871 = vunpack.c.l.b16 %v427
        %v872 = vunpack.c.h.b16 %v427
        %v873 = vunpack.c.l.b16 %v428
        %v874 = vunpack.c.h.b16 %v428
        %v875 = vunpack.c.l.b16 %v429
        %v876 = vunpack.c.h.b16 %v429
        %v877 = vunpack.c.l.b16 %v430
        %v878 = vunpack.c.l.b16 %v431
        %v879 = vunpack.c.h.b16 %v431
        %v880 = vunpack.c.l.b16 %v432
        %v881 = vunpack.c.h.b16 %v432
        %v882 = vunpack.c.l.b16 %v433
        %v883 = vunpack.c.h.b16 %v433
        %v884 = vunpack.c.l.b16 %v434
        %v885 = vunpack.c.l.b16 %v435
        %v886 = vunpack.c.h.b16 %v435
        %v887 = vunpack.c.l.b16 %v436
        %v888 = vunpack.c.h.b16 %v436
        %v889 = vunpack.c.l.b16 %v437
        %v890 = vunpack.c.h.b16 %v437
        %v891 = vunpack.c.l.b16 %v438
        %v892 = vunpack.c.l.b16 %v439
        %v893 = vunpack.c.h.b16 %v439
        %v894 = vunpack.c.l.b16 %v440
        %v895 = vunpack.c.h.b16 %v440
        %v896 = vunpack.c.l.b16 %v441
        %v897 = vunpack.c.h.b16 %v441
        %v898 = vunpack.c.l.b16 %v442
        %v899 = vunpack.c.l.b16 %v443
        %v900 = vunpack.c.h.b16 %v443
        %v901 = vunpack.c.l.b16 %v444
        %v902 = vunpack.c.h.b16 %v444
        %v903 = vunpack.c.l.b16 %v445
        %v904 = vunpack.c.h.b16 %v445
        %v905 = vunpack.c.l.b16 %v446
        %v906 = vunpack.c.l.b16 %v447
        %v907 = vunpack.c.h.b16 %v447
        %v908 = vunpack.c.l.b16 %v448
        %v909 = vunpack.c.h.b16 %v448
        %v910 = vunpack.c.l.b16 %v449
        %v911 = vunpack.c.h.b16 %v449
        %v912 = vunpack.c.l.b16 %v450
        %v913 = vunpack.c.l.b16 %v451
        %v914 = vunpack.c.h.b16 %v451
        %v915 = vunpack.c.l.b16 %v452
        %v916 = vunpack.c.h.b16 %v452
        %v917 = vunpack.c.l.b16 %v453
        %v918 = vunpack.c.h.b16 %v453
        %v919 = vunpack.c.l.b16 %v454
        %v920 = vunpack.c.l.b16 %v455
        %v921 = vunpack.c.h.b16 %v455
        %v922 = vunpack.c.l.b16 %v456
        %v923 = vunpack.c.h.b16 %v456
        %v924 = vunpack.c.l.b16 %v457
        %v925 = vunpack.c.h.b16 %v457
        %v926 = vunpack.c.l.b16 %v458
        %v927 = vunpack.c.l.b16 %v459
        %v928 = vunpack.c.h.b16 %v459
        %v929 = vunpack.c.l.b16 %v460
        %v930 = vunpack.c.h.b16 %v460
        %v931 = vunpack.c.l.b16 %v461
        %v932 = vunpack.c.h.b16 %v461
        %v933 = vunpack.c.l.b16 %v462
        %v934 = vpack.c.b16 %v717, %v710
        %v935 = vpack.c.b16 %v718, %v711
        %v936 = vpack.c.b16 %v719, %v712
        %v937 = vpack.c.b16 %v720, %v713
        %v938 = vpack.c.b16 %v721, %v714
        %v939 = vpack.c.b16 %v722, %v715
        %v940 = vpack.c.b16 %v723, %v716
        %v941 = vpack.c.b16 %v731, %v724
        %v942 = vpack.c.b16 %v732, %v725
        %v943 = vpack.c.b16 %v733, %v726
        %v944 = vpack.c.b16 %v734, %v727
        %v945 = vpack.c.b16 %v735, %v728
        %v946 = vpack.c.b16 %v736, %v729
        %v947 = vpack.c.b16 %v737, %v730
        %v948 = vpack.c.b16 %v745, %v738
        %v949 = vpack.c.b16 %v746, %v739
        %v950 = vpack.c.b16 %v747, %v740
        %v951 = vpack.c.b16 %v748, %v741
        %v952 = vpack.c.b16 %v749, %v742
        %v953 = vpack.c.b16 %v750, %v743
        %v954 = vpack.c.b16 %v751, %v744
        %v955 = vpack.c.b16 %v759, %v752
        %v956 = vpack.c.b16 %v760, %v753
        %v957 = vpack.c.b16 %v761, %v754
        %v958 = vpack.c.b16 %v762, %v755
        %v959 = vpack.c.b16 %v763, %v756
        %v960 = vpack.c.b16 %v764, %v757
        %v961 = vpack.c.b16 %v765, %v758
        %v962 = vpack.c.b16 %v773, %v766
        %v963 = vpack.c.b16 %v774, %v767
        %v964 = vpack.c.b16 %v775, %v768
        %v965 = vpack.c.b16 %v776, %v769
        %v966 = vpack.c.b16 %v777, %v770
        %v967 = vpack.c.b16 %v778, %v771
        %v968 = vpack.c.b16 %v779, %v772
        %v969 = vpack.c.b16 %v787, %v780
        %v970 = vpack.c.b16 %v788, %v781
        %v971 = vpack.c.b16 %v789, %v782
        %v972 = vpack.c.b16 %v790, %v783
        %v973 = vpack.c.b16 %v791, %v784
        %v974 = vpack.c.b16 %v792, %v785
        %v975 = vpack.c.b16 %v793, %v786
        %v976 = vpack.c.b16 %v801, %v794
        %v977 = vpack.c.b16 %v802, %v795
        %v978 = vpack.c.b16 %v803, %v796
        %v979 = vpack.c.b16 %v804, %v797
        %v980 = vpack.c.b16 %v805, %v798
        %v981 = vpack.c.b16 %v806, %v799
        %v982 = vpack.c.b16 %v807, %v800
        %v983 = vpack.c.b16 %v815, %v808
        %v984 = vpack.c.b16 %v816, %v809
        %v985 = vpack.c.b16 %v817, %v810
        %v986 = vpack.c.b16 %v818, %v811
        %v987 = vpack.c.b16 %v819, %v812
        %v988 = vpack.c.b16 %v820, %v813
        %v989 = vpack.c.b16 %v821, %v814
        %v990 = vpack.c.b16 %v829, %v822
        %v991 = vpack.c.b16 %v830, %v823
        %v992 = vpack.c.b16 %v831, %v824
        %v993 = vpack.c.b16 %v832, %v825
        %v994 = vpack.c.b16 %v833, %v826
        %v995 = vpack.c.b16 %v834, %v827
        %v996 = vpack.c.b16 %v835, %v828
        %v997 = vpack.c.b16 %v843, %v836
        %v998 = vpack.c.b16 %v844, %v837
        %v999 = vpack.c.b16 %v845, %v838
        %v1000 = vpack.c.b16 %v846, %v839
        %v1001 = vpack.c.b16 %v847, %v840
        %v1002 = vpack.c.b16 %v848, %v841
        %v1003 = vpack.c.b16 %v849, %v842
        %v1004 = vpack.c.b16 %v857, %v850
        %v1005 = vpack.c.b16 %v858, %v851
        %v1006 = vpack.c.b16 %v859, %v852
        %v1007 = vpack.c.b16 %v860, %v853
        %v1008 = vpack.c.b16 %v861, %v854
        %v1009 = vpack.c.b16 %v862, %v855
        %v1010 = vpack.c.b16 %v863, %v856
        %v1011 = vpack.c.b16 %v871, %v864
        %v1012 = vpack.c.b16 %v872, %v865
        %v1013 = vpack.c.b16 %v873, %v866
        %v1014 = vpack.c.b16 %v874, %v867
        %v1015 = vpack.c.b16 %v875, %v868
        %v1016 = vpack.c.b16 %v876, %v869
        %v1017 = vpack.c.b16 %v877, %v870
        %v1018 = vpack.c.b16 %v885, %v878
        %v1019 = vpack.c.b16 %v886, %v879
        %v1020 = vpack.c.b16 %v887, %v880
        %v1021 = vpack.c.b16 %v888, %v881
        %v1022 = vpack.c.b16 %v889, %v882
        %v1023 = vpack.c.b16 %v890, %v883
        %v1024 = vpack.c.b16 %v891, %v884
        %v1025 = vpack.c.b16 %v899, %v892
        %v1026 = vpack.c.b16 %v900, %v893
        %v1027 = vpack.c.b16 %v901, %v894
        %v1028 = vpack.c.b16 %v902, %v895
        %v1029 = vpack.c.b16 %v903, %v896
        %v1030 = vpack.c.b16 %v904, %v897
        %v1031 = vpack.c.b16 %v905, %v898
        %v1032 = vpack.c.b16 %v913, %v906
        %v1033 = vpack.c.b16 %v914, %v907
        %v1034 = vpack.c.b16 %v915, %v908
        %v1035 = vpack.c.b16 %v916, %v909
        %v1036 = vpack.c.b16 %v917, %v910
        %v1037 = vpack.c.b16 %v918, %v911
        %v1038 = vpack.c.b16 %v919, %v912
        %v1039 = vpack.c.b16 %v927, %v920
        %v1040 = vpack.c.b16 %v928, %v921
        %v1041 = vpack.c.b16 %v929, %v922
        %v1042 = vpack.c.b16 %v930, %v923
        %v1043 = vpack.c.b16 %v931, %v924
        %v1044 = vpack.c.b16 %v932, %v925
        %v1045 = vpack.c.b16 %v933, %v926
        %v1270 = vunpack.c.l.b16 %v463
        %v1271 = vunpack.c.l.b16 %v464
        %v1272 = vunpack.c.l.b16 %v465
        %v1273 = vunpack.c.l.b16 %v466
        %v1274 = vunpack.c.l.b16 %v467
        %v1275 = vunpack.c.l.b16 %v468
        %v1276 = vunpack.c.l.b16 %v469
        %v1277 = vunpack.c.l.b16 %v470
        %v1278 = vunpack.c.l.b16 %v471
        %v1279 = vunpack.c.l.b16 %v472
        %v1280 = vunpack.c.l.b16 %v473
        %v1281 = vunpack.c.l.b16 %v474
        %v1282 = vunpack.c.l.b16 %v475
        %v1283 = vunpack.c.l.b16 %v476
        %v1284 = vunpack.c.l.b16 %v477
        %v1285 = vunpack.c.l.b16 %v478
        %v1286 = vunpack.c.l.b16 %v479
        %v1287 = vunpack.c.l.b16 %v480
        %v1288 = vunpack.c.l.b16 %v481
        %v1289 = vunpack.c.l.b16 %v482
        %v1290 = vunpack.c.l.b16 %v483
        %v1291 = vunpack.c.l.b16 %v484
        %v1292 = vunpack.c.l.b16 %v485
        %v1293 = vunpack.c.l.b16 %v486
        %v1294 = vunpack.c.l.b16 %v487
        %v1295 = vunpack.c.l.b16 %v488
        %v1296 = vunpack.c.l.b16 %v489
        %v1297 = vunpack.c.l.b16 %v490
        %v1298 = vunpack.c.l.b16 %v491
        %v1299 = vunpack.c.l.b16 %v492
        %v1300 = vunpack.c.l.b16 %v493
        %v1301 = vunpack.c.l.b16 %v494
        %v1302 = vunpack.c.l.b16 %v495
        %v1303 = vunpack.c.l.b16 %v496
        %v1304 = vunpack.c.l.b16 %v497
        %v1305 = vunpack.c.l.b16 %v498
        %v1306 = vunpack.c.l.b16 %v499
        %v1307 = vunpack.c.l.b16 %v500
        %v1308 = vunpack.c.l.b16 %v501
        %v1309 = vunpack.c.l.b16 %v502
        %v1310 = vunpack.c.l.b16 %v503
        %v1311 = vunpack.c.l.b16 %v504
        %v1312 = vunpack.c.l.b16 %v505
        %v1313 = vunpack.c.l.b16 %v506
        %v1314 = vunpack.c.l.b16 %v507
        %v1315 = vunpack.c.l.b16 %v508
        %v1316 = vunpack.c.l.b16 %v509
        %v1317 = vunpack.c.l.b16 %v510
        %v1318 = vunpack.c.l.b16 %v511
        %v1319 = vunpack.c.l.b16 %v512
        %v1320 = vunpack.c.l.b16 %v513
        %v1321 = vunpack.c.l.b16 %v514
        %v1322 = vunpack.c.l.b16 %v515
        %v1323 = vunpack.c.l.b16 %v516
        %v1324 = vunpack.c.l.b16 %v517
        %v1325 = vunpack.c.l.b16 %v518
        %v1326 = vunpack.c.l.b16 %v519
        %v1327 = vunpack.c.l.b16 %v520
        %v1328 = vunpack.c.l.b16 %v521
        %v1329 = vunpack.c.l.b16 %v522
        %v1330 = vunpack.c.l.b16 %v523
        %v1331 = vunpack.c.l.b16 %v524
        %v1332 = vunpack.c.l.b16 %v525
        %v1333 = vunpack.c.l.b16 %v526
        %v1334 = vunpack.c.l.b16 %v527
        %v1335 = vunpack.c.l.b16 %v528
        %v1336 = vunpack.c.l.b16 %v529
        %v1337 = vunpack.c.l.b16 %v530
        %v1338 = vunpack.c.l.b16 %v531
        %v1339 = vunpack.c.l.b16 %v532
        %v1340 = vunpack.c.l.b16 %v533
        %v1341 = vunpack.c.l.b16 %v534
        %v1342 = vunpack.c.l.b16 %v535
        %v1343 = vunpack.c.l.b16 %v536
        %v1344 = vunpack.c.l.b16 %v537
        %v1345 = vunpack.c.l.b16 %v538
        %v1346 = vunpack.c.l.b16 %v539
        %v1347 = vunpack.c.l.b16 %v540
        %v1348 = vunpack.c.l.b16 %v541
        %v1349 = vunpack.c.l.b16 %v542
        %v1350 = vunpack.c.l.b16 %v543
        %v1351 = vunpack.c.l.b16 %v544
        %v1352 = vunpack.c.l.b16 %v545
        %v1353 = vunpack.c.l.b16 %v546
        %v1354 = vunpack.c.l.b16 %v547
        %v1355 = vunpack.c.l.b16 %v548
        %v1356 = vunpack.c.l.b16 %v549
        %v1357 = vunpack.c.l.b16 %v550
        %v1358 = vunpack.c.l.b16 %v551
        %v1359 = vunpack.c.l.b16 %v552
        %v1360 = vunpack.c.l.b16 %v553
        %v1361 = vunpack.c.l.b16 %v554
        %v1362 = vunpack.c.l.b16 %v555
        %v1363 = vunpack.c.l.b16 %v556
        %v1364 = vunpack.c.l.b16 %v557
        %v1365 = vunpack.c.l.b16 %v558
        %v1366 = vunpack.c.l.b16 %v559
        %v1367 = vunpack.c.l.b16 %v560
        %v1368 = vunpack.c.l.b16 %v561
        %v1369 = vunpack.c.l.b16 %v562
        %v1370 = vunpack.c.l.b16 %v563
        %v1371 = vunpack.c.l.b16 %v564
        %v1372 = vunpack.c.l.b16 %v565
        %v1373 = vunpack.c.l.b16 %v566
        %v1374 = vunpack.c.l.b16 %v567
        %v1375 = vunpack.c.l.b16 %v568
        %v1376 = vunpack.c.l.b16 %v569
        %v1377 = vunpack.c.l.b16 %v570
        %v1378 = vunpack.c.l.b16 %v571
        %v1379 = vunpack.c.l.b16 %v572
        %v1380 = vunpack.c.l.b16 %v573
        %v1381 = vunpack.c.l.b16 %v574
        %v1382 = vpack.c.b16 %v1271, %v1270
        %v1383 = vpack.c.b16 %v1273, %v1272
        %v1384 = vpack.c.b16 %v1275, %v1274
        %v1385 = vpack.c.b16 %v1277, %v1276
        %v1386 = vpack.c.b16 %v1279, %v1278
        %v1387 = vpack.c.b16 %v1281, %v1280
        %v1388 = vpack.c.b16 %v1283, %v1282
        %v1389 = vpack.c.b16 %v1285, %v1284
        %v1390 = vpack.c.b16 %v1287, %v1286
        %v1391 = vpack.c.b16 %v1289, %v1288
        %v1392 = vpack.c.b16 %v1291, %v1290
        %v1393 = vpack.c.b16 %v1293, %v1292
        %v1394 = vpack.c.b16 %v1295, %v1294
        %v1395 = vpack.c.b16 %v1297, %v1296
        %v1396 = vpack.c.b16 %v1299, %v1298
        %v1397 = vpack.c.b16 %v1301, %v1300
        %v1398 = vpack.c.b16 %v1303, %v1302
        %v1399 = vpack.c.b16 %v1305, %v1304
        %v1400 = vpack.c.b16 %v1307, %v1306
        %v1401 = vpack.c.b16 %v1309, %v1308
        %v1402 = vpack.c.b16 %v1311, %v1310
        %v1403 = vpack.c.b16 %v1313, %v1312
        %v1404 = vpack.c.b16 %v1315, %v1314
        %v1405 = vpack.c.b16 %v1317, %v1316
        %v1406 = vpack.c.b16 %v1319, %v1318
        %v1407 = vpack.c.b16 %v1321, %v1320
        %v1408 = vpack.c.b16 %v1323, %v1322
        %v1409 = vpack.c.b16 %v1325, %v1324
        %v1410 = vpack.c.b16 %v1327, %v1326
        %v1411 = vpack.c.b16 %v1329, %v1328
        %v1412 = vpack.c.b16 %v1331, %v1330
        %v1413 = vpack.c.b16 %v1333, %v1332
        %v1414 = vpack.c.b16 %v1335, %v1334
        %v1415 = vpack.c.b16 %v1337, %v1336
        %v1416 = vpack.c.b16 %v1339, %v1338
        %v1417 = vpack.c.b16 %v1341, %v1340
        %v1418 = vpack.c.b16 %v1343, %v1342
        %v1419 = vpack.c.b16 %v1345, %v1344
        %v1420 = vpack.c.b16 %v1347, %v1346
        %v1421 = vpack.c.b16 %v1349, %v1348
        %v1422 = vpack.c.b16 %v1351, %v1350
        %v1423 = vpack.c.b16 %v1353, %v1352
        %v1424 = vpack.c.b16 %v1355, %v1354
        %v1425 = vpack.c.b16 %v1357, %v1356
        %v1426 = vpack.c.b16 %v1359, %v1358
        %v1427 = vpack.c.b16 %v1361, %v1360
        %v1428 = vpack.c.b16 %v1363, %v1362
        %v1429 = vpack.c.b16 %v1365, %v1364
        %v1430 = vpack.c.b16 %v1367, %v1366
        %v1431 = vpack.c.b16 %v1369, %v1368
        %v1432 = vpack.c.b16 %v1371, %v1370
        %v1433 = vpack.c.b16 %v1373, %v1372
        %v1434 = vpack.c.b16 %v1375, %v1374
        %v1435 = vpack.c.b16 %v1377, %v1376
        %v1436 = vpack.c.b16 %v1379, %v1378
        %v1437 = vpack.c.b16 %v1381, %v1380
        %1494 = vmatprep.subr.bf16.mxu0 0
        %1495 = vmatpush1.bf16.msra.mxu0 %v1382
        %1496 = vmatprep.subr.bf16.mxu0 0
        %1497 = vmatpush1.bf16.msra.mxu0 %v1383
        %1498 = vmatprep.subr.bf16.mxu0 0
        %1499 = vmatpush1.bf16.msra.mxu0 %v1384
        %1500 = vmatprep.subr.bf16.mxu0 0
        %1501 = vmatpush1.bf16.msra.mxu0 %v1385
        %1502 = vmatprep.subr.bf16.mxu0 0
        %1503 = vmatpush1.bf16.msra.mxu0 %v1386
        %1504 = vmatprep.subr.bf16.mxu0 0
        %1505 = vmatpush1.bf16.msra.mxu0 %v1387
        %1506 = vmatprep.subr.bf16.mxu0 0
        %1507 = vmatpush1.bf16.msra.mxu0 %v1388
        %1508 = vmatprep.subr.bf16.mxu0 0
        %1509 = vmatpush1.bf16.msra.mxu0 %v1389
        %1510 = vmatprep.subr.bf16.mxu0 0
        %1511 = vmatpush1.bf16.msra.mxu0 %v1390
        %1512 = vmatprep.subr.bf16.mxu0 0
        %1513 = vmatpush1.bf16.msra.mxu0 %v1391
        %1514 = vmatprep.subr.bf16.mxu0 0
        %1515 = vmatpush1.bf16.msra.mxu0 %v1392
        %1516 = vmatprep.subr.bf16.mxu0 0
        %1517 = vmatpush1.bf16.msra.mxu0 %v1393
        %1518 = vmatprep.subr.bf16.mxu0 0
        %1519 = vmatpush1.bf16.msra.mxu0 %v1394
        %1520 = vmatprep.subr.bf16.mxu0 0
        %1521 = vmatpush1.bf16.msra.mxu0 %v1395
        %1522 = vmatprep.subr.bf16.mxu0 0
        %1523 = vmatpush1.bf16.msra.mxu0 %v1396
        %1524 = vmatprep.subr.bf16.mxu0 0
        %1525 = vmatpush1.bf16.msra.mxu0 %v1397
        %1526 = vmatprep.mubr.bf16.mxu0 %v935
        %1527 = vmatmul.mubr.bf16.gmra.mrb[0].mxu0 %v934
        %v1528 = vpop.f32.mrb[0].mxu0
        %v1529 = vadd.f32 %v580, %v1528
        %v1530 = vpop.f32.mrb[0].mxu0
        %v1531 = vpop.f32.mrb[0].mxu0
        %v1532 = vadd.f32 %v580, %v1531
        %v1533 = vpop.f32.mrb[0].mxu0
        %1534 = vmatprep.mubr.bf16.mxu0 %v942
        %1535 = vmatmul.mubr.bf16.gmra.mrb[0].mxu0 %v941
        %v1536 = vpop.f32.mrb[0].mxu0
        %v1537 = vadd.f32 %v580, %v1536
        %v1538 = vpop.f32.mrb[0].mxu0
        %v1539 = vpop.f32.mrb[0].mxu0
        %v1540 = vadd.f32 %v580, %v1539
        %v1541 = vpop.f32.mrb[0].mxu0
        %1542 = vmatprep.mubr.bf16.mxu0 %v949
        %1543 = vmatmul.mubr.bf16.gmra.mrb[0].mxu0 %v948
        %v1544 = vpop.f32.mrb[0].mxu0
        %v1545 = vadd.f32 %v580, %v1544
        %v1546 = vpop.f32.mrb[0].mxu0
        %v1547 = vpop.f32.mrb[0].mxu0
        %v1548 = vadd.f32 %v580, %v1547
        %v1549 = vpop.f32.mrb[0].mxu0
        %1550 = vmatprep.mubr.bf16.mxu0 %v956
        %1551 = vmatmul.mubr.bf16.gmra.mrb[0].mxu0 %v955
        %v1552 = vpop.f32.mrb[0].mxu0
        %v1553 = vadd.f32 %v580, %v1552
        %v1554 = vpop.f32.mrb[0].mxu0
        %v1555 = vpop.f32.mrb[0].mxu0
        %v1556 = vadd.f32 %v580, %v1555
        %v1557 = vpop.f32.mrb[0].mxu0
        %1558 = vmatprep.mubr.bf16.mxu0 %v963
        %1559 = vmatmul.mubr.bf16.gmra.mrb[0].mxu0 %v962
        %v1560 = vpop.f32.mrb[0].mxu0
        %v1561 = vadd.f32 %v580, %v1560
        %v1562 = vpop.f32.mrb[0].mxu0
        %v1563 = vpop.f32.mrb[0].mxu0
        %v1564 = vadd.f32 %v580, %v1563
        %v1565 = vpop.f32.mrb[0].mxu0
        %1566 = vmatprep.mubr.bf16.mxu0 %v970
        %1567 = vmatmul.mubr.bf16.gmra.mrb[0].mxu0 %v969
        %v1568 = vpop.f32.mrb[0].mxu0
        %v1569 = vadd.f32 %v580, %v1568
        %v1570 = vpop.f32.mrb[0].mxu0
        %v1571 = vpop.f32.mrb[0].mxu0
        %v1572 = vadd.f32 %v580, %v1571
        %v1573 = vpop.f32.mrb[0].mxu0
        %1574 = vmatprep.mubr.bf16.mxu0 %v977
        %1575 = vmatmul.mubr.bf16.gmra.mrb[0].mxu0 %v976
        %v1576 = vpop.f32.mrb[0].mxu0
        %v1577 = vadd.f32 %v580, %v1576
        %v1578 = vpop.f32.mrb[0].mxu0
        %v1579 = vpop.f32.mrb[0].mxu0
        %v1580 = vadd.f32 %v580, %v1579
        %v1581 = vpop.f32.mrb[0].mxu0
        %1582 = vmatprep.mubr.bf16.mxu0 %v984
        %1583 = vmatmul.mubr.bf16.gmra.mrb[0].mxu0 %v983
        %v1584 = vpop.f32.mrb[0].mxu0
        %v1585 = vadd.f32 %v580, %v1584
        %v1586 = vpop.f32.mrb[0].mxu0
        %v1587 = vpop.f32.mrb[0].mxu0
        %v1588 = vadd.f32 %v580, %v1587
        %v1589 = vpop.f32.mrb[0].mxu0
        %1590 = vmatprep.mubr.bf16.mxu0 %v991
        %1591 = vmatmul.mubr.bf16.gmra.mrb[0].mxu0 %v990
        %v1592 = vpop.f32.mrb[0].mxu0
        %v1593 = vadd.f32 %v580, %v1592
        %v1594 = vpop.f32.mrb[0].mxu0
        %v1595 = vpop.f32.mrb[0].mxu0
        %v1596 = vadd.f32 %v580, %v1595
        %v1597 = vpop.f32.mrb[0].mxu0
        %1598 = vmatprep.mubr.bf16.mxu0 %v998
        %1599 = vmatmul.mubr.bf16.gmra.mrb[0].mxu0 %v997
        %v1600 = vpop.f32.mrb[0].mxu0
        %v1601 = vadd.f32 %v580, %v1600
        %v1602 = vpop.f32.mrb[0].mxu0
        %v1603 = vpop.f32.mrb[0].mxu0
        %v1604 = vadd.f32 %v580, %v1603
        %v1605 = vpop.f32.mrb[0].mxu0
        %1606 = vmatprep.mubr.bf16.mxu0 %v1005
        %1607 = vmatmul.mubr.bf16.gmra.mrb[0].mxu0 %v1004
        %v1608 = vpop.f32.mrb[0].mxu0
        %v1609 = vadd.f32 %v580, %v1608
        %v1610 = vpop.f32.mrb[0].mxu0
        %v1611 = vpop.f32.mrb[0].mxu0
        %v1612 = vadd.f32 %v580, %v1611
        %v1613 = vpop.f32.mrb[0].mxu0
        %1614 = vmatprep.mubr.bf16.mxu0 %v1012
        %1615 = vmatmul.mubr.bf16.gmra.mrb[0].mxu0 %v1011
        %v1616 = vpop.f32.mrb[0].mxu0
        %v1617 = vadd.f32 %v580, %v1616
        %v1618 = vpop.f32.mrb[0].mxu0
        %v1619 = vpop.f32.mrb[0].mxu0
        %v1620 = vadd.f32 %v580, %v1619
        %v1621 = vpop.f32.mrb[0].mxu0
        %1622 = vmatprep.mubr.bf16.mxu0 %v1019
        %1623 = vmatmul.mubr.bf16.gmra.mrb[0].mxu0 %v1018
        %v1624 = vpop.f32.mrb[0].mxu0
        %v1625 = vadd.f32 %v580, %v1624
        %v1626 = vpop.f32.mrb[0].mxu0
        %v1627 = vpop.f32.mrb[0].mxu0
        %v1628 = vadd.f32 %v580, %v1627
        %v1629 = vpop.f32.mrb[0].mxu0
        %1630 = vmatprep.mubr.bf16.mxu0 %v1026
        %1631 = vmatmul.mubr.bf16.gmra.mrb[0].mxu0 %v1025
        %v1632 = vpop.f32.mrb[0].mxu0
        %v1633 = vadd.f32 %v580, %v1632
        %v1634 = vpop.f32.mrb[0].mxu0
        %v1635 = vpop.f32.mrb[0].mxu0
        %v1636 = vadd.f32 %v580, %v1635
        %v1637 = vpop.f32.mrb[0].mxu0
        %1638 = vmatprep.mubr.bf16.mxu0 %v1033
        %1639 = vmatmul.mubr.bf16.gmra.mrb[0].mxu0 %v1032
        %v1640 = vpop.f32.mrb[0].mxu0
        %v1641 = vadd.f32 %v580, %v1640
        %v1642 = vpop.f32.mrb[0].mxu0
        %v1643 = vpop.f32.mrb[0].mxu0
        %v1644 = vadd.f32 %v580, %v1643
        %v1645 = vpop.f32.mrb[0].mxu0
        %1646 = vmatprep.mubr.bf16.mxu0 %v1040
        %1647 = vmatmul.mubr.bf16.gmra.mrb[0].mxu0 %v1039
        %v1648 = vpop.f32.mrb[0].mxu0
        %v1649 = vadd.f32 %v580, %v1648
        %v1650 = vpop.f32.mrb[0].mxu0
        %v1651 = vpop.f32.mrb[0].mxu0
        %v1652 = vadd.f32 %v580, %v1651
        %v1653 = vpop.f32.mrb[0].mxu0
        %1654 = vdwg.mxu0
        %1655 = vmatprep.subr.bf16.mxu0 0
        %1656 = vmatpush1.bf16.msra.mxu0 %v1398
        %1657 = vmatprep.subr.bf16.mxu0 0
        %1658 = vmatpush1.bf16.msra.mxu0 %v1399
        %1659 = vmatprep.subr.bf16.mxu0 0
        %1660 = vmatpush1.bf16.msra.mxu0 %v1400
        %1661 = vmatprep.subr.bf16.mxu0 0
        %1662 = vmatpush1.bf16.msra.mxu0 %v1401
        %1663 = vmatprep.subr.bf16.mxu0 0
        %1664 = vmatpush1.bf16.msra.mxu0 %v1402
        %1665 = vmatprep.subr.bf16.mxu0 0
        %1666 = vmatpush1.bf16.msra.mxu0 %v1403
        %1667 = vmatprep.subr.bf16.mxu0 0
        %1668 = vmatpush1.bf16.msra.mxu0 %v1404
        %1669 = vmatprep.subr.bf16.mxu0 0
        %1670 = vmatpush1.bf16.msra.mxu0 %v1405
        %1671 = vmatprep.subr.bf16.mxu0 0
        %1672 = vmatpush1.bf16.msra.mxu0 %v1406
        %1673 = vmatprep.subr.bf16.mxu0 0
        %1674 = vmatpush1.bf16.msra.mxu0 %v1407
        %1675 = vmatprep.subr.bf16.mxu0 0
        %1676 = vmatpush1.bf16.msra.mxu0 %v1408
        %1677 = vmatprep.subr.bf16.mxu0 0
        %1678 = vmatpush1.bf16.msra.mxu0 %v1409
        %1679 = vmatprep.subr.bf16.mxu0 0
        %1680 = vmatpush1.bf16.msra.mxu0 %v1410
        %1681 = vmatprep.subr.bf16.mxu0 0
        %1682 = vmatpush1.bf16.msra.mxu0 %v1411
        %1683 = vmatprep.subr.bf16.mxu0 0
        %1684 = vmatpush1.bf16.msra.mxu0 %v1412
        %1685 = vmatprep.subr.bf16.mxu0 0
        %1686 = vmatpush1.bf16.msra.mxu0 %v1413
        %1687 = vmatprep.mubr.bf16.mxu0 %v937
        %1688 = vmatmul.mubr.bf16.gmra.mrb[0].mxu0 %v936
        %v1689 = vpop.f32.mrb[0].mxu0
        %v1690 = vadd.f32 %v1529, %v1689
        %v1691 = vpop.f32.mrb[0].mxu0
        %v1692 = vpop.f32.mrb[0].mxu0
        %v1693 = vadd.f32 %v1532, %v1692
        %v1694 = vpop.f32.mrb[0].mxu0
        %1695 = vmatprep.mubr.bf16.mxu0 %v944
        %1696 = vmatmul.mubr.bf16.gmra.mrb[0].mxu0 %v943
        %v1697 = vpop.f32.mrb[0].mxu0
        %v1698 = vadd.f32 %v1537, %v1697
        %v1699 = vpop.f32.mrb[0].mxu0
        %v1700 = vpop.f32.mrb[0].mxu0
        %v1701 = vadd.f32 %v1540, %v1700
        %v1702 = vpop.f32.mrb[0].mxu0
        %1703 = vmatprep.mubr.bf16.mxu0 %v951
        %1704 = vmatmul.mubr.bf16.gmra.mrb[0].mxu0 %v950
        %v1705 = vpop.f32.mrb[0].mxu0
        %v1706 = vadd.f32 %v1545, %v1705
        %v1707 = vpop.f32.mrb[0].mxu0
        %v1708 = vpop.f32.mrb[0].mxu0
        %v1709 = vadd.f32 %v1548, %v1708
        %v1710 = vpop.f32.mrb[0].mxu0
        %1711 = vmatprep.mubr.bf16.mxu0 %v958
        %1712 = vmatmul.mubr.bf16.gmra.mrb[0].mxu0 %v957
        %v1713 = vpop.f32.mrb[0].mxu0
        %v1714 = vadd.f32 %v1553, %v1713
        %v1715 = vpop.f32.mrb[0].mxu0
        %v1716 = vpop.f32.mrb[0].mxu0
        %v1717 = vadd.f32 %v1556, %v1716
        %v1718 = vpop.f32.mrb[0].mxu0
        %1719 = vmatprep.mubr.bf16.mxu0 %v965
        %1720 = vmatmul.mubr.bf16.gmra.mrb[0].mxu0 %v964
        %v1721 = vpop.f32.mrb[0].mxu0
        %v1722 = vadd.f32 %v1561, %v1721
        %v1723 = vpop.f32.mrb[0].mxu0
        %v1724 = vpop.f32.mrb[0].mxu0
        %v1725 = vadd.f32 %v1564, %v1724
        %v1726 = vpop.f32.mrb[0].mxu0
        %1727 = vmatprep.mubr.bf16.mxu0 %v972
        %1728 = vmatmul.mubr.bf16.gmra.mrb[0].mxu0 %v971
        %v1729 = vpop.f32.mrb[0].mxu0
        %v1730 = vadd.f32 %v1569, %v1729
        %v1731 = vpop.f32.mrb[0].mxu0
        %v1732 = vpop.f32.mrb[0].mxu0
        %v1733 = vadd.f32 %v1572, %v1732
        %v1734 = vpop.f32.mrb[0].mxu0
        %1735 = vmatprep.mubr.bf16.mxu0 %v979
        %1736 = vmatmul.mubr.bf16.gmra.mrb[0].mxu0 %v978
        %v1737 = vpop.f32.mrb[0].mxu0
        %v1738 = vadd.f32 %v1577, %v1737
        %v1739 = vpop.f32.mrb[0].mxu0
        %v1740 = vpop.f32.mrb[0].mxu0
        %v1741 = vadd.f32 %v1580, %v1740
        %v1742 = vpop.f32.mrb[0].mxu0
        %1743 = vmatprep.mubr.bf16.mxu0 %v986
        %1744 = vmatmul.mubr.bf16.gmra.mrb[0].mxu0 %v985
        %v1745 = vpop.f32.mrb[0].mxu0
        %v1746 = vadd.f32 %v1585, %v1745
        %v1747 = vpop.f32.mrb[0].mxu0
        %v1748 = vpop.f32.mrb[0].mxu0
        %v1749 = vadd.f32 %v1588, %v1748
        %v1750 = vpop.f32.mrb[0].mxu0
        %1751 = vmatprep.mubr.bf16.mxu0 %v993
        %1752 = vmatmul.mubr.bf16.gmra.mrb[0].mxu0 %v992
        %v1753 = vpop.f32.mrb[0].mxu0
        %v1754 = vadd.f32 %v1593, %v1753
        %v1755 = vpop.f32.mrb[0].mxu0
        %v1756 = vpop.f32.mrb[0].mxu0
        %v1757 = vadd.f32 %v1596, %v1756
        %v1758 = vpop.f32.mrb[0].mxu0
        %1759 = vmatprep.mubr.bf16.mxu0 %v1000
        %1760 = vmatmul.mubr.bf16.gmra.mrb[0].mxu0 %v999
        %v1761 = vpop.f32.mrb[0].mxu0
        %v1762 = vadd.f32 %v1601, %v1761
        %v1763 = vpop.f32.mrb[0].mxu0
        %v1764 = vpop.f32.mrb[0].mxu0
        %v1765 = vadd.f32 %v1604, %v1764
        %v1766 = vpop.f32.mrb[0].mxu0
        %1767 = vmatprep.mubr.bf16.mxu0 %v1007
        %1768 = vmatmul.mubr.bf16.gmra.mrb[0].mxu0 %v1006
        %v1769 = vpop.f32.mrb[0].mxu0
        %v1770 = vadd.f32 %v1609, %v1769
        %v1771 = vpop.f32.mrb[0].mxu0
        %v1772 = vpop.f32.mrb[0].mxu0
        %v1773 = vadd.f32 %v1612, %v1772
        %v1774 = vpop.f32.mrb[0].mxu0
        %1775 = vmatprep.mubr.bf16.mxu0 %v1014
        %1776 = vmatmul.mubr.bf16.gmra.mrb[0].mxu0 %v1013
        %v1777 = vpop.f32.mrb[0].mxu0
        %v1778 = vadd.f32 %v1617, %v1777
        %v1779 = vpop.f32.mrb[0].mxu0
        %v1780 = vpop.f32.mrb[0].mxu0
        %v1781 = vadd.f32 %v1620, %v1780
        %v1782 = vpop.f32.mrb[0].mxu0
        %1783 = vmatprep.mubr.bf16.mxu0 %v1021
        %1784 = vmatmul.mubr.bf16.gmra.mrb[0].mxu0 %v1020
        %v1785 = vpop.f32.mrb[0].mxu0
        %v1786 = vadd.f32 %v1625, %v1785
        %v1787 = vpop.f32.mrb[0].mxu0
        %v1788 = vpop.f32.mrb[0].mxu0
        %v1789 = vadd.f32 %v1628, %v1788
        %v1790 = vpop.f32.mrb[0].mxu0
        %1791 = vmatprep.mubr.bf16.mxu0 %v1028
        %1792 = vmatmul.mubr.bf16.gmra.mrb[0].mxu0 %v1027
        %v1793 = vpop.f32.mrb[0].mxu0
        %v1794 = vadd.f32 %v1633, %v1793
        %v1795 = vpop.f32.mrb[0].mxu0
        %v1796 = vpop.f32.mrb[0].mxu0
        %v1797 = vadd.f32 %v1636, %v1796
        %v1798 = vpop.f32.mrb[0].mxu0
        %1799 = vmatprep.mubr.bf16.mxu0 %v1035
        %1800 = vmatmul.mubr.bf16.gmra.mrb[0].mxu0 %v1034
        %v1801 = vpop.f32.mrb[0].mxu0
        %v1802 = vadd.f32 %v1641, %v1801
        %v1803 = vpop.f32.mrb[0].mxu0
        %v1804 = vpop.f32.mrb[0].mxu0
        %v1805 = vadd.f32 %v1644, %v1804
        %v1806 = vpop.f32.mrb[0].mxu0
        %1807 = vmatprep.mubr.bf16.mxu0 %v1042
        %1808 = vmatmul.mubr.bf16.gmra.mrb[0].mxu0 %v1041
        %v1809 = vpop.f32.mrb[0].mxu0
        %v1810 = vadd.f32 %v1649, %v1809
        %v1811 = vpop.f32.mrb[0].mxu0
        %v1812 = vpop.f32.mrb[0].mxu0
        %v1813 = vadd.f32 %v1652, %v1812
        %v1814 = vpop.f32.mrb[0].mxu0
        %1815 = vdwg.mxu0
        %1816 = vmatprep.subr.bf16.mxu0 0
        %1817 = vmatpush1.bf16.msra.mxu0 %v1414
        %1818 = vmatprep.subr.bf16.mxu0 0
        %1819 = vmatpush1.bf16.msra.mxu0 %v1415
        %1820 = vmatprep.subr.bf16.mxu0 0
        %1821 = vmatpush1.bf16.msra.mxu0 %v1416
        %1822 = vmatprep.subr.bf16.mxu0 0
        %1823 = vmatpush1.bf16.msra.mxu0 %v1417
        %1824 = vmatprep.subr.bf16.mxu0 0
        %1825 = vmatpush1.bf16.msra.mxu0 %v1418
        %1826 = vmatprep.subr.bf16.mxu0 0
        %1827 = vmatpush1.bf16.msra.mxu0 %v1419
        %1828 = vmatprep.subr.bf16.mxu0 0
        %1829 = vmatpush1.bf16.msra.mxu0 %v1420
        %1830 = vmatprep.subr.bf16.mxu0 0
        %1831 = vmatpush1.bf16.msra.mxu0 %v1421
        %1832 = vmatprep.subr.bf16.mxu0 0
        %1833 = vmatpush1.bf16.msra.mxu0 %v1422
        %1834 = vmatprep.subr.bf16.mxu0 0
        %1835 = vmatpush1.bf16.msra.mxu0 %v1423
        %1836 = vmatprep.subr.bf16.mxu0 0
        %1837 = vmatpush1.bf16.msra.mxu0 %v1424
        %1838 = vmatprep.subr.bf16.mxu0 0
        %1839 = vmatpush1.bf16.msra.mxu0 %v1425
        %1840 = vmatprep.subr.bf16.mxu0 0
        %1841 = vmatpush1.bf16.msra.mxu0 %v1426
        %1842 = vmatprep.subr.bf16.mxu0 0
        %1843 = vmatpush1.bf16.msra.mxu0 %v1427
        %1844 = vmatprep.subr.bf16.mxu0 0
        %1845 = vmatpush1.bf16.msra.mxu0 %v1428
        %1846 = vmatprep.subr.bf16.mxu0 0
        %1847 = vmatpush1.bf16.msra.mxu0 %v1429
        %1848 = vmatprep.mubr.bf16.mxu0 %v939
        %1849 = vmatmul.mubr.bf16.gmra.mrb[0].mxu0 %v938
        %v1850 = vpop.f32.mrb[0].mxu0
        %v1851 = vadd.f32 %v1690, %v1850
        %v1852 = vpop.f32.mrb[0].mxu0
        %v1853 = vpop.f32.mrb[0].mxu0
        %v1854 = vadd.f32 %v1693, %v1853
        %v1855 = vpop.f32.mrb[0].mxu0
        %1856 = vmatprep.mubr.bf16.mxu0 %v946
        %1857 = vmatmul.mubr.bf16.gmra.mrb[0].mxu0 %v945
        %v1858 = vpop.f32.mrb[0].mxu0
        %v1859 = vadd.f32 %v1698, %v1858
        %v1860 = vpop.f32.mrb[0].mxu0
        %v1861 = vpop.f32.mrb[0].mxu0
        %v1862 = vadd.f32 %v1701, %v1861
        %v1863 = vpop.f32.mrb[0].mxu0
        %1864 = vmatprep.mubr.bf16.mxu0 %v953
        %1865 = vmatmul.mubr.bf16.gmra.mrb[0].mxu0 %v952
        %v1866 = vpop.f32.mrb[0].mxu0
        %v1867 = vadd.f32 %v1706, %v1866
        %v1868 = vpop.f32.mrb[0].mxu0
        %v1869 = vpop.f32.mrb[0].mxu0
        %v1870 = vadd.f32 %v1709, %v1869
        %v1871 = vpop.f32.mrb[0].mxu0
        %1872 = vmatprep.mubr.bf16.mxu0 %v960
        %1873 = vmatmul.mubr.bf16.gmra.mrb[0].mxu0 %v959
        %v1874 = vpop.f32.mrb[0].mxu0
        %v1875 = vadd.f32 %v1714, %v1874
        %v1876 = vpop.f32.mrb[0].mxu0
        %v1877 = vpop.f32.mrb[0].mxu0
        %v1878 = vadd.f32 %v1717, %v1877
        %v1879 = vpop.f32.mrb[0].mxu0
        %1880 = vmatprep.mubr.bf16.mxu0 %v967
        %1881 = vmatmul.mubr.bf16.gmra.mrb[0].mxu0 %v966
        %v1882 = vpop.f32.mrb[0].mxu0
        %v1883 = vadd.f32 %v1722, %v1882
        %v1884 = vpop.f32.mrb[0].mxu0
        %v1885 = vpop.f32.mrb[0].mxu0
        %v1886 = vadd.f32 %v1725, %v1885
        %v1887 = vpop.f32.mrb[0].mxu0
        %1888 = vmatprep.mubr.bf16.mxu0 %v974
        %1889 = vmatmul.mubr.bf16.gmra.mrb[0].mxu0 %v973
        %v1890 = vpop.f32.mrb[0].mxu0
        %v1891 = vadd.f32 %v1730, %v1890
        %v1892 = vpop.f32.mrb[0].mxu0
        %v1893 = vpop.f32.mrb[0].mxu0
        %v1894 = vadd.f32 %v1733, %v1893
        %v1895 = vpop.f32.mrb[0].mxu0
        %1896 = vmatprep.mubr.bf16.mxu0 %v981
        %1897 = vmatmul.mubr.bf16.gmra.mrb[0].mxu0 %v980
        %v1898 = vpop.f32.mrb[0].mxu0
        %v1899 = vadd.f32 %v1738, %v1898
        %v1900 = vpop.f32.mrb[0].mxu0
        %v1901 = vpop.f32.mrb[0].mxu0
        %v1902 = vadd.f32 %v1741, %v1901
        %v1903 = vpop.f32.mrb[0].mxu0
        %1904 = vmatprep.mubr.bf16.mxu0 %v988
        %1905 = vmatmul.mubr.bf16.gmra.mrb[0].mxu0 %v987
        %v1906 = vpop.f32.mrb[0].mxu0
        %v1907 = vadd.f32 %v1746, %v1906
        %v1908 = vpop.f32.mrb[0].mxu0
        %v1909 = vpop.f32.mrb[0].mxu0
        %v1910 = vadd.f32 %v1749, %v1909
        %v1911 = vpop.f32.mrb[0].mxu0
        %1912 = vmatprep.mubr.bf16.mxu0 %v995
        %1913 = vmatmul.mubr.bf16.gmra.mrb[0].mxu0 %v994
        %v1914 = vpop.f32.mrb[0].mxu0
        %v1915 = vadd.f32 %v1754, %v1914
        %v1916 = vpop.f32.mrb[0].mxu0
        %v1917 = vpop.f32.mrb[0].mxu0
        %v1918 = vadd.f32 %v1757, %v1917
        %v1919 = vpop.f32.mrb[0].mxu0
        %1920 = vmatprep.mubr.bf16.mxu0 %v1002
        %1921 = vmatmul.mubr.bf16.gmra.mrb[0].mxu0 %v1001
        %v1922 = vpop.f32.mrb[0].mxu0
        %v1923 = vadd.f32 %v1762, %v1922
        %v1924 = vpop.f32.mrb[0].mxu0
        %v1925 = vpop.f32.mrb[0].mxu0
        %v1926 = vadd.f32 %v1765, %v1925
        %v1927 = vpop.f32.mrb[0].mxu0
        %1928 = vmatprep.mubr.bf16.mxu0 %v1009
        %1929 = vmatmul.mubr.bf16.gmra.mrb[0].mxu0 %v1008
        %v1930 = vpop.f32.mrb[0].mxu0
        %v1931 = vadd.f32 %v1770, %v1930
        %v1932 = vpop.f32.mrb[0].mxu0
        %v1933 = vpop.f32.mrb[0].mxu0
        %v1934 = vadd.f32 %v1773, %v1933
        %v1935 = vpop.f32.mrb[0].mxu0
        %1936 = vmatprep.mubr.bf16.mxu0 %v1016
        %1937 = vmatmul.mubr.bf16.gmra.mrb[0].mxu0 %v1015
        %v1938 = vpop.f32.mrb[0].mxu0
        %v1939 = vadd.f32 %v1778, %v1938
        %v1940 = vpop.f32.mrb[0].mxu0
        %v1941 = vpop.f32.mrb[0].mxu0
        %v1942 = vadd.f32 %v1781, %v1941
        %v1943 = vpop.f32.mrb[0].mxu0
        %1944 = vmatprep.mubr.bf16.mxu0 %v1023
        %1945 = vmatmul.mubr.bf16.gmra.mrb[0].mxu0 %v1022
        %v1946 = vpop.f32.mrb[0].mxu0
        %v1947 = vadd.f32 %v1786, %v1946
        %v1948 = vpop.f32.mrb[0].mxu0
        %v1949 = vpop.f32.mrb[0].mxu0
        %v1950 = vadd.f32 %v1789, %v1949
        %v1951 = vpop.f32.mrb[0].mxu0
        %1952 = vmatprep.mubr.bf16.mxu0 %v1030
        %1953 = vmatmul.mubr.bf16.gmra.mrb[0].mxu0 %v1029
        %v1954 = vpop.f32.mrb[0].mxu0
        %v1955 = vadd.f32 %v1794, %v1954
        %v1956 = vpop.f32.mrb[0].mxu0
        %v1957 = vpop.f32.mrb[0].mxu0
        %v1958 = vadd.f32 %v1797, %v1957
        %v1959 = vpop.f32.mrb[0].mxu0
        %1960 = vmatprep.mubr.bf16.mxu0 %v1037
        %1961 = vmatmul.mubr.bf16.gmra.mrb[0].mxu0 %v1036
        %v1962 = vpop.f32.mrb[0].mxu0
        %v1963 = vadd.f32 %v1802, %v1962
        %v1964 = vpop.f32.mrb[0].mxu0
        %v1965 = vpop.f32.mrb[0].mxu0
        %v1966 = vadd.f32 %v1805, %v1965
        %v1967 = vpop.f32.mrb[0].mxu0
        %1968 = vmatprep.mubr.bf16.mxu0 %v1044
        %1969 = vmatmul.mubr.bf16.gmra.mrb[0].mxu0 %v1043
        %v1970 = vpop.f32.mrb[0].mxu0
        %v1971 = vadd.f32 %v1810, %v1970
        %v1972 = vpop.f32.mrb[0].mxu0
        %v1973 = vpop.f32.mrb[0].mxu0
        %v1974 = vadd.f32 %v1813, %v1973
        %v1975 = vpop.f32.mrb[0].mxu0
        %1976 = vdwg.mxu0
        %1977 = vmatprep.subr.bf16.mxu0 0
        %1978 = vmatpush1.bf16.msra.mxu0 %v1430
        %1979 = vmatprep.subr.bf16.mxu0 0
        %1980 = vmatpush1.bf16.msra.mxu0 %v1431
        %1981 = vmatprep.subr.bf16.mxu0 0
        %1982 = vmatpush1.bf16.msra.mxu0 %v1432
        %1983 = vmatprep.subr.bf16.mxu0 0
        %1984 = vmatpush1.bf16.msra.mxu0 %v1433
        %1985 = vmatprep.subr.bf16.mxu0 0
        %1986 = vmatpush1.bf16.msra.mxu0 %v1434
        %1987 = vmatprep.subr.bf16.mxu0 0
        %1988 = vmatpush1.bf16.msra.mxu0 %v1435
        %1989 = vmatprep.subr.bf16.mxu0 0
        %1990 = vmatpush1.bf16.msra.mxu0 %v1436
        %1991 = vmatprep.subr.bf16.mxu0 0
        %1992 = vmatpush1.bf16.msra.mxu0 %v1437
        %1993 = vmatprep.subr.bf16.mxu0 0
        %1994 = vmatpush1.bf16.msra.mxu0 0
        %1995 = vmatprep.subr.bf16.mxu0 0
        %1996 = vmatpush1.bf16.msra.mxu0 0
        %1997 = vmatprep.subr.bf16.mxu0 0
        %1998 = vmatpush1.bf16.msra.mxu0 0
        %1999 = vmatprep.subr.bf16.mxu0 0
        %2000 = vmatpush1.bf16.msra.mxu0 0
        %2001 = vmatprep.subr.bf16.mxu0 0
        %2002 = vmatpush1.bf16.msra.mxu0 0
        %2003 = vmatprep.subr.bf16.mxu0 0
        %2004 = vmatpush1.bf16.msra.mxu0 0
        %2005 = vmatprep.subr.bf16.mxu0 0
        %2006 = vmatpush1.bf16.msra.mxu0 0
        %2007 = vmatprep.subr.bf16.mxu0 0
        %2008 = vmatpush1.bf16.msra.mxu0 0
        %2009 = vmatprep.mubr.bf16.mxu0 0
        %2010 = vmatmul.mubr.bf16.gmra.mrb[0].mxu0 %v940
        %v2011 = vpop.f32.mrb[0].mxu0
        %v2012 = vadd.f32 %v1851, %v2011
        %v2013 = vpop.f32.mrb[0].mxu0
        %v2014 = vpop.f32.mrb[0].mxu0
        %v2015 = vadd.f32 %v1854, %v2014
        %v2016 = vpop.f32.mrb[0].mxu0
        %2017 = vmatprep.mubr.bf16.mxu0 0
        %2018 = vmatmul.mubr.bf16.gmra.mrb[0].mxu0 %v947
        %v2019 = vpop.f32.mrb[0].mxu0
        %v2020 = vadd.f32 %v1859, %v2019
        %v2021 = vpop.f32.mrb[0].mxu0
        %v2022 = vpop.f32.mrb[0].mxu0
        %v2023 = vadd.f32 %v1862, %v2022
        %v2024 = vpop.f32.mrb[0].mxu0
        %2025 = vmatprep.mubr.bf16.mxu0 0
        %2026 = vmatmul.mubr.bf16.gmra.mrb[0].mxu0 %v954
        %v2027 = vpop.f32.mrb[0].mxu0
        %v2028 = vadd.f32 %v1867, %v2027
        %v2029 = vpop.f32.mrb[0].mxu0
        %v2030 = vpop.f32.mrb[0].mxu0
        %v2031 = vadd.f32 %v1870, %v2030
        %v2032 = vpop.f32.mrb[0].mxu0
        %2033 = vmatprep.mubr.bf16.mxu0 0
        %2034 = vmatmul.mubr.bf16.gmra.mrb[0].mxu0 %v961
        %v2035 = vpop.f32.mrb[0].mxu0
        %v2036 = vadd.f32 %v1875, %v2035
        %v2037 = vpop.f32.mrb[0].mxu0
        %v2038 = vpop.f32.mrb[0].mxu0
        %v2039 = vadd.f32 %v1878, %v2038
        %v2040 = vpop.f32.mrb[0].mxu0
        %2041 = vmatprep.mubr.bf16.mxu0 0
        %2042 = vmatmul.mubr.bf16.gmra.mrb[0].mxu0 %v968
        %v2043 = vpop.f32.mrb[0].mxu0
        %v2044 = vadd.f32 %v1883, %v2043
        %v2045 = vpop.f32.mrb[0].mxu0
        %v2046 = vpop.f32.mrb[0].mxu0
        %v2047 = vadd.f32 %v1886, %v2046
        %v2048 = vpop.f32.mrb[0].mxu0
        %2049 = vmatprep.mubr.bf16.mxu0 0
        %2050 = vmatmul.mubr.bf16.gmra.mrb[0].mxu0 %v975
        %v2051 = vpop.f32.mrb[0].mxu0
        %v2052 = vadd.f32 %v1891, %v2051
        %v2053 = vpop.f32.mrb[0].mxu0
        %v2054 = vpop.f32.mrb[0].mxu0
        %v2055 = vadd.f32 %v1894, %v2054
        %v2056 = vpop.f32.mrb[0].mxu0
        %2057 = vmatprep.mubr.bf16.mxu0 0
        %2058 = vmatmul.mubr.bf16.gmra.mrb[0].mxu0 %v982
        %v2059 = vpop.f32.mrb[0].mxu0
        %v2060 = vadd.f32 %v1899, %v2059
        %v2061 = vpop.f32.mrb[0].mxu0
        %v2062 = vpop.f32.mrb[0].mxu0
        %v2063 = vadd.f32 %v1902, %v2062
        %v2064 = vpop.f32.mrb[0].mxu0
        %2065 = vmatprep.mubr.bf16.mxu0 0
        %2066 = vmatmul.mubr.bf16.gmra.mrb[0].mxu0 %v989
        %v2067 = vpop.f32.mrb[0].mxu0
        %v2068 = vadd.f32 %v1907, %v2067
        %v2069 = vpop.f32.mrb[0].mxu0
        %v2070 = vpop.f32.mrb[0].mxu0
        %v2071 = vadd.f32 %v1910, %v2070
        %v2072 = vpop.f32.mrb[0].mxu0
        %2073 = vmatprep.mubr.bf16.mxu0 0
        %2074 = vmatmul.mubr.bf16.gmra.mrb[0].mxu0 %v996
        %v2075 = vpop.f32.mrb[0].mxu0
        %v2076 = vadd.f32 %v1915, %v2075
        %v2077 = vpop.f32.mrb[0].mxu0
        %v2078 = vpop.f32.mrb[0].mxu0
        %v2079 = vadd.f32 %v1918, %v2078
        %v2080 = vpop.f32.mrb[0].mxu0
        %2081 = vmatprep.mubr.bf16.mxu0 0
        %2082 = vmatmul.mubr.bf16.gmra.mrb[0].mxu0 %v1003
        %v2083 = vpop.f32.mrb[0].mxu0
        %v2084 = vadd.f32 %v1923, %v2083
        %v2085 = vpop.f32.mrb[0].mxu0
        %v2086 = vpop.f32.mrb[0].mxu0
        %v2087 = vadd.f32 %v1926, %v2086
        %v2088 = vpop.f32.mrb[0].mxu0
        %2089 = vmatprep.mubr.bf16.mxu0 0
        %2090 = vmatmul.mubr.bf16.gmra.mrb[0].mxu0 %v1010
        %v2091 = vpop.f32.mrb[0].mxu0
        %v2092 = vadd.f32 %v1931, %v2091
        %v2093 = vpop.f32.mrb[0].mxu0
        %v2094 = vpop.f32.mrb[0].mxu0
        %v2095 = vadd.f32 %v1934, %v2094
        %v2096 = vpop.f32.mrb[0].mxu0
        %2097 = vmatprep.mubr.bf16.mxu0 0
        %2098 = vmatmul.mubr.bf16.gmra.mrb[0].mxu0 %v1017
        %v2099 = vpop.f32.mrb[0].mxu0
        %v2100 = vadd.f32 %v1939, %v2099
        %v2101 = vpop.f32.mrb[0].mxu0
        %v2102 = vpop.f32.mrb[0].mxu0
        %v2103 = vadd.f32 %v1942, %v2102
        %v2104 = vpop.f32.mrb[0].mxu0
        %2105 = vmatprep.mubr.bf16.mxu0 0
        %2106 = vmatmul.mubr.bf16.gmra.mrb[0].mxu0 %v1024
        %v2107 = vpop.f32.mrb[0].mxu0
        %v2108 = vadd.f32 %v1947, %v2107
        %v2109 = vpop.f32.mrb[0].mxu0
        %v2110 = vpop.f32.mrb[0].mxu0
        %v2111 = vadd.f32 %v1950, %v2110
        %v2112 = vpop.f32.mrb[0].mxu0
        %2113 = vmatprep.mubr.bf16.mxu0 0
        %2114 = vmatmul.mubr.bf16.gmra.mrb[0].mxu0 %v1031
        %v2115 = vpop.f32.mrb[0].mxu0
        %v2116 = vadd.f32 %v1955, %v2115
        %v2117 = vpop.f32.mrb[0].mxu0
        %v2118 = vpop.f32.mrb[0].mxu0
        %v2119 = vadd.f32 %v1958, %v2118
        %v2120 = vpop.f32.mrb[0].mxu0
        %2121 = vmatprep.mubr.bf16.mxu0 0
        %2122 = vmatmul.mubr.bf16.gmra.mrb[0].mxu0 %v1038
        %v2123 = vpop.f32.mrb[0].mxu0
        %v2124 = vadd.f32 %v1963, %v2123
        %v2125 = vpop.f32.mrb[0].mxu0
        %v2126 = vpop.f32.mrb[0].mxu0
        %v2127 = vadd.f32 %v1966, %v2126
        %v2128 = vpop.f32.mrb[0].mxu0
        %2129 = vmatprep.mubr.bf16.mxu0 0
        %2130 = vmatmul.mubr.bf16.gmra.mrb[0].mxu0 %v1045
        %v2131 = vpop.f32.mrb[0].mxu0
        %v2132 = vadd.f32 %v1971, %v2131
        %v2133 = vpop.f32.mrb[0].mxu0
        %v2134 = vpop.f32.mrb[0].mxu0
        %v2135 = vadd.f32 %v1974, %v2134
        %v2136 = vpop.f32.mrb[0].mxu0
        %2137 = vdwg.mxu0
        %2138 = vst [vmem:[%s323] sm:$0xff] %v2012
        %2139 = vst [vmem:[%s323 + $0x10] sm:$0xff] %v2015
        %2140 = vst [vmem:[%s323 + $0x20] sm:$0xff] %v2020
        %2141 = vst [vmem:[%s323 + $0x30] sm:$0xff] %v2023
        %2142 = vst [vmem:[%s323 + $0x40] sm:$0xff] %v2028
        %2143 = vst [vmem:[%s323 + $0x50] sm:$0xff] %v2031
        %2144 = vst [vmem:[%s323 + $0x60] sm:$0xff] %v2036
        %2145 = vst [vmem:[%s323 + $0x70] sm:$0xff] %v2039
        %2146 = vst [vmem:[%s323 + $0x80] sm:$0xff] %v2044
        %2147 = vst [vmem:[%s323 + $0x90] sm:$0xff] %v2047
        %2148 = vst [vmem:[%s323 + $0xa0] sm:$0xff] %v2052
        %2149 = vst [vmem:[%s323 + $0xb0] sm:$0xff] %v2055
        %2150 = vst [vmem:[%s323 + $0xc0] sm:$0xff] %v2060
        %2151 = vst [vmem:[%s323 + $0xd0] sm:$0xff] %v2063
        %2152 = vst [vmem:[%s323 + $0xe0] sm:$0xff] %v2068
        %2153 = vst [vmem:[%s323 + $0xf0] sm:$0xff] %v2071
        %2154 = vst [vmem:[%s323 + $0x100] sm:$0xff] %v2076
        %2155 = vst [vmem:[%s323 + $0x110] sm:$0xff] %v2079
        %2156 = vst [vmem:[%s323 + $0x120] sm:$0xff] %v2084
        %2157 = vst [vmem:[%s323 + $0x130] sm:$0xff] %v2087
        %2158 = vst [vmem:[%s323 + $0x140] sm:$0xff] %v2092
        %2159 = vst [vmem:[%s323 + $0x150] sm:$0xff] %v2095
        %2160 = vst [vmem:[%s323 + $0x160] sm:$0xff] %v2100
        %2161 = vst [vmem:[%s323 + $0x170] sm:$0xff] %v2103
        %2162 = vst [vmem:[%s323 + $0x180] sm:$0xff] %v2108
        %2163 = vst [vmem:[%s323 + $0x190] sm:$0xff] %v2111
        %2164 = vst [vmem:[%s323 + $0x1a0] sm:$0xff] %v2116
        %2165 = vst [vmem:[%s323 + $0x1b0] sm:$0xff] %v2119
        %2166 = vst [vmem:[%s323 + $0x1c0] sm:$0xff] %v2124
        %2167 = vst [vmem:[%s323 + $0x1d0] sm:$0xff] %v2127
        %2168 = vst [vmem:[%s323 + $0x1e0] sm:$0xff] %v2132
        %2169 = vst [vmem:[%s323 + $0x1f0] sm:$0xff] %v2135
        %v2170 = vpack.c.bf16 %v2015, %v2012
        %v2171 = vpack.c.bf16 %v2023, %v2020
        %v2172 = vpack.c.bf16 %v2031, %v2028
        %v2173 = vpack.c.bf16 %v2039, %v2036
        %v2174 = vpack.c.bf16 %v2047, %v2044
        %v2175 = vpack.c.bf16 %v2055, %v2052
        %v2176 = vpack.c.bf16 %v2063, %v2060
        %v2177 = vpack.c.bf16 %v2071, %v2068
        %v2178 = vpack.c.bf16 %v2079, %v2076
        %v2179 = vpack.c.bf16 %v2087, %v2084
        %v2180 = vpack.c.bf16 %v2095, %v2092
        %v2181 = vpack.c.bf16 %v2103, %v2100
        %v2182 = vpack.c.bf16 %v2111, %v2108
        %v2183 = vpack.c.bf16 %v2119, %v2116
        %v2184 = vpack.c.bf16 %v2127, %v2124
        %v2185 = vpack.c.bf16 %v2135, %v2132
        %v2186 = vld [vmem:[#allocation7] sm:$0xf]
        %v2187 = vld [vmem:[#allocation7 + $0x4] sm:$0xf]
        %v2188 = vld [vmem:[#allocation7 + $0x8] sm:$0xf]
        %v2189 = vld [vmem:[#allocation7 + $0xc] sm:$0xf]
        %v2190 = vld [vmem:[#allocation7 + $0x10] sm:$0xf]
        %v2191 = vld [vmem:[#allocation7 + $0x14] sm:$0xf]
        %v2192 = vld [vmem:[#allocation7 + $0x18] sm:$0xf]
        %v2193 = vld [vmem:[#allocation7 + $0x1c] sm:$0xf]
        %v2194 = vld [vmem:[#allocation7 + $0x20] sm:$0xf]
        %v2195 = vld [vmem:[#allocation7 + $0x24] sm:$0xf]
        %v2196 = vld [vmem:[#allocation7 + $0x28] sm:$0xf]
        %v2197 = vld [vmem:[#allocation7 + $0x2c] sm:$0xf]
        %v2198 = vld [vmem:[#allocation7 + $0x30] sm:$0xf]
        %v2199 = vld [vmem:[#allocation7 + $0x34] sm:$0xf]
        %v2200 = vld [vmem:[#allocation7 + $0x38] sm:$0xf]
        %v2201 = vld [vmem:[#allocation7 + $0x3c] sm:$0xf]
        %v2202 = vld [vmem:[%s4] sm:$0x1]
        %v2204 = vlaneseq
        %v2205 = vshrl.u32 %v2204, 7
        %v2206 = vsub.s32 0, %v2205
        %v2207 = vrot.slane %v2202, %v2206
        %v2225 = vunpack.c.l.b16 %v2186
        %v2226 = vunpack.c.l.b16 %v2187
        %v2227 = vunpack.c.l.b16 %v2188
        %v2228 = vunpack.c.l.b16 %v2189
        %v2229 = vunpack.c.l.b16 %v2190
        %v2230 = vunpack.c.l.b16 %v2191
        %v2231 = vunpack.c.l.b16 %v2192
        %v2232 = vunpack.c.l.b16 %v2193
        %v2233 = vunpack.c.l.b16 %v2194
        %v2234 = vunpack.c.l.b16 %v2195
        %v2235 = vunpack.c.l.b16 %v2196
        %v2236 = vunpack.c.l.b16 %v2197
        %v2237 = vunpack.c.l.b16 %v2198
        %v2238 = vunpack.c.l.b16 %v2199
        %v2239 = vunpack.c.l.b16 %v2200
        %v2240 = vunpack.c.l.b16 %v2201
        %v2241 = vpack.c.b16 %v2226, %v2225
        %v2242 = vpack.c.b16 %v2228, %v2227
        %v2243 = vpack.c.b16 %v2230, %v2229
        %v2244 = vpack.c.b16 %v2232, %v2231
        %v2245 = vpack.c.b16 %v2234, %v2233
        %v2246 = vpack.c.b16 %v2236, %v2235
        %v2247 = vpack.c.b16 %v2238, %v2237
        %v2248 = vpack.c.b16 %v2240, %v2239
        %2257 = vmatprep.subr.bf16.mxu0 0
        %2258 = vmatpush1.bf16.msra.mxu0 %v2241
        %2259 = vmatprep.subr.bf16.mxu0 0
        %2260 = vmatpush1.bf16.msra.mxu0 %v2242
        %2261 = vmatprep.subr.bf16.mxu0 0
        %2262 = vmatpush1.bf16.msra.mxu0 %v2243
        %2263 = vmatprep.subr.bf16.mxu0 0
        %2264 = vmatpush1.bf16.msra.mxu0 %v2244
        %2265 = vmatprep.subr.bf16.mxu0 0
        %2266 = vmatpush1.bf16.msra.mxu0 %v2245
        %2267 = vmatprep.subr.bf16.mxu0 0
        %2268 = vmatpush1.bf16.msra.mxu0 %v2246
        %2269 = vmatprep.subr.bf16.mxu0 0
        %2270 = vmatpush1.bf16.msra.mxu0 %v2247
        %2271 = vmatprep.subr.bf16.mxu0 0
        %2272 = vmatpush1.bf16.msra.mxu0 %v2248
        %2273 = vmatprep.subr.bf16.mxu0 0
        %2274 = vmatpush1.bf16.msra.mxu0 0
        %2275 = vmatprep.subr.bf16.mxu0 0
        %2276 = vmatpush1.bf16.msra.mxu0 0
        %2277 = vmatprep.subr.bf16.mxu0 0
        %2278 = vmatpush1.bf16.msra.mxu0 0
        %2279 = vmatprep.subr.bf16.mxu0 0
        %2280 = vmatpush1.bf16.msra.mxu0 0
        %2281 = vmatprep.subr.bf16.mxu0 0
        %2282 = vmatpush1.bf16.msra.mxu0 0
        %2283 = vmatprep.subr.bf16.mxu0 0
        %2284 = vmatpush1.bf16.msra.mxu0 0
        %2285 = vmatprep.subr.bf16.mxu0 0
        %2286 = vmatpush1.bf16.msra.mxu0 0
        %2287 = vmatprep.subr.bf16.mxu0 0
        %2288 = vmatpush1.bf16.msra.mxu0 0
        %2289 = vmatprep.mubr.bf16.mxu0 0
        %2290 = vmatmul.mubr.bf16.gmra.mrb[0].mxu0 %v2170
        %v2291 = vpop.f32.mrb[0].mxu0
        %v2292 = vadd.f32 %v2207, %v2291
        %v2293 = vpop.f32.mrb[0].mxu0
        %v2294 = vpop.f32.mrb[0].mxu0
        %v2295 = vadd.f32 %v2207, %v2294
        %v2296 = vpop.f32.mrb[0].mxu0
        %2297 = vmatprep.mubr.bf16.mxu0 0
        %2298 = vmatmul.mubr.bf16.gmra.mrb[0].mxu0 %v2171
        %v2299 = vpop.f32.mrb[0].mxu0
        %v2300 = vadd.f32 %v2207, %v2299
        %v2301 = vpop.f32.mrb[0].mxu0
        %v2302 = vpop.f32.mrb[0].mxu0
        %v2303 = vadd.f32 %v2207, %v2302
        %v2304 = vpop.f32.mrb[0].mxu0
        %2305 = vmatprep.mubr.bf16.mxu0 0
        %2306 = vmatmul.mubr.bf16.gmra.mrb[0].mxu0 %v2172
        %v2307 = vpop.f32.mrb[0].mxu0
        %v2308 = vadd.f32 %v2207, %v2307
        %v2309 = vpop.f32.mrb[0].mxu0
        %v2310 = vpop.f32.mrb[0].mxu0
        %v2311 = vadd.f32 %v2207, %v2310
        %v2312 = vpop.f32.mrb[0].mxu0
        %2313 = vmatprep.mubr.bf16.mxu0 0
        %2314 = vmatmul.mubr.bf16.gmra.mrb[0].mxu0 %v2173
        %v2315 = vpop.f32.mrb[0].mxu0
        %v2316 = vadd.f32 %v2207, %v2315
        %v2317 = vpop.f32.mrb[0].mxu0
        %v2318 = vpop.f32.mrb[0].mxu0
        %v2319 = vadd.f32 %v2207, %v2318
        %v2320 = vpop.f32.mrb[0].mxu0
        %2321 = vmatprep.mubr.bf16.mxu0 0
        %2322 = vmatmul.mubr.bf16.gmra.mrb[0].mxu0 %v2174
        %v2323 = vpop.f32.mrb[0].mxu0
        %v2324 = vadd.f32 %v2207, %v2323
        %v2325 = vpop.f32.mrb[0].mxu0
        %v2326 = vpop.f32.mrb[0].mxu0
        %v2327 = vadd.f32 %v2207, %v2326
        %v2328 = vpop.f32.mrb[0].mxu0
        %2329 = vmatprep.mubr.bf16.mxu0 0
        %2330 = vmatmul.mubr.bf16.gmra.mrb[0].mxu0 %v2175
        %v2331 = vpop.f32.mrb[0].mxu0
        %v2332 = vadd.f32 %v2207, %v2331
        %v2333 = vpop.f32.mrb[0].mxu0
        %v2334 = vpop.f32.mrb[0].mxu0
        %v2335 = vadd.f32 %v2207, %v2334
        %v2336 = vpop.f32.mrb[0].mxu0
        %2337 = vmatprep.mubr.bf16.mxu0 0
        %2338 = vmatmul.mubr.bf16.gmra.mrb[0].mxu0 %v2176
        %v2339 = vpop.f32.mrb[0].mxu0
        %v2340 = vadd.f32 %v2207, %v2339
        %v2341 = vpop.f32.mrb[0].mxu0
        %v2342 = vpop.f32.mrb[0].mxu0
        %v2343 = vadd.f32 %v2207, %v2342
        %v2344 = vpop.f32.mrb[0].mxu0
        %2345 = vmatprep.mubr.bf16.mxu0 0
        %2346 = vmatmul.mubr.bf16.gmra.mrb[0].mxu0 %v2177
        %v2347 = vpop.f32.mrb[0].mxu0
        %v2348 = vadd.f32 %v2207, %v2347
        %v2349 = vpop.f32.mrb[0].mxu0
        %v2350 = vpop.f32.mrb[0].mxu0
        %v2351 = vadd.f32 %v2207, %v2350
        %v2352 = vpop.f32.mrb[0].mxu0
        %2353 = vmatprep.mubr.bf16.mxu0 0
        %2354 = vmatmul.mubr.bf16.gmra.mrb[0].mxu0 %v2178
        %v2355 = vpop.f32.mrb[0].mxu0
        %v2356 = vadd.f32 %v2207, %v2355
        %v2357 = vpop.f32.mrb[0].mxu0
        %v2358 = vpop.f32.mrb[0].mxu0
        %v2359 = vadd.f32 %v2207, %v2358
        %v2360 = vpop.f32.mrb[0].mxu0
        %2361 = vmatprep.mubr.bf16.mxu0 0
        %2362 = vmatmul.mubr.bf16.gmra.mrb[0].mxu0 %v2179
        %v2363 = vpop.f32.mrb[0].mxu0
        %v2364 = vadd.f32 %v2207, %v2363
        %v2365 = vpop.f32.mrb[0].mxu0
        %v2366 = vpop.f32.mrb[0].mxu0
        %v2367 = vadd.f32 %v2207, %v2366
        %v2368 = vpop.f32.mrb[0].mxu0
        %2369 = vmatprep.mubr.bf16.mxu0 0
        %2370 = vmatmul.mubr.bf16.gmra.mrb[0].mxu0 %v2180
        %v2371 = vpop.f32.mrb[0].mxu0
        %v2372 = vadd.f32 %v2207, %v2371
        %v2373 = vpop.f32.mrb[0].mxu0
        %v2374 = vpop.f32.mrb[0].mxu0
        %v2375 = vadd.f32 %v2207, %v2374
        %v2376 = vpop.f32.mrb[0].mxu0
        %2377 = vmatprep.mubr.bf16.mxu0 0
        %2378 = vmatmul.mubr.bf16.gmra.mrb[0].mxu0 %v2181
        %v2379 = vpop.f32.mrb[0].mxu0
        %v2380 = vadd.f32 %v2207, %v2379
        %v2381 = vpop.f32.mrb[0].mxu0
        %v2382 = vpop.f32.mrb[0].mxu0
        %v2383 = vadd.f32 %v2207, %v2382
        %v2384 = vpop.f32.mrb[0].mxu0
        %2385 = vmatprep.mubr.bf16.mxu0 0
        %2386 = vmatmul.mubr.bf16.gmra.mrb[0].mxu0 %v2182
        %v2387 = vpop.f32.mrb[0].mxu0
        %v2388 = vadd.f32 %v2207, %v2387
        %v2389 = vpop.f32.mrb[0].mxu0
        %v2390 = vpop.f32.mrb[0].mxu0
        %v2391 = vadd.f32 %v2207, %v2390
        %v2392 = vpop.f32.mrb[0].mxu0
        %2393 = vmatprep.mubr.bf16.mxu0 0
        %2394 = vmatmul.mubr.bf16.gmra.mrb[0].mxu0 %v2183
        %v2395 = vpop.f32.mrb[0].mxu0
        %v2396 = vadd.f32 %v2207, %v2395
        %v2397 = vpop.f32.mrb[0].mxu0
        %v2398 = vpop.f32.mrb[0].mxu0
        %v2399 = vadd.f32 %v2207, %v2398
        %v2400 = vpop.f32.mrb[0].mxu0
        %2401 = vmatprep.mubr.bf16.mxu0 0
        %2402 = vmatmul.mubr.bf16.gmra.mrb[0].mxu0 %v2184
        %v2403 = vpop.f32.mrb[0].mxu0
        %v2404 = vadd.f32 %v2207, %v2403
        %v2405 = vpop.f32.mrb[0].mxu0
        %v2406 = vpop.f32.mrb[0].mxu0
        %v2407 = vadd.f32 %v2207, %v2406
        %v2408 = vpop.f32.mrb[0].mxu0
        %2409 = vmatprep.mubr.bf16.mxu0 0
        %2410 = vmatmul.mubr.bf16.gmra.mrb[0].mxu0 %v2185
        %v2411 = vpop.f32.mrb[0].mxu0
        %v2412 = vadd.f32 %v2207, %v2411
        %v2413 = vpop.f32.mrb[0].mxu0
        %v2414 = vpop.f32.mrb[0].mxu0
        %v2415 = vadd.f32 %v2207, %v2414
        %v2416 = vpop.f32.mrb[0].mxu0
        %2417 = vdwg.mxu0
        %2418 = vst [vmem:[%s330] sm:$0xff] %v2292
        %2419 = vst [vmem:[%s330 + $0x8] sm:$0xff] %v2295
        %2420 = vst [vmem:[%s330 + $0x10] sm:$0xff] %v2300
        %2421 = vst [vmem:[%s330 + $0x18] sm:$0xff] %v2303
        %2422 = vst [vmem:[%s330 + $0x20] sm:$0xff] %v2308
        %2423 = vst [vmem:[%s330 + $0x28] sm:$0xff] %v2311
        %2424 = vst [vmem:[%s330 + $0x30] sm:$0xff] %v2316
        %2425 = vst [vmem:[%s330 + $0x38] sm:$0xff] %v2319
        %2426 = vst [vmem:[%s330 + $0x40] sm:$0xff] %v2324
        %2427 = vst [vmem:[%s330 + $0x48] sm:$0xff] %v2327
        %2428 = vst [vmem:[%s330 + $0x50] sm:$0xff] %v2332
        %2429 = vst [vmem:[%s330 + $0x58] sm:$0xff] %v2335
        %2430 = vst [vmem:[%s330 + $0x60] sm:$0xff] %v2340
        %2431 = vst [vmem:[%s330 + $0x68] sm:$0xff] %v2343
        %2432 = vst [vmem:[%s330 + $0x70] sm:$0xff] %v2348
        %2433 = vst [vmem:[%s330 + $0x78] sm:$0xff] %v2351
        %2434 = vst [vmem:[%s330 + $0x80] sm:$0xff] %v2356
        %2435 = vst [vmem:[%s330 + $0x88] sm:$0xff] %v2359
        %2436 = vst [vmem:[%s330 + $0x90] sm:$0xff] %v2364
        %2437 = vst [vmem:[%s330 + $0x98] sm:$0xff] %v2367
        %2438 = vst [vmem:[%s330 + $0xa0] sm:$0xff] %v2372
        %2439 = vst [vmem:[%s330 + $0xa8] sm:$0xff] %v2375
        %2440 = vst [vmem:[%s330 + $0xb0] sm:$0xff] %v2380
        %2441 = vst [vmem:[%s330 + $0xb8] sm:$0xff] %v2383
        %2442 = vst [vmem:[%s330 + $0xc0] sm:$0xff] %v2388
        %2443 = vst [vmem:[%s330 + $0xc8] sm:$0xff] %v2391
        %2444 = vst [vmem:[%s330 + $0xd0] sm:$0xff] %v2396
        %2445 = vst [vmem:[%s330 + $0xd8] sm:$0xff] %v2399
        %2446 = vst [vmem:[%s330 + $0xe0] sm:$0xff] %v2404
        %2447 = vst [vmem:[%s330 + $0xe8] sm:$0xff] %v2407
        %2448 = vst [vmem:[%s330 + $0xf0] sm:$0xff] %v2412
        %2449 = vst [vmem:[%s330 + $0xf8] sm:$0xff] %v2415
        %v2450 = vld [vmem:[#allocation5 + $0x4] sm:$0xf]
        %v2451 = vld [vmem:[#allocation5 + $0xc] sm:$0xf]
        %v2452 = vld [vmem:[#allocation5 + $0x14] sm:$0xf]
        %v2453 = vld [vmem:[#allocation5 + $0x1c] sm:$0xf]
        %v2454 = vld [vmem:[#allocation5 + $0x24] sm:$0xf]
        %v2455 = vld [vmem:[#allocation5 + $0x2c] sm:$0xf]
        %v2456 = vld [vmem:[#allocation5 + $0x34] sm:$0xf]
        %v2457 = vld [vmem:[#allocation5 + $0x3c] sm:$0xf]
        %v2458 = vld [vmem:[#allocation5 + $0x44] sm:$0xf]
        %v2459 = vld [vmem:[#allocation5 + $0x4c] sm:$0xf]
        %v2460 = vld [vmem:[#allocation5 + $0x54] sm:$0xf]
        %v2461 = vld [vmem:[#allocation5 + $0x5c] sm:$0xf]
        %v2462 = vld [vmem:[#allocation5 + $0x64] sm:$0xf]
        %v2463 = vld [vmem:[#allocation5 + $0x6c] sm:$0xf]
        %v2464 = vld [vmem:[#allocation5 + $0x74] sm:$0xf]
        %v2465 = vld [vmem:[#allocation5 + $0x7c] sm:$0xf]
        %v2466 = vld [vmem:[#allocation5 + $0x84] sm:$0xf]
        %v2467 = vld [vmem:[#allocation5 + $0x8c] sm:$0xf]
        %v2468 = vld [vmem:[#allocation5 + $0x94] sm:$0xf]
        %v2469 = vld [vmem:[#allocation5 + $0x9c] sm:$0xf]
        %v2470 = vld [vmem:[#allocation5 + $0xa4] sm:$0xf]
        %v2471 = vld [vmem:[#allocation5 + $0xac] sm:$0xf]
        %v2472 = vld [vmem:[#allocation5 + $0xb4] sm:$0xf]
        %v2473 = vld [vmem:[#allocation5 + $0xbc] sm:$0xf]
        %v2474 = vld [vmem:[#allocation5 + $0xc4] sm:$0xf]
        %v2475 = vld [vmem:[#allocation5 + $0xcc] sm:$0xf]
        %v2476 = vld [vmem:[#allocation5 + $0xd4] sm:$0xf]
        %v2477 = vld [vmem:[#allocation5 + $0xdc] sm:$0xf]
        %v2478 = vld [vmem:[#allocation5 + $0xe4] sm:$0xf]
        %v2479 = vld [vmem:[#allocation5 + $0xec] sm:$0xf]
        %v2480 = vld [vmem:[#allocation5 + $0xf4] sm:$0xf]
        %v2481 = vld [vmem:[#allocation5 + $0xfc] sm:$0xf]
        %v2482 = vld [vmem:[#allocation5 + $0x104] sm:$0xf]
        %v2483 = vld [vmem:[#allocation5 + $0x10c] sm:$0xf]
        %v2484 = vld [vmem:[#allocation5 + $0x114] sm:$0xf]
        %v2485 = vld [vmem:[#allocation5 + $0x11c] sm:$0xf]
        %v2486 = vld [vmem:[#allocation5 + $0x124] sm:$0xf]
        %v2487 = vld [vmem:[#allocation5 + $0x12c] sm:$0xf]
        %v2488 = vld [vmem:[#allocation5 + $0x134] sm:$0xf]
        %v2489 = vld [vmem:[#allocation5 + $0x13c] sm:$0xf]
        %v2490 = vld [vmem:[#allocation5 + $0x144] sm:$0xf]
        %v2491 = vld [vmem:[#allocation5 + $0x14c] sm:$0xf]
        %v2492 = vld [vmem:[#allocation5 + $0x154] sm:$0xf]
        %v2493 = vld [vmem:[#allocation5 + $0x15c] sm:$0xf]
        %v2494 = vld [vmem:[#allocation5 + $0x164] sm:$0xf]
        %v2495 = vld [vmem:[#allocation5 + $0x16c] sm:$0xf]
        %v2496 = vld [vmem:[#allocation5 + $0x174] sm:$0xf]
        %v2497 = vld [vmem:[#allocation5 + $0x17c] sm:$0xf]
        %v2498 = vld [vmem:[#allocation5 + $0x184] sm:$0xf]
        %v2499 = vld [vmem:[#allocation5 + $0x18c] sm:$0xf]
        %v2500 = vld [vmem:[#allocation5 + $0x194] sm:$0xf]
        %v2501 = vld [vmem:[#allocation5 + $0x19c] sm:$0xf]
        %v2502 = vld [vmem:[#allocation5 + $0x1a4] sm:$0xf]
        %v2503 = vld [vmem:[#allocation5 + $0x1ac] sm:$0xf]
        %v2504 = vld [vmem:[#allocation5 + $0x1b4] sm:$0xf]
        %v2505 = vld [vmem:[#allocation5 + $0x1bc] sm:$0xf]
        %v2506 = vld [vmem:[#allocation5 + $0x1c4] sm:$0xf]
        %v2507 = vld [vmem:[#allocation5 + $0x1cc] sm:$0xf]
        %v2508 = vld [vmem:[#allocation5 + $0x1d4] sm:$0xf]
        %v2509 = vld [vmem:[#allocation5 + $0x1dc] sm:$0xf]
        %v2510 = vld [vmem:[#allocation5 + $0x1e4] sm:$0xf]
        %v2511 = vld [vmem:[#allocation5 + $0x1ec] sm:$0xf]
        %v2512 = vld [vmem:[#allocation5 + $0x1f4] sm:$0xf]
        %v2513 = vld [vmem:[#allocation5 + $0x1fc] sm:$0xf]
        %v2514 = vld [vmem:[#allocation5 + $0x204] sm:$0xf]
        %v2515 = vld [vmem:[#allocation5 + $0x20c] sm:$0xf]
        %v2516 = vld [vmem:[#allocation5 + $0x214] sm:$0xf]
        %v2517 = vld [vmem:[#allocation5 + $0x21c] sm:$0xf]
        %v2518 = vld [vmem:[#allocation5 + $0x224] sm:$0xf]
        %v2519 = vld [vmem:[#allocation5 + $0x22c] sm:$0xf]
        %v2520 = vld [vmem:[#allocation5 + $0x234] sm:$0xf]
        %v2521 = vld [vmem:[#allocation5 + $0x23c] sm:$0xf]
        %v2522 = vld [vmem:[#allocation5 + $0x244] sm:$0xf]
        %v2523 = vld [vmem:[#allocation5 + $0x24c] sm:$0xf]
        %v2524 = vld [vmem:[#allocation5 + $0x254] sm:$0xf]
        %v2525 = vld [vmem:[#allocation5 + $0x25c] sm:$0xf]
        %v2526 = vld [vmem:[#allocation5 + $0x264] sm:$0xf]
        %v2527 = vld [vmem:[#allocation5 + $0x26c] sm:$0xf]
        %v2528 = vld [vmem:[#allocation5 + $0x274] sm:$0xf]
        %v2529 = vld [vmem:[#allocation5 + $0x27c] sm:$0xf]
        %v2530 = vld [vmem:[#allocation5 + $0x284] sm:$0xf]
        %v2531 = vld [vmem:[#allocation5 + $0x28c] sm:$0xf]
        %v2532 = vld [vmem:[#allocation5 + $0x294] sm:$0xf]
        %v2533 = vld [vmem:[#allocation5 + $0x29c] sm:$0xf]
        %v2534 = vld [vmem:[#allocation5 + $0x2a4] sm:$0xf]
        %v2535 = vld [vmem:[#allocation5 + $0x2ac] sm:$0xf]
        %v2536 = vld [vmem:[#allocation5 + $0x2b4] sm:$0xf]
        %v2537 = vld [vmem:[#allocation5 + $0x2bc] sm:$0xf]
        %v2538 = vld [vmem:[#allocation5 + $0x2c4] sm:$0xf]
        %v2539 = vld [vmem:[#allocation5 + $0x2cc] sm:$0xf]
        %v2540 = vld [vmem:[#allocation5 + $0x2d4] sm:$0xf]
        %v2541 = vld [vmem:[#allocation5 + $0x2dc] sm:$0xf]
        %v2542 = vld [vmem:[#allocation5 + $0x2e4] sm:$0xf]
        %v2543 = vld [vmem:[#allocation5 + $0x2ec] sm:$0xf]
        %v2544 = vld [vmem:[#allocation5 + $0x2f4] sm:$0xf]
        %v2545 = vld [vmem:[#allocation5 + $0x2fc] sm:$0xf]
        %v2546 = vld [vmem:[#allocation5 + $0x304] sm:$0xf]
        %v2547 = vld [vmem:[#allocation5 + $0x30c] sm:$0xf]
        %v2548 = vld [vmem:[#allocation5 + $0x314] sm:$0xf]
        %v2549 = vld [vmem:[#allocation5 + $0x31c] sm:$0xf]
        %v2550 = vld [vmem:[#allocation5 + $0x324] sm:$0xf]
        %v2551 = vld [vmem:[#allocation5 + $0x32c] sm:$0xf]
        %v2552 = vld [vmem:[#allocation5 + $0x334] sm:$0xf]
        %v2553 = vld [vmem:[#allocation5 + $0x33c] sm:$0xf]
        %v2554 = vld [vmem:[#allocation5 + $0x344] sm:$0xf]
        %v2555 = vld [vmem:[#allocation5 + $0x34c] sm:$0xf]
        %v2556 = vld [vmem:[#allocation5 + $0x354] sm:$0xf]
        %v2557 = vld [vmem:[#allocation5 + $0x35c] sm:$0xf]
        %v2558 = vld [vmem:[#allocation5 + $0x364] sm:$0xf]
        %v2559 = vld [vmem:[#allocation5 + $0x36c] sm:$0xf]
        %v2560 = vld [vmem:[#allocation5 + $0x374] sm:$0xf]
        %v2561 = vld [vmem:[#allocation5 + $0x37c] sm:$0xf]
        %v2562 = vld [vmem:[%s2 + $0x1] sm:$0x1]
        %v2564 = vlaneseq
        %v2565 = vshrl.u32 %v2564, 7
        %v2566 = vsub.s32 0, %v2565
        %v2567 = vrot.slane %v2562, %v2566
        %v2681 = vunpack.c.l.b16 %v2450
        %v2682 = vunpack.c.l.b16 %v2451
        %v2683 = vunpack.c.l.b16 %v2452
        %v2684 = vunpack.c.l.b16 %v2453
        %v2685 = vunpack.c.l.b16 %v2454
        %v2686 = vunpack.c.l.b16 %v2455
        %v2687 = vunpack.c.l.b16 %v2456
        %v2688 = vunpack.c.l.b16 %v2457
        %v2689 = vunpack.c.l.b16 %v2458
        %v2690 = vunpack.c.l.b16 %v2459
        %v2691 = vunpack.c.l.b16 %v2460
        %v2692 = vunpack.c.l.b16 %v2461
        %v2693 = vunpack.c.l.b16 %v2462
        %v2694 = vunpack.c.l.b16 %v2463
        %v2695 = vunpack.c.l.b16 %v2464
        %v2696 = vunpack.c.l.b16 %v2465
        %v2697 = vunpack.c.l.b16 %v2466
        %v2698 = vunpack.c.l.b16 %v2467
        %v2699 = vunpack.c.l.b16 %v2468
        %v2700 = vunpack.c.l.b16 %v2469
        %v2701 = vunpack.c.l.b16 %v2470
        %v2702 = vunpack.c.l.b16 %v2471
        %v2703 = vunpack.c.l.b16 %v2472
        %v2704 = vunpack.c.l.b16 %v2473
        %v2705 = vunpack.c.l.b16 %v2474
        %v2706 = vunpack.c.l.b16 %v2475
        %v2707 = vunpack.c.l.b16 %v2476
        %v2708 = vunpack.c.l.b16 %v2477
        %v2709 = vunpack.c.l.b16 %v2478
        %v2710 = vunpack.c.l.b16 %v2479
        %v2711 = vunpack.c.l.b16 %v2480
        %v2712 = vunpack.c.l.b16 %v2481
        %v2713 = vunpack.c.l.b16 %v2482
        %v2714 = vunpack.c.l.b16 %v2483
        %v2715 = vunpack.c.l.b16 %v2484
        %v2716 = vunpack.c.l.b16 %v2485
        %v2717 = vunpack.c.l.b16 %v2486
        %v2718 = vunpack.c.l.b16 %v2487
        %v2719 = vunpack.c.l.b16 %v2488
        %v2720 = vunpack.c.l.b16 %v2489
        %v2721 = vunpack.c.l.b16 %v2490
        %v2722 = vunpack.c.l.b16 %v2491
        %v2723 = vunpack.c.l.b16 %v2492
        %v2724 = vunpack.c.l.b16 %v2493
        %v2725 = vunpack.c.l.b16 %v2494
        %v2726 = vunpack.c.l.b16 %v2495
        %v2727 = vunpack.c.l.b16 %v2496
        %v2728 = vunpack.c.l.b16 %v2497
        %v2729 = vunpack.c.l.b16 %v2498
        %v2730 = vunpack.c.l.b16 %v2499
        %v2731 = vunpack.c.l.b16 %v2500
        %v2732 = vunpack.c.l.b16 %v2501
        %v2733 = vunpack.c.l.b16 %v2502
        %v2734 = vunpack.c.l.b16 %v2503
        %v2735 = vunpack.c.l.b16 %v2504
        %v2736 = vunpack.c.l.b16 %v2505
        %v2737 = vunpack.c.l.b16 %v2506
        %v2738 = vunpack.c.l.b16 %v2507
        %v2739 = vunpack.c.l.b16 %v2508
        %v2740 = vunpack.c.l.b16 %v2509
        %v2741 = vunpack.c.l.b16 %v2510
        %v2742 = vunpack.c.l.b16 %v2511
        %v2743 = vunpack.c.l.b16 %v2512
        %v2744 = vunpack.c.l.b16 %v2513
        %v2745 = vunpack.c.l.b16 %v2514
        %v2746 = vunpack.c.l.b16 %v2515
        %v2747 = vunpack.c.l.b16 %v2516
        %v2748 = vunpack.c.l.b16 %v2517
        %v2749 = vunpack.c.l.b16 %v2518
        %v2750 = vunpack.c.l.b16 %v2519
        %v2751 = vunpack.c.l.b16 %v2520
        %v2752 = vunpack.c.l.b16 %v2521
        %v2753 = vunpack.c.l.b16 %v2522
        %v2754 = vunpack.c.l.b16 %v2523
        %v2755 = vunpack.c.l.b16 %v2524
        %v2756 = vunpack.c.l.b16 %v2525
        %v2757 = vunpack.c.l.b16 %v2526
        %v2758 = vunpack.c.l.b16 %v2527
        %v2759 = vunpack.c.l.b16 %v2528
        %v2760 = vunpack.c.l.b16 %v2529
        %v2761 = vunpack.c.l.b16 %v2530
        %v2762 = vunpack.c.l.b16 %v2531
        %v2763 = vunpack.c.l.b16 %v2532
        %v2764 = vunpack.c.l.b16 %v2533
        %v2765 = vunpack.c.l.b16 %v2534
        %v2766 = vunpack.c.l.b16 %v2535
        %v2767 = vunpack.c.l.b16 %v2536
        %v2768 = vunpack.c.l.b16 %v2537
        %v2769 = vunpack.c.l.b16 %v2538
        %v2770 = vunpack.c.l.b16 %v2539
        %v2771 = vunpack.c.l.b16 %v2540
        %v2772 = vunpack.c.l.b16 %v2541
        %v2773 = vunpack.c.l.b16 %v2542
        %v2774 = vunpack.c.l.b16 %v2543
        %v2775 = vunpack.c.l.b16 %v2544
        %v2776 = vunpack.c.l.b16 %v2545
        %v2777 = vunpack.c.l.b16 %v2546
        %v2778 = vunpack.c.l.b16 %v2547
        %v2779 = vunpack.c.l.b16 %v2548
        %v2780 = vunpack.c.l.b16 %v2549
        %v2781 = vunpack.c.l.b16 %v2550
        %v2782 = vunpack.c.l.b16 %v2551
        %v2783 = vunpack.c.l.b16 %v2552
        %v2784 = vunpack.c.l.b16 %v2553
        %v2785 = vunpack.c.l.b16 %v2554
        %v2786 = vunpack.c.l.b16 %v2555
        %v2787 = vunpack.c.l.b16 %v2556
        %v2788 = vunpack.c.l.b16 %v2557
        %v2789 = vunpack.c.l.b16 %v2558
        %v2790 = vunpack.c.l.b16 %v2559
        %v2791 = vunpack.c.l.b16 %v2560
        %v2792 = vunpack.c.l.b16 %v2561
        %v2793 = vpack.c.b16 %v2682, %v2681
        %v2794 = vpack.c.b16 %v2684, %v2683
        %v2795 = vpack.c.b16 %v2686, %v2685
        %v2796 = vpack.c.b16 %v2688, %v2687
        %v2797 = vpack.c.b16 %v2690, %v2689
        %v2798 = vpack.c.b16 %v2692, %v2691
        %v2799 = vpack.c.b16 %v2694, %v2693
        %v2800 = vpack.c.b16 %v2696, %v2695
        %v2801 = vpack.c.b16 %v2698, %v2697
        %v2802 = vpack.c.b16 %v2700, %v2699
        %v2803 = vpack.c.b16 %v2702, %v2701
        %v2804 = vpack.c.b16 %v2704, %v2703
        %v2805 = vpack.c.b16 %v2706, %v2705
        %v2806 = vpack.c.b16 %v2708, %v2707
        %v2807 = vpack.c.b16 %v2710, %v2709
        %v2808 = vpack.c.b16 %v2712, %v2711
        %v2809 = vpack.c.b16 %v2714, %v2713
        %v2810 = vpack.c.b16 %v2716, %v2715
        %v2811 = vpack.c.b16 %v2718, %v2717
        %v2812 = vpack.c.b16 %v2720, %v2719
        %v2813 = vpack.c.b16 %v2722, %v2721
        %v2814 = vpack.c.b16 %v2724, %v2723
        %v2815 = vpack.c.b16 %v2726, %v2725
        %v2816 = vpack.c.b16 %v2728, %v2727
        %v2817 = vpack.c.b16 %v2730, %v2729
        %v2818 = vpack.c.b16 %v2732, %v2731
        %v2819 = vpack.c.b16 %v2734, %v2733
        %v2820 = vpack.c.b16 %v2736, %v2735
        %v2821 = vpack.c.b16 %v2738, %v2737
        %v2822 = vpack.c.b16 %v2740, %v2739
        %v2823 = vpack.c.b16 %v2742, %v2741
        %v2824 = vpack.c.b16 %v2744, %v2743
        %v2825 = vpack.c.b16 %v2746, %v2745
        %v2826 = vpack.c.b16 %v2748, %v2747
        %v2827 = vpack.c.b16 %v2750, %v2749
        %v2828 = vpack.c.b16 %v2752, %v2751
        %v2829 = vpack.c.b16 %v2754, %v2753
        %v2830 = vpack.c.b16 %v2756, %v2755
        %v2831 = vpack.c.b16 %v2758, %v2757
        %v2832 = vpack.c.b16 %v2760, %v2759
        %v2833 = vpack.c.b16 %v2762, %v2761
        %v2834 = vpack.c.b16 %v2764, %v2763
        %v2835 = vpack.c.b16 %v2766, %v2765
        %v2836 = vpack.c.b16 %v2768, %v2767
        %v2837 = vpack.c.b16 %v2770, %v2769
        %v2838 = vpack.c.b16 %v2772, %v2771
        %v2839 = vpack.c.b16 %v2774, %v2773
        %v2840 = vpack.c.b16 %v2776, %v2775
        %v2841 = vpack.c.b16 %v2778, %v2777
        %v2842 = vpack.c.b16 %v2780, %v2779
        %v2843 = vpack.c.b16 %v2782, %v2781
        %v2844 = vpack.c.b16 %v2784, %v2783
        %v2845 = vpack.c.b16 %v2786, %v2785
        %v2846 = vpack.c.b16 %v2788, %v2787
        %v2847 = vpack.c.b16 %v2790, %v2789
        %v2848 = vpack.c.b16 %v2792, %v2791
        %2905 = vmatprep.subr.bf16.mxu0 0
        %2906 = vmatpush1.bf16.msra.mxu0 %v2793
        %2907 = vmatprep.subr.bf16.mxu0 0
        %2908 = vmatpush1.bf16.msra.mxu0 %v2794
        %2909 = vmatprep.subr.bf16.mxu0 0
        %2910 = vmatpush1.bf16.msra.mxu0 %v2795
        %2911 = vmatprep.subr.bf16.mxu0 0
        %2912 = vmatpush1.bf16.msra.mxu0 %v2796
        %2913 = vmatprep.subr.bf16.mxu0 0
        %2914 = vmatpush1.bf16.msra.mxu0 %v2797
        %2915 = vmatprep.subr.bf16.mxu0 0
        %2916 = vmatpush1.bf16.msra.mxu0 %v2798
        %2917 = vmatprep.subr.bf16.mxu0 0
        %2918 = vmatpush1.bf16.msra.mxu0 %v2799
        %2919 = vmatprep.subr.bf16.mxu0 0
        %2920 = vmatpush1.bf16.msra.mxu0 %v2800
        %2921 = vmatprep.subr.bf16.mxu0 0
        %2922 = vmatpush1.bf16.msra.mxu0 %v2801
        %2923 = vmatprep.subr.bf16.mxu0 0
        %2924 = vmatpush1.bf16.msra.mxu0 %v2802
        %2925 = vmatprep.subr.bf16.mxu0 0
        %2926 = vmatpush1.bf16.msra.mxu0 %v2803
        %2927 = vmatprep.subr.bf16.mxu0 0
        %2928 = vmatpush1.bf16.msra.mxu0 %v2804
        %2929 = vmatprep.subr.bf16.mxu0 0
        %2930 = vmatpush1.bf16.msra.mxu0 %v2805
        %2931 = vmatprep.subr.bf16.mxu0 0
        %2932 = vmatpush1.bf16.msra.mxu0 %v2806
        %2933 = vmatprep.subr.bf16.mxu0 0
        %2934 = vmatpush1.bf16.msra.mxu0 %v2807
        %2935 = vmatprep.subr.bf16.mxu0 0
        %2936 = vmatpush1.bf16.msra.mxu0 %v2808
        %2937 = vmatprep.mubr.bf16.mxu0 %v935
        %2938 = vmatmul.mubr.bf16.gmra.mrb[0].mxu0 %v934
        %v2939 = vpop.f32.mrb[0].mxu0
        %v2940 = vadd.f32 %v2567, %v2939
        %v2941 = vpop.f32.mrb[0].mxu0
        %v2942 = vpop.f32.mrb[0].mxu0
        %v2943 = vadd.f32 %v2567, %v2942
        %v2944 = vpop.f32.mrb[0].mxu0
        %2945 = vmatprep.mubr.bf16.mxu0 %v942
        %2946 = vmatmul.mubr.bf16.gmra.mrb[0].mxu0 %v941
        %v2947 = vpop.f32.mrb[0].mxu0
        %v2948 = vadd.f32 %v2567, %v2947
        %v2949 = vpop.f32.mrb[0].mxu0
        %v2950 = vpop.f32.mrb[0].mxu0
        %v2951 = vadd.f32 %v2567, %v2950
        %v2952 = vpop.f32.mrb[0].mxu0
        %2953 = vmatprep.mubr.bf16.mxu0 %v949
        %2954 = vmatmul.mubr.bf16.gmra.mrb[0].mxu0 %v948
        %v2955 = vpop.f32.mrb[0].mxu0
        %v2956 = vadd.f32 %v2567, %v2955
        %v2957 = vpop.f32.mrb[0].mxu0
        %v2958 = vpop.f32.mrb[0].mxu0
        %v2959 = vadd.f32 %v2567, %v2958
        %v2960 = vpop.f32.mrb[0].mxu0
        %2961 = vmatprep.mubr.bf16.mxu0 %v956
        %2962 = vmatmul.mubr.bf16.gmra.mrb[0].mxu0 %v955
        %v2963 = vpop.f32.mrb[0].mxu0
        %v2964 = vadd.f32 %v2567, %v2963
        %v2965 = vpop.f32.mrb[0].mxu0
        %v2966 = vpop.f32.mrb[0].mxu0
        %v2967 = vadd.f32 %v2567, %v2966
        %v2968 = vpop.f32.mrb[0].mxu0
        %2969 = vmatprep.mubr.bf16.mxu0 %v963
        %2970 = vmatmul.mubr.bf16.gmra.mrb[0].mxu0 %v962
        %v2971 = vpop.f32.mrb[0].mxu0
        %v2972 = vadd.f32 %v2567, %v2971
        %v2973 = vpop.f32.mrb[0].mxu0
        %v2974 = vpop.f32.mrb[0].mxu0
        %v2975 = vadd.f32 %v2567, %v2974
        %v2976 = vpop.f32.mrb[0].mxu0
        %2977 = vmatprep.mubr.bf16.mxu0 %v970
        %2978 = vmatmul.mubr.bf16.gmra.mrb[0].mxu0 %v969
        %v2979 = vpop.f32.mrb[0].mxu0
        %v2980 = vadd.f32 %v2567, %v2979
        %v2981 = vpop.f32.mrb[0].mxu0
        %v2982 = vpop.f32.mrb[0].mxu0
        %v2983 = vadd.f32 %v2567, %v2982
        %v2984 = vpop.f32.mrb[0].mxu0
        %2985 = vmatprep.mubr.bf16.mxu0 %v977
        %2986 = vmatmul.mubr.bf16.gmra.mrb[0].mxu0 %v976
        %v2987 = vpop.f32.mrb[0].mxu0
        %v2988 = vadd.f32 %v2567, %v2987
        %v2989 = vpop.f32.mrb[0].mxu0
        %v2990 = vpop.f32.mrb[0].mxu0
        %v2991 = vadd.f32 %v2567, %v2990
        %v2992 = vpop.f32.mrb[0].mxu0
        %2993 = vmatprep.mubr.bf16.mxu0 %v984
        %2994 = vmatmul.mubr.bf16.gmra.mrb[0].mxu0 %v983
        %v2995 = vpop.f32.mrb[0].mxu0
        %v2996 = vadd.f32 %v2567, %v2995
        %v2997 = vpop.f32.mrb[0].mxu0
        %v2998 = vpop.f32.mrb[0].mxu0
        %v2999 = vadd.f32 %v2567, %v2998
        %v3000 = vpop.f32.mrb[0].mxu0
        %3001 = vmatprep.mubr.bf16.mxu0 %v991
        %3002 = vmatmul.mubr.bf16.gmra.mrb[0].mxu0 %v990
        %v3003 = vpop.f32.mrb[0].mxu0
        %v3004 = vadd.f32 %v2567, %v3003
        %v3005 = vpop.f32.mrb[0].mxu0
        %v3006 = vpop.f32.mrb[0].mxu0
        %v3007 = vadd.f32 %v2567, %v3006
        %v3008 = vpop.f32.mrb[0].mxu0
        %3009 = vmatprep.mubr.bf16.mxu0 %v998
        %3010 = vmatmul.mubr.bf16.gmra.mrb[0].mxu0 %v997
        %v3011 = vpop.f32.mrb[0].mxu0
        %v3012 = vadd.f32 %v2567, %v3011
        %v3013 = vpop.f32.mrb[0].mxu0
        %v3014 = vpop.f32.mrb[0].mxu0
        %v3015 = vadd.f32 %v2567, %v3014
        %v3016 = vpop.f32.mrb[0].mxu0
        %3017 = vmatprep.mubr.bf16.mxu0 %v1005
        %3018 = vmatmul.mubr.bf16.gmra.mrb[0].mxu0 %v1004
        %v3019 = vpop.f32.mrb[0].mxu0
        %v3020 = vadd.f32 %v2567, %v3019
        %v3021 = vpop.f32.mrb[0].mxu0
        %v3022 = vpop.f32.mrb[0].mxu0
        %v3023 = vadd.f32 %v2567, %v3022
        %v3024 = vpop.f32.mrb[0].mxu0
        %3025 = vmatprep.mubr.bf16.mxu0 %v1012
        %3026 = vmatmul.mubr.bf16.gmra.mrb[0].mxu0 %v1011
        %v3027 = vpop.f32.mrb[0].mxu0
        %v3028 = vadd.f32 %v2567, %v3027
        %v3029 = vpop.f32.mrb[0].mxu0
        %v3030 = vpop.f32.mrb[0].mxu0
        %v3031 = vadd.f32 %v2567, %v3030
        %v3032 = vpop.f32.mrb[0].mxu0
        %3033 = vmatprep.mubr.bf16.mxu0 %v1019
        %3034 = vmatmul.mubr.bf16.gmra.mrb[0].mxu0 %v1018
        %v3035 = vpop.f32.mrb[0].mxu0
        %v3036 = vadd.f32 %v2567, %v3035
        %v3037 = vpop.f32.mrb[0].mxu0
        %v3038 = vpop.f32.mrb[0].mxu0
        %v3039 = vadd.f32 %v2567, %v3038
        %v3040 = vpop.f32.mrb[0].mxu0
        %3041 = vmatprep.mubr.bf16.mxu0 %v1026
        %3042 = vmatmul.mubr.bf16.gmra.mrb[0].mxu0 %v1025
        %v3043 = vpop.f32.mrb[0].mxu0
        %v3044 = vadd.f32 %v2567, %v3043
        %v3045 = vpop.f32.mrb[0].mxu0
        %v3046 = vpop.f32.mrb[0].mxu0
        %v3047 = vadd.f32 %v2567, %v3046
        %v3048 = vpop.f32.mrb[0].mxu0
        %3049 = vmatprep.mubr.bf16.mxu0 %v1033
        %3050 = vmatmul.mubr.bf16.gmra.mrb[0].mxu0 %v1032
        %v3051 = vpop.f32.mrb[0].mxu0
        %v3052 = vadd.f32 %v2567, %v3051
        %v3053 = vpop.f32.mrb[0].mxu0
        %v3054 = vpop.f32.mrb[0].mxu0
        %v3055 = vadd.f32 %v2567, %v3054
        %v3056 = vpop.f32.mrb[0].mxu0
        %3057 = vmatprep.mubr.bf16.mxu0 %v1040
        %3058 = vmatmul.mubr.bf16.gmra.mrb[0].mxu0 %v1039
        %v3059 = vpop.f32.mrb[0].mxu0
        %v3060 = vadd.f32 %v2567, %v3059
        %v3061 = vpop.f32.mrb[0].mxu0
        %v3062 = vpop.f32.mrb[0].mxu0
        %v3063 = vadd.f32 %v2567, %v3062
        %v3064 = vpop.f32.mrb[0].mxu0
        %3065 = vdwg.mxu0
        %3066 = vmatprep.subr.bf16.mxu0 0
        %3067 = vmatpush1.bf16.msra.mxu0 %v2809
        %3068 = vmatprep.subr.bf16.mxu0 0
        %3069 = vmatpush1.bf16.msra.mxu0 %v2810
        %3070 = vmatprep.subr.bf16.mxu0 0
        %3071 = vmatpush1.bf16.msra.mxu0 %v2811
        %3072 = vmatprep.subr.bf16.mxu0 0
        %3073 = vmatpush1.bf16.msra.mxu0 %v2812
        %3074 = vmatprep.subr.bf16.mxu0 0
        %3075 = vmatpush1.bf16.msra.mxu0 %v2813
        %3076 = vmatprep.subr.bf16.mxu0 0
        %3077 = vmatpush1.bf16.msra.mxu0 %v2814
        %3078 = vmatprep.subr.bf16.mxu0 0
        %3079 = vmatpush1.bf16.msra.mxu0 %v2815
        %3080 = vmatprep.subr.bf16.mxu0 0
        %3081 = vmatpush1.bf16.msra.mxu0 %v2816
        %3082 = vmatprep.subr.bf16.mxu0 0
        %3083 = vmatpush1.bf16.msra.mxu0 %v2817
        %3084 = vmatprep.subr.bf16.mxu0 0
        %3085 = vmatpush1.bf16.msra.mxu0 %v2818
        %3086 = vmatprep.subr.bf16.mxu0 0
        %3087 = vmatpush1.bf16.msra.mxu0 %v2819
        %3088 = vmatprep.subr.bf16.mxu0 0
        %3089 = vmatpush1.bf16.msra.mxu0 %v2820
        %3090 = vmatprep.subr.bf16.mxu0 0
        %3091 = vmatpush1.bf16.msra.mxu0 %v2821
        %3092 = vmatprep.subr.bf16.mxu0 0
        %3093 = vmatpush1.bf16.msra.mxu0 %v2822
        %3094 = vmatprep.subr.bf16.mxu0 0
        %3095 = vmatpush1.bf16.msra.mxu0 %v2823
        %3096 = vmatprep.subr.bf16.mxu0 0
        %3097 = vmatpush1.bf16.msra.mxu0 %v2824
        %3098 = vmatprep.mubr.bf16.mxu0 %v937
        %3099 = vmatmul.mubr.bf16.gmra.mrb[0].mxu0 %v936
        %v3100 = vpop.f32.mrb[0].mxu0
        %v3101 = vadd.f32 %v2940, %v3100
        %v3102 = vpop.f32.mrb[0].mxu0
        %v3103 = vpop.f32.mrb[0].mxu0
        %v3104 = vadd.f32 %v2943, %v3103
        %v3105 = vpop.f32.mrb[0].mxu0
        %3106 = vmatprep.mubr.bf16.mxu0 %v944
        %3107 = vmatmul.mubr.bf16.gmra.mrb[0].mxu0 %v943
        %v3108 = vpop.f32.mrb[0].mxu0
        %v3109 = vadd.f32 %v2948, %v3108
        %v3110 = vpop.f32.mrb[0].mxu0
        %v3111 = vpop.f32.mrb[0].mxu0
        %v3112 = vadd.f32 %v2951, %v3111
        %v3113 = vpop.f32.mrb[0].mxu0
        %3114 = vmatprep.mubr.bf16.mxu0 %v951
        %3115 = vmatmul.mubr.bf16.gmra.mrb[0].mxu0 %v950
        %v3116 = vpop.f32.mrb[0].mxu0
        %v3117 = vadd.f32 %v2956, %v3116
        %v3118 = vpop.f32.mrb[0].mxu0
        %v3119 = vpop.f32.mrb[0].mxu0
        %v3120 = vadd.f32 %v2959, %v3119
        %v3121 = vpop.f32.mrb[0].mxu0
        %3122 = vmatprep.mubr.bf16.mxu0 %v958
        %3123 = vmatmul.mubr.bf16.gmra.mrb[0].mxu0 %v957
        %v3124 = vpop.f32.mrb[0].mxu0
        %v3125 = vadd.f32 %v2964, %v3124
        %v3126 = vpop.f32.mrb[0].mxu0
        %v3127 = vpop.f32.mrb[0].mxu0
        %v3128 = vadd.f32 %v2967, %v3127
        %v3129 = vpop.f32.mrb[0].mxu0
        %3130 = vmatprep.mubr.bf16.mxu0 %v965
        %3131 = vmatmul.mubr.bf16.gmra.mrb[0].mxu0 %v964
        %v3132 = vpop.f32.mrb[0].mxu0
        %v3133 = vadd.f32 %v2972, %v3132
        %v3134 = vpop.f32.mrb[0].mxu0
        %v3135 = vpop.f32.mrb[0].mxu0
        %v3136 = vadd.f32 %v2975, %v3135
        %v3137 = vpop.f32.mrb[0].mxu0
        %3138 = vmatprep.mubr.bf16.mxu0 %v972
        %3139 = vmatmul.mubr.bf16.gmra.mrb[0].mxu0 %v971
        %v3140 = vpop.f32.mrb[0].mxu0
        %v3141 = vadd.f32 %v2980, %v3140
        %v3142 = vpop.f32.mrb[0].mxu0
        %v3143 = vpop.f32.mrb[0].mxu0
        %v3144 = vadd.f32 %v2983, %v3143
        %v3145 = vpop.f32.mrb[0].mxu0
        %3146 = vmatprep.mubr.bf16.mxu0 %v979
        %3147 = vmatmul.mubr.bf16.gmra.mrb[0].mxu0 %v978
        %v3148 = vpop.f32.mrb[0].mxu0
        %v3149 = vadd.f32 %v2988, %v3148
        %v3150 = vpop.f32.mrb[0].mxu0
        %v3151 = vpop.f32.mrb[0].mxu0
        %v3152 = vadd.f32 %v2991, %v3151
        %v3153 = vpop.f32.mrb[0].mxu0
        %3154 = vmatprep.mubr.bf16.mxu0 %v986
        %3155 = vmatmul.mubr.bf16.gmra.mrb[0].mxu0 %v985
        %v3156 = vpop.f32.mrb[0].mxu0
        %v3157 = vadd.f32 %v2996, %v3156
        %v3158 = vpop.f32.mrb[0].mxu0
        %v3159 = vpop.f32.mrb[0].mxu0
        %v3160 = vadd.f32 %v2999, %v3159
        %v3161 = vpop.f32.mrb[0].mxu0
        %3162 = vmatprep.mubr.bf16.mxu0 %v993
        %3163 = vmatmul.mubr.bf16.gmra.mrb[0].mxu0 %v992
        %v3164 = vpop.f32.mrb[0].mxu0
        %v3165 = vadd.f32 %v3004, %v3164
        %v3166 = vpop.f32.mrb[0].mxu0
        %v3167 = vpop.f32.mrb[0].mxu0
        %v3168 = vadd.f32 %v3007, %v3167
        %v3169 = vpop.f32.mrb[0].mxu0
        %3170 = vmatprep.mubr.bf16.mxu0 %v1000
        %3171 = vmatmul.mubr.bf16.gmra.mrb[0].mxu0 %v999
        %v3172 = vpop.f32.mrb[0].mxu0
        %v3173 = vadd.f32 %v3012, %v3172
        %v3174 = vpop.f32.mrb[0].mxu0
        %v3175 = vpop.f32.mrb[0].mxu0
        %v3176 = vadd.f32 %v3015, %v3175
        %v3177 = vpop.f32.mrb[0].mxu0
        %3178 = vmatprep.mubr.bf16.mxu0 %v1007
        %3179 = vmatmul.mubr.bf16.gmra.mrb[0].mxu0 %v1006
        %v3180 = vpop.f32.mrb[0].mxu0
        %v3181 = vadd.f32 %v3020, %v3180
        %v3182 = vpop.f32.mrb[0].mxu0
        %v3183 = vpop.f32.mrb[0].mxu0
        %v3184 = vadd.f32 %v3023, %v3183
        %v3185 = vpop.f32.mrb[0].mxu0
        %3186 = vmatprep.mubr.bf16.mxu0 %v1014
        %3187 = vmatmul.mubr.bf16.gmra.mrb[0].mxu0 %v1013
        %v3188 = vpop.f32.mrb[0].mxu0
        %v3189 = vadd.f32 %v3028, %v3188
        %v3190 = vpop.f32.mrb[0].mxu0
        %v3191 = vpop.f32.mrb[0].mxu0
        %v3192 = vadd.f32 %v3031, %v3191
        %v3193 = vpop.f32.mrb[0].mxu0
        %3194 = vmatprep.mubr.bf16.mxu0 %v1021
        %3195 = vmatmul.mubr.bf16.gmra.mrb[0].mxu0 %v1020
        %v3196 = vpop.f32.mrb[0].mxu0
        %v3197 = vadd.f32 %v3036, %v3196
        %v3198 = vpop.f32.mrb[0].mxu0
        %v3199 = vpop.f32.mrb[0].mxu0
        %v3200 = vadd.f32 %v3039, %v3199
        %v3201 = vpop.f32.mrb[0].mxu0
        %3202 = vmatprep.mubr.bf16.mxu0 %v1028
        %3203 = vmatmul.mubr.bf16.gmra.mrb[0].mxu0 %v1027
        %v3204 = vpop.f32.mrb[0].mxu0
        %v3205 = vadd.f32 %v3044, %v3204
        %v3206 = vpop.f32.mrb[0].mxu0
        %v3207 = vpop.f32.mrb[0].mxu0
        %v3208 = vadd.f32 %v3047, %v3207
        %v3209 = vpop.f32.mrb[0].mxu0
        %3210 = vmatprep.mubr.bf16.mxu0 %v1035
        %3211 = vmatmul.mubr.bf16.gmra.mrb[0].mxu0 %v1034
        %v3212 = vpop.f32.mrb[0].mxu0
        %v3213 = vadd.f32 %v3052, %v3212
        %v3214 = vpop.f32.mrb[0].mxu0
        %v3215 = vpop.f32.mrb[0].mxu0
        %v3216 = vadd.f32 %v3055, %v3215
        %v3217 = vpop.f32.mrb[0].mxu0
        %3218 = vmatprep.mubr.bf16.mxu0 %v1042
        %3219 = vmatmul.mubr.bf16.gmra.mrb[0].mxu0 %v1041
        %v3220 = vpop.f32.mrb[0].mxu0
        %v3221 = vadd.f32 %v3060, %v3220
        %v3222 = vpop.f32.mrb[0].mxu0
        %v3223 = vpop.f32.mrb[0].mxu0
        %v3224 = vadd.f32 %v3063, %v3223
        %v3225 = vpop.f32.mrb[0].mxu0
        %3226 = vdwg.mxu0
        %3227 = vmatprep.subr.bf16.mxu0 0
        %3228 = vmatpush1.bf16.msra.mxu0 %v2825
        %3229 = vmatprep.subr.bf16.mxu0 0
        %3230 = vmatpush1.bf16.msra.mxu0 %v2826
        %3231 = vmatprep.subr.bf16.mxu0 0
        %3232 = vmatpush1.bf16.msra.mxu0 %v2827
        %3233 = vmatprep.subr.bf16.mxu0 0
        %3234 = vmatpush1.bf16.msra.mxu0 %v2828
        %3235 = vmatprep.subr.bf16.mxu0 0
        %3236 = vmatpush1.bf16.msra.mxu0 %v2829
        %3237 = vmatprep.subr.bf16.mxu0 0
        %3238 = vmatpush1.bf16.msra.mxu0 %v2830
        %3239 = vmatprep.subr.bf16.mxu0 0
        %3240 = vmatpush1.bf16.msra.mxu0 %v2831
        %3241 = vmatprep.subr.bf16.mxu0 0
        %3242 = vmatpush1.bf16.msra.mxu0 %v2832
        %3243 = vmatprep.subr.bf16.mxu0 0
        %3244 = vmatpush1.bf16.msra.mxu0 %v2833
        %3245 = vmatprep.subr.bf16.mxu0 0
        %3246 = vmatpush1.bf16.msra.mxu0 %v2834
        %3247 = vmatprep.subr.bf16.mxu0 0
        %3248 = vmatpush1.bf16.msra.mxu0 %v2835
        %3249 = vmatprep.subr.bf16.mxu0 0
        %3250 = vmatpush1.bf16.msra.mxu0 %v2836
        %3251 = vmatprep.subr.bf16.mxu0 0
        %3252 = vmatpush1.bf16.msra.mxu0 %v2837
        %3253 = vmatprep.subr.bf16.mxu0 0
        %3254 = vmatpush1.bf16.msra.mxu0 %v2838
        %3255 = vmatprep.subr.bf16.mxu0 0
        %3256 = vmatpush1.bf16.msra.mxu0 %v2839
        %3257 = vmatprep.subr.bf16.mxu0 0
        %3258 = vmatpush1.bf16.msra.mxu0 %v2840
        %3259 = vmatprep.mubr.bf16.mxu0 %v939
        %3260 = vmatmul.mubr.bf16.gmra.mrb[0].mxu0 %v938
        %v3261 = vpop.f32.mrb[0].mxu0
        %v3262 = vadd.f32 %v3101, %v3261
        %v3263 = vpop.f32.mrb[0].mxu0
        %v3264 = vpop.f32.mrb[0].mxu0
        %v3265 = vadd.f32 %v3104, %v3264
        %v3266 = vpop.f32.mrb[0].mxu0
        %3267 = vmatprep.mubr.bf16.mxu0 %v946
        %3268 = vmatmul.mubr.bf16.gmra.mrb[0].mxu0 %v945
        %v3269 = vpop.f32.mrb[0].mxu0
        %v3270 = vadd.f32 %v3109, %v3269
        %v3271 = vpop.f32.mrb[0].mxu0
        %v3272 = vpop.f32.mrb[0].mxu0
        %v3273 = vadd.f32 %v3112, %v3272
        %v3274 = vpop.f32.mrb[0].mxu0
        %3275 = vmatprep.mubr.bf16.mxu0 %v953
        %3276 = vmatmul.mubr.bf16.gmra.mrb[0].mxu0 %v952
        %v3277 = vpop.f32.mrb[0].mxu0
        %v3278 = vadd.f32 %v3117, %v3277
        %v3279 = vpop.f32.mrb[0].mxu0
        %v3280 = vpop.f32.mrb[0].mxu0
        %v3281 = vadd.f32 %v3120, %v3280
        %v3282 = vpop.f32.mrb[0].mxu0
        %3283 = vmatprep.mubr.bf16.mxu0 %v960
        %3284 = vmatmul.mubr.bf16.gmra.mrb[0].mxu0 %v959
        %v3285 = vpop.f32.mrb[0].mxu0
        %v3286 = vadd.f32 %v3125, %v3285
        %v3287 = vpop.f32.mrb[0].mxu0
        %v3288 = vpop.f32.mrb[0].mxu0
        %v3289 = vadd.f32 %v3128, %v3288
        %v3290 = vpop.f32.mrb[0].mxu0
        %3291 = vmatprep.mubr.bf16.mxu0 %v967
        %3292 = vmatmul.mubr.bf16.gmra.mrb[0].mxu0 %v966
        %v3293 = vpop.f32.mrb[0].mxu0
        %v3294 = vadd.f32 %v3133, %v3293
        %v3295 = vpop.f32.mrb[0].mxu0
        %v3296 = vpop.f32.mrb[0].mxu0
        %v3297 = vadd.f32 %v3136, %v3296
        %v3298 = vpop.f32.mrb[0].mxu0
        %3299 = vmatprep.mubr.bf16.mxu0 %v974
        %3300 = vmatmul.mubr.bf16.gmra.mrb[0].mxu0 %v973
        %v3301 = vpop.f32.mrb[0].mxu0
        %v3302 = vadd.f32 %v3141, %v3301
        %v3303 = vpop.f32.mrb[0].mxu0
        %v3304 = vpop.f32.mrb[0].mxu0
        %v3305 = vadd.f32 %v3144, %v3304
        %v3306 = vpop.f32.mrb[0].mxu0
        %3307 = vmatprep.mubr.bf16.mxu0 %v981
        %3308 = vmatmul.mubr.bf16.gmra.mrb[0].mxu0 %v980
        %v3309 = vpop.f32.mrb[0].mxu0
        %v3310 = vadd.f32 %v3149, %v3309
        %v3311 = vpop.f32.mrb[0].mxu0
        %v3312 = vpop.f32.mrb[0].mxu0
        %v3313 = vadd.f32 %v3152, %v3312
        %v3314 = vpop.f32.mrb[0].mxu0
        %3315 = vmatprep.mubr.bf16.mxu0 %v988
        %3316 = vmatmul.mubr.bf16.gmra.mrb[0].mxu0 %v987
        %v3317 = vpop.f32.mrb[0].mxu0
        %v3318 = vadd.f32 %v3157, %v3317
        %v3319 = vpop.f32.mrb[0].mxu0
        %v3320 = vpop.f32.mrb[0].mxu0
        %v3321 = vadd.f32 %v3160, %v3320
        %v3322 = vpop.f32.mrb[0].mxu0
        %3323 = vmatprep.mubr.bf16.mxu0 %v995
        %3324 = vmatmul.mubr.bf16.gmra.mrb[0].mxu0 %v994
        %v3325 = vpop.f32.mrb[0].mxu0
        %v3326 = vadd.f32 %v3165, %v3325
        %v3327 = vpop.f32.mrb[0].mxu0
        %v3328 = vpop.f32.mrb[0].mxu0
        %v3329 = vadd.f32 %v3168, %v3328
        %v3330 = vpop.f32.mrb[0].mxu0
        %3331 = vmatprep.mubr.bf16.mxu0 %v1002
        %3332 = vmatmul.mubr.bf16.gmra.mrb[0].mxu0 %v1001
        %v3333 = vpop.f32.mrb[0].mxu0
        %v3334 = vadd.f32 %v3173, %v3333
        %v3335 = vpop.f32.mrb[0].mxu0
        %v3336 = vpop.f32.mrb[0].mxu0
        %v3337 = vadd.f32 %v3176, %v3336
        %v3338 = vpop.f32.mrb[0].mxu0
        %3339 = vmatprep.mubr.bf16.mxu0 %v1009
        %3340 = vmatmul.mubr.bf16.gmra.mrb[0].mxu0 %v1008
        %v3341 = vpop.f32.mrb[0].mxu0
        %v3342 = vadd.f32 %v3181, %v3341
        %v3343 = vpop.f32.mrb[0].mxu0
        %v3344 = vpop.f32.mrb[0].mxu0
        %v3345 = vadd.f32 %v3184, %v3344
        %v3346 = vpop.f32.mrb[0].mxu0
        %3347 = vmatprep.mubr.bf16.mxu0 %v1016
        %3348 = vmatmul.mubr.bf16.gmra.mrb[0].mxu0 %v1015
        %v3349 = vpop.f32.mrb[0].mxu0
        %v3350 = vadd.f32 %v3189, %v3349
        %v3351 = vpop.f32.mrb[0].mxu0
        %v3352 = vpop.f32.mrb[0].mxu0
        %v3353 = vadd.f32 %v3192, %v3352
        %v3354 = vpop.f32.mrb[0].mxu0
        %3355 = vmatprep.mubr.bf16.mxu0 %v1023
        %3356 = vmatmul.mubr.bf16.gmra.mrb[0].mxu0 %v1022
        %v3357 = vpop.f32.mrb[0].mxu0
        %v3358 = vadd.f32 %v3197, %v3357
        %v3359 = vpop.f32.mrb[0].mxu0
        %v3360 = vpop.f32.mrb[0].mxu0
        %v3361 = vadd.f32 %v3200, %v3360
        %v3362 = vpop.f32.mrb[0].mxu0
        %3363 = vmatprep.mubr.bf16.mxu0 %v1030
        %3364 = vmatmul.mubr.bf16.gmra.mrb[0].mxu0 %v1029
        %v3365 = vpop.f32.mrb[0].mxu0
        %v3366 = vadd.f32 %v3205, %v3365
        %v3367 = vpop.f32.mrb[0].mxu0
        %v3368 = vpop.f32.mrb[0].mxu0
        %v3369 = vadd.f32 %v3208, %v3368
        %v3370 = vpop.f32.mrb[0].mxu0
        %3371 = vmatprep.mubr.bf16.mxu0 %v1037
        %3372 = vmatmul.mubr.bf16.gmra.mrb[0].mxu0 %v1036
        %v3373 = vpop.f32.mrb[0].mxu0
        %v3374 = vadd.f32 %v3213, %v3373
        %v3375 = vpop.f32.mrb[0].mxu0
        %v3376 = vpop.f32.mrb[0].mxu0
        %v3377 = vadd.f32 %v3216, %v3376
        %v3378 = vpop.f32.mrb[0].mxu0
        %3379 = vmatprep.mubr.bf16.mxu0 %v1044
        %3380 = vmatmul.mubr.bf16.gmra.mrb[0].mxu0 %v1043
        %v3381 = vpop.f32.mrb[0].mxu0
        %v3382 = vadd.f32 %v3221, %v3381
        %v3383 = vpop.f32.mrb[0].mxu0
        %v3384 = vpop.f32.mrb[0].mxu0
        %v3385 = vadd.f32 %v3224, %v3384
        %v3386 = vpop.f32.mrb[0].mxu0
        %3387 = vdwg.mxu0
        %3388 = vmatprep.subr.bf16.mxu0 0
        %3389 = vmatpush1.bf16.msra.mxu0 %v2841
        %3390 = vmatprep.subr.bf16.mxu0 0
        %3391 = vmatpush1.bf16.msra.mxu0 %v2842
        %3392 = vmatprep.subr.bf16.mxu0 0
        %3393 = vmatpush1.bf16.msra.mxu0 %v2843
        %3394 = vmatprep.subr.bf16.mxu0 0
        %3395 = vmatpush1.bf16.msra.mxu0 %v2844
        %3396 = vmatprep.subr.bf16.mxu0 0
        %3397 = vmatpush1.bf16.msra.mxu0 %v2845
        %3398 = vmatprep.subr.bf16.mxu0 0
        %3399 = vmatpush1.bf16.msra.mxu0 %v2846
        %3400 = vmatprep.subr.bf16.mxu0 0
        %3401 = vmatpush1.bf16.msra.mxu0 %v2847
        %3402 = vmatprep.subr.bf16.mxu0 0
        %3403 = vmatpush1.bf16.msra.mxu0 %v2848
        %3404 = vmatprep.subr.bf16.mxu0 0
        %3405 = vmatpush1.bf16.msra.mxu0 0
        %3406 = vmatprep.subr.bf16.mxu0 0
        %3407 = vmatpush1.bf16.msra.mxu0 0
        %3408 = vmatprep.subr.bf16.mxu0 0
        %3409 = vmatpush1.bf16.msra.mxu0 0
        %3410 = vmatprep.subr.bf16.mxu0 0
        %3411 = vmatpush1.bf16.msra.mxu0 0
        %3412 = vmatprep.subr.bf16.mxu0 0
        %3413 = vmatpush1.bf16.msra.mxu0 0
        %3414 = vmatprep.subr.bf16.mxu0 0
        %3415 = vmatpush1.bf16.msra.mxu0 0
        %3416 = vmatprep.subr.bf16.mxu0 0
        %3417 = vmatpush1.bf16.msra.mxu0 0
        %3418 = vmatprep.subr.bf16.mxu0 0
        %3419 = vmatpush1.bf16.msra.mxu0 0
        %3420 = vmatprep.mubr.bf16.mxu0 0
        %3421 = vmatmul.mubr.bf16.gmra.mrb[0].mxu0 %v940
        %v3422 = vpop.f32.mrb[0].mxu0
        %v3423 = vadd.f32 %v3262, %v3422
        %v3424 = vpop.f32.mrb[0].mxu0
        %v3425 = vpop.f32.mrb[0].mxu0
        %v3426 = vadd.f32 %v3265, %v3425
        %v3427 = vpop.f32.mrb[0].mxu0
        %3428 = vmatprep.mubr.bf16.mxu0 0
        %3429 = vmatmul.mubr.bf16.gmra.mrb[0].mxu0 %v947
        %v3430 = vpop.f32.mrb[0].mxu0
        %v3431 = vadd.f32 %v3270, %v3430
        %v3432 = vpop.f32.mrb[0].mxu0
        %v3433 = vpop.f32.mrb[0].mxu0
        %v3434 = vadd.f32 %v3273, %v3433
        %v3435 = vpop.f32.mrb[0].mxu0
        %3436 = vmatprep.mubr.bf16.mxu0 0
        %3437 = vmatmul.mubr.bf16.gmra.mrb[0].mxu0 %v954
        %v3438 = vpop.f32.mrb[0].mxu0
        %v3439 = vadd.f32 %v3278, %v3438
        %v3440 = vpop.f32.mrb[0].mxu0
        %v3441 = vpop.f32.mrb[0].mxu0
        %v3442 = vadd.f32 %v3281, %v3441
        %v3443 = vpop.f32.mrb[0].mxu0
        %3444 = vmatprep.mubr.bf16.mxu0 0
        %3445 = vmatmul.mubr.bf16.gmra.mrb[0].mxu0 %v961
        %v3446 = vpop.f32.mrb[0].mxu0
        %v3447 = vadd.f32 %v3286, %v3446
        %v3448 = vpop.f32.mrb[0].mxu0
        %v3449 = vpop.f32.mrb[0].mxu0
        %v3450 = vadd.f32 %v3289, %v3449
        %v3451 = vpop.f32.mrb[0].mxu0
        %3452 = vmatprep.mubr.bf16.mxu0 0
        %3453 = vmatmul.mubr.bf16.gmra.mrb[0].mxu0 %v968
        %v3454 = vpop.f32.mrb[0].mxu0
        %v3455 = vadd.f32 %v3294, %v3454
        %v3456 = vpop.f32.mrb[0].mxu0
        %v3457 = vpop.f32.mrb[0].mxu0
        %v3458 = vadd.f32 %v3297, %v3457
        %v3459 = vpop.f32.mrb[0].mxu0
        %3460 = vmatprep.mubr.bf16.mxu0 0
        %3461 = vmatmul.mubr.bf16.gmra.mrb[0].mxu0 %v975
        %v3462 = vpop.f32.mrb[0].mxu0
        %v3463 = vadd.f32 %v3302, %v3462
        %v3464 = vpop.f32.mrb[0].mxu0
        %v3465 = vpop.f32.mrb[0].mxu0
        %v3466 = vadd.f32 %v3305, %v3465
        %v3467 = vpop.f32.mrb[0].mxu0
        %3468 = vmatprep.mubr.bf16.mxu0 0
        %3469 = vmatmul.mubr.bf16.gmra.mrb[0].mxu0 %v982
        %v3470 = vpop.f32.mrb[0].mxu0
        %v3471 = vadd.f32 %v3310, %v3470
        %v3472 = vpop.f32.mrb[0].mxu0
        %v3473 = vpop.f32.mrb[0].mxu0
        %v3474 = vadd.f32 %v3313, %v3473
        %v3475 = vpop.f32.mrb[0].mxu0
        %3476 = vmatprep.mubr.bf16.mxu0 0
        %3477 = vmatmul.mubr.bf16.gmra.mrb[0].mxu0 %v989
        %v3478 = vpop.f32.mrb[0].mxu0
        %v3479 = vadd.f32 %v3318, %v3478
        %v3480 = vpop.f32.mrb[0].mxu0
        %v3481 = vpop.f32.mrb[0].mxu0
        %v3482 = vadd.f32 %v3321, %v3481
        %v3483 = vpop.f32.mrb[0].mxu0
        %3484 = vmatprep.mubr.bf16.mxu0 0
        %3485 = vmatmul.mubr.bf16.gmra.mrb[0].mxu0 %v996
        %v3486 = vpop.f32.mrb[0].mxu0
        %v3487 = vadd.f32 %v3326, %v3486
        %v3488 = vpop.f32.mrb[0].mxu0
        %v3489 = vpop.f32.mrb[0].mxu0
        %v3490 = vadd.f32 %v3329, %v3489
        %v3491 = vpop.f32.mrb[0].mxu0
        %3492 = vmatprep.mubr.bf16.mxu0 0
        %3493 = vmatmul.mubr.bf16.gmra.mrb[0].mxu0 %v1003
        %v3494 = vpop.f32.mrb[0].mxu0
        %v3495 = vadd.f32 %v3334, %v3494
        %v3496 = vpop.f32.mrb[0].mxu0
        %v3497 = vpop.f32.mrb[0].mxu0
        %v3498 = vadd.f32 %v3337, %v3497
        %v3499 = vpop.f32.mrb[0].mxu0
        %3500 = vmatprep.mubr.bf16.mxu0 0
        %3501 = vmatmul.mubr.bf16.gmra.mrb[0].mxu0 %v1010
        %v3502 = vpop.f32.mrb[0].mxu0
        %v3503 = vadd.f32 %v3342, %v3502
        %v3504 = vpop.f32.mrb[0].mxu0
        %v3505 = vpop.f32.mrb[0].mxu0
        %v3506 = vadd.f32 %v3345, %v3505
        %v3507 = vpop.f32.mrb[0].mxu0
        %3508 = vmatprep.mubr.bf16.mxu0 0
        %3509 = vmatmul.mubr.bf16.gmra.mrb[0].mxu0 %v1017
        %v3510 = vpop.f32.mrb[0].mxu0
        %v3511 = vadd.f32 %v3350, %v3510
        %v3512 = vpop.f32.mrb[0].mxu0
        %v3513 = vpop.f32.mrb[0].mxu0
        %v3514 = vadd.f32 %v3353, %v3513
        %v3515 = vpop.f32.mrb[0].mxu0
        %3516 = vmatprep.mubr.bf16.mxu0 0
        %3517 = vmatmul.mubr.bf16.gmra.mrb[0].mxu0 %v1024
        %v3518 = vpop.f32.mrb[0].mxu0
        %v3519 = vadd.f32 %v3358, %v3518
        %v3520 = vpop.f32.mrb[0].mxu0
        %v3521 = vpop.f32.mrb[0].mxu0
        %v3522 = vadd.f32 %v3361, %v3521
        %v3523 = vpop.f32.mrb[0].mxu0
        %3524 = vmatprep.mubr.bf16.mxu0 0
        %3525 = vmatmul.mubr.bf16.gmra.mrb[0].mxu0 %v1031
        %v3526 = vpop.f32.mrb[0].mxu0
        %v3527 = vadd.f32 %v3366, %v3526
        %v3528 = vpop.f32.mrb[0].mxu0
        %v3529 = vpop.f32.mrb[0].mxu0
        %v3530 = vadd.f32 %v3369, %v3529
        %v3531 = vpop.f32.mrb[0].mxu0
        %3532 = vmatprep.mubr.bf16.mxu0 0
        %3533 = vmatmul.mubr.bf16.gmra.mrb[0].mxu0 %v1038
        %v3534 = vpop.f32.mrb[0].mxu0
        %v3535 = vadd.f32 %v3374, %v3534
        %v3536 = vpop.f32.mrb[0].mxu0
        %v3537 = vpop.f32.mrb[0].mxu0
        %v3538 = vadd.f32 %v3377, %v3537
        %v3539 = vpop.f32.mrb[0].mxu0
        %3540 = vmatprep.mubr.bf16.mxu0 0
        %3541 = vmatmul.mubr.bf16.gmra.mrb[0].mxu0 %v1045
        %v3542 = vpop.f32.mrb[0].mxu0
        %v3543 = vadd.f32 %v3382, %v3542
        %v3544 = vpop.f32.mrb[0].mxu0
        %v3545 = vpop.f32.mrb[0].mxu0
        %v3546 = vadd.f32 %v3385, %v3545
        %v3547 = vpop.f32.mrb[0].mxu0
        %3548 = vdwg.mxu0
        %3549 = vst [vmem:[%s323 + $0x8] sm:$0xff] %v3423
        %3550 = vst [vmem:[%s323 + $0x18] sm:$0xff] %v3426
        %3551 = vst [vmem:[%s323 + $0x28] sm:$0xff] %v3431
        %3552 = vst [vmem:[%s323 + $0x38] sm:$0xff] %v3434
        %3553 = vst [vmem:[%s323 + $0x48] sm:$0xff] %v3439
        %3554 = vst [vmem:[%s323 + $0x58] sm:$0xff] %v3442
        %3555 = vst [vmem:[%s323 + $0x68] sm:$0xff] %v3447
        %3556 = vst [vmem:[%s323 + $0x78] sm:$0xff] %v3450
        %3557 = vst [vmem:[%s323 + $0x88] sm:$0xff] %v3455
        %3558 = vst [vmem:[%s323 + $0x98] sm:$0xff] %v3458
        %3559 = vst [vmem:[%s323 + $0xa8] sm:$0xff] %v3463
        %3560 = vst [vmem:[%s323 + $0xb8] sm:$0xff] %v3466
        %3561 = vst [vmem:[%s323 + $0xc8] sm:$0xff] %v3471
        %3562 = vst [vmem:[%s323 + $0xd8] sm:$0xff] %v3474
        %3563 = vst [vmem:[%s323 + $0xe8] sm:$0xff] %v3479
        %3564 = vst [vmem:[%s323 + $0xf8] sm:$0xff] %v3482
        %3565 = vst [vmem:[%s323 + $0x108] sm:$0xff] %v3487
        %3566 = vst [vmem:[%s323 + $0x118] sm:$0xff] %v3490
        %3567 = vst [vmem:[%s323 + $0x128] sm:$0xff] %v3495
        %3568 = vst [vmem:[%s323 + $0x138] sm:$0xff] %v3498
        %3569 = vst [vmem:[%s323 + $0x148] sm:$0xff] %v3503
        %3570 = vst [vmem:[%s323 + $0x158] sm:$0xff] %v3506
        %3571 = vst [vmem:[%s323 + $0x168] sm:$0xff] %v3511
        %3572 = vst [vmem:[%s323 + $0x178] sm:$0xff] %v3514
        %3573 = vst [vmem:[%s323 + $0x188] sm:$0xff] %v3519
        %3574 = vst [vmem:[%s323 + $0x198] sm:$0xff] %v3522
        %3575 = vst [vmem:[%s323 + $0x1a8] sm:$0xff] %v3527
        %3576 = vst [vmem:[%s323 + $0x1b8] sm:$0xff] %v3530
        %3577 = vst [vmem:[%s323 + $0x1c8] sm:$0xff] %v3535
        %3578 = vst [vmem:[%s323 + $0x1d8] sm:$0xff] %v3538
        %3579 = vst [vmem:[%s323 + $0x1e8] sm:$0xff] %v3543
        %3580 = vst [vmem:[%s323 + $0x1f8] sm:$0xff] %v3546
        %v3581 = vpack.c.bf16 %v3426, %v3423
        %v3582 = vpack.c.bf16 %v3434, %v3431
        %v3583 = vpack.c.bf16 %v3442, %v3439
        %v3584 = vpack.c.bf16 %v3450, %v3447
        %v3585 = vpack.c.bf16 %v3458, %v3455
        %v3586 = vpack.c.bf16 %v3466, %v3463
        %v3587 = vpack.c.bf16 %v3474, %v3471
        %v3588 = vpack.c.bf16 %v3482, %v3479
        %v3589 = vpack.c.bf16 %v3490, %v3487
        %v3590 = vpack.c.bf16 %v3498, %v3495
        %v3591 = vpack.c.bf16 %v3506, %v3503
        %v3592 = vpack.c.bf16 %v3514, %v3511
        %v3593 = vpack.c.bf16 %v3522, %v3519
        %v3594 = vpack.c.bf16 %v3530, %v3527
        %v3595 = vpack.c.bf16 %v3538, %v3535
        %v3596 = vpack.c.bf16 %v3546, %v3543
        %v3597 = vld [vmem:[#allocation7 + $0x40] sm:$0xf]
        %v3598 = vld [vmem:[#allocation7 + $0x44] sm:$0xf]
        %v3599 = vld [vmem:[#allocation7 + $0x48] sm:$0xf]
        %v3600 = vld [vmem:[#allocation7 + $0x4c] sm:$0xf]
        %v3601 = vld [vmem:[#allocation7 + $0x50] sm:$0xf]
        %v3602 = vld [vmem:[#allocation7 + $0x54] sm:$0xf]
        %v3603 = vld [vmem:[#allocation7 + $0x58] sm:$0xf]
        %v3604 = vld [vmem:[#allocation7 + $0x5c] sm:$0xf]
        %v3605 = vld [vmem:[#allocation7 + $0x60] sm:$0xf]
        %v3606 = vld [vmem:[#allocation7 + $0x64] sm:$0xf]
        %v3607 = vld [vmem:[#allocation7 + $0x68] sm:$0xf]
        %v3608 = vld [vmem:[#allocation7 + $0x6c] sm:$0xf]
        %v3609 = vld [vmem:[#allocation7 + $0x70] sm:$0xf]
        %v3610 = vld [vmem:[#allocation7 + $0x74] sm:$0xf]
        %v3611 = vld [vmem:[#allocation7 + $0x78] sm:$0xf]
        %v3612 = vld [vmem:[#allocation7 + $0x7c] sm:$0xf]
        %v3629 = vunpack.c.l.b16 %v3597
        %v3630 = vunpack.c.l.b16 %v3598
        %v3631 = vunpack.c.l.b16 %v3599
        %v3632 = vunpack.c.l.b16 %v3600
        %v3633 = vunpack.c.l.b16 %v3601
        %v3634 = vunpack.c.l.b16 %v3602
        %v3635 = vunpack.c.l.b16 %v3603
        %v3636 = vunpack.c.l.b16 %v3604
        %v3637 = vunpack.c.l.b16 %v3605
        %v3638 = vunpack.c.l.b16 %v3606
        %v3639 = vunpack.c.l.b16 %v3607
        %v3640 = vunpack.c.l.b16 %v3608
        %v3641 = vunpack.c.l.b16 %v3609
        %v3642 = vunpack.c.l.b16 %v3610
        %v3643 = vunpack.c.l.b16 %v3611
        %v3644 = vunpack.c.l.b16 %v3612
        %v3645 = vpack.c.b16 %v3630, %v3629
        %v3646 = vpack.c.b16 %v3632, %v3631
        %v3647 = vpack.c.b16 %v3634, %v3633
        %v3648 = vpack.c.b16 %v3636, %v3635
        %v3649 = vpack.c.b16 %v3638, %v3637
        %v3650 = vpack.c.b16 %v3640, %v3639
        %v3651 = vpack.c.b16 %v3642, %v3641
        %v3652 = vpack.c.b16 %v3644, %v3643
        %3661 = vmatprep.subr.bf16.mxu0 0
        %3662 = vmatpush1.bf16.msra.mxu0 %v3645
        %3663 = vmatprep.subr.bf16.mxu0 0
        %3664 = vmatpush1.bf16.msra.mxu0 %v3646
        %3665 = vmatprep.subr.bf16.mxu0 0
        %3666 = vmatpush1.bf16.msra.mxu0 %v3647
        %3667 = vmatprep.subr.bf16.mxu0 0
        %3668 = vmatpush1.bf16.msra.mxu0 %v3648
        %3669 = vmatprep.subr.bf16.mxu0 0
        %3670 = vmatpush1.bf16.msra.mxu0 %v3649
        %3671 = vmatprep.subr.bf16.mxu0 0
        %3672 = vmatpush1.bf16.msra.mxu0 %v3650
        %3673 = vmatprep.subr.bf16.mxu0 0
        %3674 = vmatpush1.bf16.msra.mxu0 %v3651
        %3675 = vmatprep.subr.bf16.mxu0 0
        %3676 = vmatpush1.bf16.msra.mxu0 %v3652
        %3677 = vmatprep.subr.bf16.mxu0 0
        %3678 = vmatpush1.bf16.msra.mxu0 0
        %3679 = vmatprep.subr.bf16.mxu0 0
        %3680 = vmatpush1.bf16.msra.mxu0 0
        %3681 = vmatprep.subr.bf16.mxu0 0
        %3682 = vmatpush1.bf16.msra.mxu0 0
        %3683 = vmatprep.subr.bf16.mxu0 0
        %3684 = vmatpush1.bf16.msra.mxu0 0
        %3685 = vmatprep.subr.bf16.mxu0 0
        %3686 = vmatpush1.bf16.msra.mxu0 0
        %3687 = vmatprep.subr.bf16.mxu0 0
        %3688 = vmatpush1.bf16.msra.mxu0 0
        %3689 = vmatprep.subr.bf16.mxu0 0
        %3690 = vmatpush1.bf16.msra.mxu0 0
        %3691 = vmatprep.subr.bf16.mxu0 0
        %3692 = vmatpush1.bf16.msra.mxu0 0
        %3693 = vmatprep.mubr.bf16.mxu0 0
        %3694 = vmatmul.mubr.bf16.gmra.mrb[0].mxu0 %v3581
        %v3695 = vpop.f32.mrb[0].mxu0
        %v3696 = vadd.f32 0.0, %v3695
        %v3697 = vpop.f32.mrb[0].mxu0
        %v3698 = vpop.f32.mrb[0].mxu0
        %v3699 = vadd.f32 0.0, %v3698
        %v3700 = vpop.f32.mrb[0].mxu0
        %3701 = vmatprep.mubr.bf16.mxu0 0
        %3702 = vmatmul.mubr.bf16.gmra.mrb[0].mxu0 %v3582
        %v3703 = vpop.f32.mrb[0].mxu0
        %v3704 = vadd.f32 0.0, %v3703
        %v3705 = vpop.f32.mrb[0].mxu0
        %v3706 = vpop.f32.mrb[0].mxu0
        %v3707 = vadd.f32 0.0, %v3706
        %v3708 = vpop.f32.mrb[0].mxu0
        %3709 = vmatprep.mubr.bf16.mxu0 0
        %3710 = vmatmul.mubr.bf16.gmra.mrb[0].mxu0 %v3583
        %v3711 = vpop.f32.mrb[0].mxu0
        %v3712 = vadd.f32 0.0, %v3711
        %v3713 = vpop.f32.mrb[0].mxu0
        %v3714 = vpop.f32.mrb[0].mxu0
        %v3715 = vadd.f32 0.0, %v3714
        %v3716 = vpop.f32.mrb[0].mxu0
        %3717 = vmatprep.mubr.bf16.mxu0 0
        %3718 = vmatmul.mubr.bf16.gmra.mrb[0].mxu0 %v3584
        %v3719 = vpop.f32.mrb[0].mxu0
        %v3720 = vadd.f32 0.0, %v3719
        %v3721 = vpop.f32.mrb[0].mxu0
        %v3722 = vpop.f32.mrb[0].mxu0
        %v3723 = vadd.f32 0.0, %v3722
        %v3724 = vpop.f32.mrb[0].mxu0
        %3725 = vmatprep.mubr.bf16.mxu0 0
        %3726 = vmatmul.mubr.bf16.gmra.mrb[0].mxu0 %v3585
        %v3727 = vpop.f32.mrb[0].mxu0
        %v3728 = vadd.f32 0.0, %v3727
        %v3729 = vpop.f32.mrb[0].mxu0
        %v3730 = vpop.f32.mrb[0].mxu0
        %v3731 = vadd.f32 0.0, %v3730
        %v3732 = vpop.f32.mrb[0].mxu0
        %3733 = vmatprep.mubr.bf16.mxu0 0
        %3734 = vmatmul.mubr.bf16.gmra.mrb[0].mxu0 %v3586
        %v3735 = vpop.f32.mrb[0].mxu0
        %v3736 = vadd.f32 0.0, %v3735
        %v3737 = vpop.f32.mrb[0].mxu0
        %v3738 = vpop.f32.mrb[0].mxu0
        %v3739 = vadd.f32 0.0, %v3738
        %v3740 = vpop.f32.mrb[0].mxu0
        %3741 = vmatprep.mubr.bf16.mxu0 0
        %3742 = vmatmul.mubr.bf16.gmra.mrb[0].mxu0 %v3587
        %v3743 = vpop.f32.mrb[0].mxu0
        %v3744 = vadd.f32 0.0, %v3743
        %v3745 = vpop.f32.mrb[0].mxu0
        %v3746 = vpop.f32.mrb[0].mxu0
        %v3747 = vadd.f32 0.0, %v3746
        %v3748 = vpop.f32.mrb[0].mxu0
        %3749 = vmatprep.mubr.bf16.mxu0 0
        %3750 = vmatmul.mubr.bf16.gmra.mrb[0].mxu0 %v3588
        %v3751 = vpop.f32.mrb[0].mxu0
        %v3752 = vadd.f32 0.0, %v3751
        %v3753 = vpop.f32.mrb[0].mxu0
        %v3754 = vpop.f32.mrb[0].mxu0
        %v3755 = vadd.f32 0.0, %v3754
        %v3756 = vpop.f32.mrb[0].mxu0
        %3757 = vmatprep.mubr.bf16.mxu0 0
        %3758 = vmatmul.mubr.bf16.gmra.mrb[0].mxu0 %v3589
        %v3759 = vpop.f32.mrb[0].mxu0
        %v3760 = vadd.f32 0.0, %v3759
        %v3761 = vpop.f32.mrb[0].mxu0
        %v3762 = vpop.f32.mrb[0].mxu0
        %v3763 = vadd.f32 0.0, %v3762
        %v3764 = vpop.f32.mrb[0].mxu0
        %3765 = vmatprep.mubr.bf16.mxu0 0
        %3766 = vmatmul.mubr.bf16.gmra.mrb[0].mxu0 %v3590
        %v3767 = vpop.f32.mrb[0].mxu0
        %v3768 = vadd.f32 0.0, %v3767
        %v3769 = vpop.f32.mrb[0].mxu0
        %v3770 = vpop.f32.mrb[0].mxu0
        %v3771 = vadd.f32 0.0, %v3770
        %v3772 = vpop.f32.mrb[0].mxu0
        %3773 = vmatprep.mubr.bf16.mxu0 0
        %3774 = vmatmul.mubr.bf16.gmra.mrb[0].mxu0 %v3591
        %v3775 = vpop.f32.mrb[0].mxu0
        %v3776 = vadd.f32 0.0, %v3775
        %v3777 = vpop.f32.mrb[0].mxu0
        %v3778 = vpop.f32.mrb[0].mxu0
        %v3779 = vadd.f32 0.0, %v3778
        %v3780 = vpop.f32.mrb[0].mxu0
        %3781 = vmatprep.mubr.bf16.mxu0 0
        %3782 = vmatmul.mubr.bf16.gmra.mrb[0].mxu0 %v3592
        %v3783 = vpop.f32.mrb[0].mxu0
        %v3784 = vadd.f32 0.0, %v3783
        %v3785 = vpop.f32.mrb[0].mxu0
        %v3786 = vpop.f32.mrb[0].mxu0
        %v3787 = vadd.f32 0.0, %v3786
        %v3788 = vpop.f32.mrb[0].mxu0
        %3789 = vmatprep.mubr.bf16.mxu0 0
        %3790 = vmatmul.mubr.bf16.gmra.mrb[0].mxu0 %v3593
        %v3791 = vpop.f32.mrb[0].mxu0
        %v3792 = vadd.f32 0.0, %v3791
        %v3793 = vpop.f32.mrb[0].mxu0
        %v3794 = vpop.f32.mrb[0].mxu0
        %v3795 = vadd.f32 0.0, %v3794
        %v3796 = vpop.f32.mrb[0].mxu0
        %3797 = vmatprep.mubr.bf16.mxu0 0
        %3798 = vmatmul.mubr.bf16.gmra.mrb[0].mxu0 %v3594
        %v3799 = vpop.f32.mrb[0].mxu0
        %v3800 = vadd.f32 0.0, %v3799
        %v3801 = vpop.f32.mrb[0].mxu0
        %v3802 = vpop.f32.mrb[0].mxu0
        %v3803 = vadd.f32 0.0, %v3802
        %v3804 = vpop.f32.mrb[0].mxu0
        %3805 = vmatprep.mubr.bf16.mxu0 0
        %3806 = vmatmul.mubr.bf16.gmra.mrb[0].mxu0 %v3595
        %v3807 = vpop.f32.mrb[0].mxu0
        %v3808 = vadd.f32 0.0, %v3807
        %v3809 = vpop.f32.mrb[0].mxu0
        %v3810 = vpop.f32.mrb[0].mxu0
        %v3811 = vadd.f32 0.0, %v3810
        %v3812 = vpop.f32.mrb[0].mxu0
        %3813 = vmatprep.mubr.bf16.mxu0 0
        %3814 = vmatmul.mubr.bf16.gmra.mrb[0].mxu0 %v3596
        %v3815 = vpop.f32.mrb[0].mxu0
        %v3816 = vadd.f32 0.0, %v3815
        %v3817 = vpop.f32.mrb[0].mxu0
        %v3818 = vpop.f32.mrb[0].mxu0
        %v3819 = vadd.f32 0.0, %v3818
        %v3820 = vpop.f32.mrb[0].mxu0
        %3821 = vdwg.mxu0
        %v3822 = vld [vmem:[%s330] sm:$0xff]
        %v3823 = vld [vmem:[%s330 + $0x8] sm:$0xff]
        %v3824 = vld [vmem:[%s330 + $0x10] sm:$0xff]
        %v3825 = vld [vmem:[%s330 + $0x18] sm:$0xff]
        %v3826 = vld [vmem:[%s330 + $0x20] sm:$0xff]
        %v3827 = vld [vmem:[%s330 + $0x28] sm:$0xff]
        %v3828 = vld [vmem:[%s330 + $0x30] sm:$0xff]
        %v3829 = vld [vmem:[%s330 + $0x38] sm:$0xff]
        %v3830 = vld [vmem:[%s330 + $0x40] sm:$0xff]
        %v3831 = vld [vmem:[%s330 + $0x48] sm:$0xff]
        %v3832 = vld [vmem:[%s330 + $0x50] sm:$0xff]
        %v3833 = vld [vmem:[%s330 + $0x58] sm:$0xff]
        %v3834 = vld [vmem:[%s330 + $0x60] sm:$0xff]
        %v3835 = vld [vmem:[%s330 + $0x68] sm:$0xff]
        %v3836 = vld [vmem:[%s330 + $0x70] sm:$0xff]
        %v3837 = vld [vmem:[%s330 + $0x78] sm:$0xff]
        %v3838 = vld [vmem:[%s330 + $0x80] sm:$0xff]
        %v3839 = vld [vmem:[%s330 + $0x88] sm:$0xff]
        %v3840 = vld [vmem:[%s330 + $0x90] sm:$0xff]
        %v3841 = vld [vmem:[%s330 + $0x98] sm:$0xff]
        %v3842 = vld [vmem:[%s330 + $0xa0] sm:$0xff]
        %v3843 = vld [vmem:[%s330 + $0xa8] sm:$0xff]
        %v3844 = vld [vmem:[%s330 + $0xb0] sm:$0xff]
        %v3845 = vld [vmem:[%s330 + $0xb8] sm:$0xff]
        %v3846 = vld [vmem:[%s330 + $0xc0] sm:$0xff]
        %v3847 = vld [vmem:[%s330 + $0xc8] sm:$0xff]
        %v3848 = vld [vmem:[%s330 + $0xd0] sm:$0xff]
        %v3849 = vld [vmem:[%s330 + $0xd8] sm:$0xff]
        %v3850 = vld [vmem:[%s330 + $0xe0] sm:$0xff]
        %v3851 = vld [vmem:[%s330 + $0xe8] sm:$0xff]
        %v3852 = vld [vmem:[%s330 + $0xf0] sm:$0xff]
        %v3853 = vld [vmem:[%s330 + $0xf8] sm:$0xff]
        %v3854 = vadd.f32 %v3822, %v3696
        %v3855 = vadd.f32 %v3823, %v3699
        %v3856 = vadd.f32 %v3824, %v3704
        %v3857 = vadd.f32 %v3825, %v3707
        %v3858 = vadd.f32 %v3826, %v3712
        %v3859 = vadd.f32 %v3827, %v3715
        %v3860 = vadd.f32 %v3828, %v3720
        %v3861 = vadd.f32 %v3829, %v3723
        %v3862 = vadd.f32 %v3830, %v3728
        %v3863 = vadd.f32 %v3831, %v3731
        %v3864 = vadd.f32 %v3832, %v3736
        %v3865 = vadd.f32 %v3833, %v3739
        %v3866 = vadd.f32 %v3834, %v3744
        %v3867 = vadd.f32 %v3835, %v3747
        %v3868 = vadd.f32 %v3836, %v3752
        %v3869 = vadd.f32 %v3837, %v3755
        %v3870 = vadd.f32 %v3838, %v3760
        %v3871 = vadd.f32 %v3839, %v3763
        %v3872 = vadd.f32 %v3840, %v3768
        %v3873 = vadd.f32 %v3841, %v3771
        %v3874 = vadd.f32 %v3842, %v3776
        %v3875 = vadd.f32 %v3843, %v3779
        %v3876 = vadd.f32 %v3844, %v3784
        %v3877 = vadd.f32 %v3845, %v3787
        %v3878 = vadd.f32 %v3846, %v3792
        %v3879 = vadd.f32 %v3847, %v3795
        %v3880 = vadd.f32 %v3848, %v3800
        %v3881 = vadd.f32 %v3849, %v3803
        %v3882 = vadd.f32 %v3850, %v3808
        %v3883 = vadd.f32 %v3851, %v3811
        %v3884 = vadd.f32 %v3852, %v3816
        %v3885 = vadd.f32 %v3853, %v3819
        %3886 = vst [vmem:[%s330] sm:$0xff] %v3854
        %3887 = vst [vmem:[%s330 + $0x8] sm:$0xff] %v3855
        %3888 = vst [vmem:[%s330 + $0x10] sm:$0xff] %v3856
        %3889 = vst [vmem:[%s330 + $0x18] sm:$0xff] %v3857
        %3890 = vst [vmem:[%s330 + $0x20] sm:$0xff] %v3858
        %3891 = vst [vmem:[%s330 + $0x28] sm:$0xff] %v3859
        %3892 = vst [vmem:[%s330 + $0x30] sm:$0xff] %v3860
        %3893 = vst [vmem:[%s330 + $0x38] sm:$0xff] %v3861
        %3894 = vst [vmem:[%s330 + $0x40] sm:$0xff] %v3862
        %3895 = vst [vmem:[%s330 + $0x48] sm:$0xff] %v3863
        %3896 = vst [vmem:[%s330 + $0x50] sm:$0xff] %v3864
        %3897 = vst [vmem:[%s330 + $0x58] sm:$0xff] %v3865
        %3898 = vst [vmem:[%s330 + $0x60] sm:$0xff] %v3866
        %3899 = vst [vmem:[%s330 + $0x68] sm:$0xff] %v3867
        %3900 = vst [vmem:[%s330 + $0x70] sm:$0xff] %v3868
        %3901 = vst [vmem:[%s330 + $0x78] sm:$0xff] %v3869
        %3902 = vst [vmem:[%s330 + $0x80] sm:$0xff] %v3870
        %3903 = vst [vmem:[%s330 + $0x88] sm:$0xff] %v3871
        %3904 = vst [vmem:[%s330 + $0x90] sm:$0xff] %v3872
        %3905 = vst [vmem:[%s330 + $0x98] sm:$0xff] %v3873
        %3906 = vst [vmem:[%s330 + $0xa0] sm:$0xff] %v3874
        %3907 = vst [vmem:[%s330 + $0xa8] sm:$0xff] %v3875
        %3908 = vst [vmem:[%s330 + $0xb0] sm:$0xff] %v3876
        %3909 = vst [vmem:[%s330 + $0xb8] sm:$0xff] %v3877
        %3910 = vst [vmem:[%s330 + $0xc0] sm:$0xff] %v3878
        %3911 = vst [vmem:[%s330 + $0xc8] sm:$0xff] %v3879
        %3912 = vst [vmem:[%s330 + $0xd0] sm:$0xff] %v3880
        %3913 = vst [vmem:[%s330 + $0xd8] sm:$0xff] %v3881
        %3914 = vst [vmem:[%s330 + $0xe0] sm:$0xff] %v3882
        %3915 = vst [vmem:[%s330 + $0xe8] sm:$0xff] %v3883
        %3916 = vst [vmem:[%s330 + $0xf0] sm:$0xff] %v3884
        %3917 = vst [vmem:[%s330 + $0xf8] sm:$0xff] %v3885
        %s3918 = sand.u32 %s162, 1
        %s3919 = scalar_lea.sflag [#allocation4], %s3918
        %s3920 = sand.u32 %s162, 1
        %s3921 = smul.addr %s3920, 512
        %s3922 = scalar_lea.vmem [#allocation8], %s3921
        %s3923 = sand.u32 %s190, 1
        %s3924 = scalar_lea.sflag [#allocation10], %s3923
        %s3925 = sand.u32 %s190, 1
        %s3926 = smul.addr %s3925, 256
        %s3927 = scalar_lea.vmem [#allocation9], %s3926
        // Predicated region
        $region53: #{tpu_custom_call.1} parent=39 // pred_check
          %p3928 = pneg %p172
        $region54: #{tpu_custom_call.1} parent=39 // pred_check_branch
          %3930 = sbr.rel (%p3928) target = $region56
        $region55: #{tpu_custom_call.1} parent=39 // pred_region
          %s3931 = smul.u32 32, %s33
          %s3933 = ssub.s32 8192, 8192
          %3934 = vsyncadd %s3919, %s3933
          %s3935 = smul.addr %s3931, 2
          %s3936 = smul.addr %s32, 64
          %s3937 = sadd.s32 %s3935, %s3936
          %s3938 = smul.addr %s3937, 128
          %s3939 = scalar_lea.hbm %s5, %s3938
          %s3940 = sshll.u32 %s3922, 4
          %s3941 = int_to_ptr.vmem [resolvable:$true] %s3940
          %3946 = dma.vmem_to_hbm [thread:$0]  %s3941, 8192, %s3939, %s3919, 256, 256, 16
        $region56: #{tpu_custom_call.1} parent=39 // pred_fallthru
          _
        // Predicated region
        $region57: #{tpu_custom_call.1} parent=39 // pred_check
          %p3947 = pneg %p200
        $region58: #{tpu_custom_call.1} parent=39 // pred_check_branch
          %3949 = sbr.rel (%p3947) target = $region60
        $region59: #{tpu_custom_call.1} parent=39 // pred_region
          %s3950 = smul.u32 32, %s33
          %s3952 = ssub.s32 4096, 4096
          %3953 = vsyncadd %s3924, %s3952
          %s3954 = smul.addr %s32, 32
          %s3955 = sadd.s32 %s3950, %s3954
          %s3956 = smul.addr %s3955, 128
          %s3957 = scalar_lea.hbm %s6, %s3956
          %s3958 = sshll.u32 %s3927, 4
          %s3959 = int_to_ptr.vmem [resolvable:$true] %s3958
          %3964 = dma.vmem_to_hbm [thread:$0]  %s3959, 4096, %s3957, %s3924, 128, 128, 8
        $region60: #{tpu_custom_call.1} parent=39 // pred_fallthru
          _
      $region40: #{tpu_custom_call.1} parent=5 // pred_fallthru
        _
      %p3965 = scmp.le.s32.totalorder 2, %s23
      // Predicated region
      $region61: #{tpu_custom_call.1} parent=5 // pred_check
        %p3966 = pneg %p3965
      $region62: #{tpu_custom_call.1} parent=5 // pred_check_branch
        %3968 = sbr.rel (%p3966) target = $region64
      $region63: #{tpu_custom_call.1} parent=5 // pred_region
        %s3969 = ssub.s32 %s23, 2
        // Predicated region
        $region65: #{tpu_custom_call.1} parent=63 // pred_check
          %p3970 = pneg %p178
        $region66: #{tpu_custom_call.1} parent=63 // pred_check_branch
          %3972 = sbr.rel (%p3970) target = $region68
        $region67: #{tpu_custom_call.1} parent=63 // pred_region
          %s3973 = sand.u32 %s163, 1
          %s3974 = scalar_lea.sflag [#allocation4], %s3973
          %s3975 = sand.u32 %s163, 1
          %s3976 = smul.addr %s3975, 512
          %s3977 = scalar_lea.vmem [#allocation8], %s3976
          %3978 = dma.done %s3974, 8192
        $region68: #{tpu_custom_call.1} parent=63 // pred_fallthru
          _
        // Predicated region
        $region69: #{tpu_custom_call.1} parent=63 // pred_check
          %p3979 = pneg %p206
        $region70: #{tpu_custom_call.1} parent=63 // pred_check_branch
          %3981 = sbr.rel (%p3979) target = $region72
        $region71: #{tpu_custom_call.1} parent=63 // pred_region
          %s3982 = sand.u32 %s191, 1
          %s3983 = scalar_lea.sflag [#allocation10], %s3982
          %s3984 = sand.u32 %s191, 1
          %s3985 = smul.addr %s3984, 256
          %s3986 = scalar_lea.vmem [#allocation9], %s3985
          %3987 = dma.done %s3983, 4096
        $region72: #{tpu_custom_call.1} parent=63 // pred_fallthru
          _
      $region64: #{tpu_custom_call.1} parent=5 // pred_fallthru
        _
    $region6: #{tpu_custom_call.1} parent=1 // loop_footer
      %s27 = sadd.s32 1, %s23
    $region7: #{tpu_custom_call.1} parent=1 // loop_footer_branch
      %22 = sbr.rel target = $region3
    $region8: #{tpu_custom_call.1} parent=1 // loop_exit
      _
    %3988 = vsyncpa [#allocation3], 1
    %s3989 = scalar_lea.sflag [#allocation3], 1
    %3990 = vsyncpa %s3989, 1
    %3991 = vsyncpa [#allocation6], 1
    %3992 = vsyncpa [#allocation4], 1
    %s3993 = scalar_lea.sflag [#allocation4], 1
    %3994 = vsyncpa %s3993, 1
    %3995 = vsyncpa [#allocation10], 1
    %s3996 = scalar_lea.sflag [#allocation10], 1
    %3997 = vsyncpa %s3996, 1

</llo_original>
